<compile_context>
chip_gen: v7x
topology: tpu7x:2x2x1
jax: 0.10.0
libtpu: 0.0.40
codegen_flags: <defaults>
</compile_context>

<pallas_src>
import functools

import jax
import jax.numpy as jnp
from jax.experimental import pallas as pl
from jax.experimental.pallas import tpu as pltpu

MXU_DTYPE = jnp.bfloat16
VMEM_LIMIT = 48 * 1024 * 1024


# ----------------------------------------------------------------------------
# Shared cell math (f32 compute format)
# ----------------------------------------------------------------------------
def _lstm_cell(gates, c, H):
    """PyTorch gate order: input, forget, cell(g), output.  All f32."""
    i_g = jax.nn.sigmoid(gates[:, 0 * H:1 * H])
    f_g = jax.nn.sigmoid(gates[:, 1 * H:2 * H])
    g_g = jnp.tanh(gates[:, 2 * H:3 * H])
    o_g = jax.nn.sigmoid(gates[:, 3 * H:4 * H])
    c_new = f_g * c + i_g * g_g
    h_new = o_g * jnp.tanh(c_new)
    return h_new, c_new


# ----------------------------------------------------------------------------
# Pallas kernels
# ----------------------------------------------------------------------------
def _bilstm_layer_kernel(xf_ref, xb_ref,
                         wihf_ref, whhf_ref, bf_ref,
                         wihb_ref, whhb_ref, bb_ref,
                         outf_ref, outb_ref,
                         gxf, gxb, h_f, c_f, h_b, c_b):
    """One bidirectional LSTM layer, one T-chunk per grid step.

    xf_ref : (CT, B, I)  bf16  x chunk in forward chunk order
    xb_ref : (CT, B, I)  bf16  x chunk in reverse chunk order (same array)
    wih*   : (I, 4H)     bf16  W_ih^T     whh*: (H, 4H) bf16  W_hh^T
    b*     : (1, 4H)     f32   b_ih + b_hh
    out*   : (CT, B, H)  bf16  per-direction hidden states for this chunk
    gx*    : (CT*B, 4H)  f32   on-chip input projection (VMEM scratch)
    h_*    : (B, H)      bf16  carried hidden state     c_*: (B, H) f32 cell
    """
    CT, B, I = xf_ref.shape
    H = whhf_ref.shape[0]

    @pl.when(pl.program_id(0) == 0)
    def _():
        h_f[...] = jnp.zeros_like(h_f)
        c_f[...] = jnp.zeros_like(c_f)
        h_b[...] = jnp.zeros_like(h_b)
        c_b[...] = jnp.zeros_like(c_b)

    # Fused input projection for this chunk: one big bf16 matmul per
    # direction.  The MXU is nearly idle during the recurrence, so this is
    # essentially free and removes the (T,B,4H) gate HBM round trip.
    xf2 = xf_ref[...].reshape(CT * B, I)
    xb2 = xb_ref[...].reshape(CT * B, I)
    gxf[...] = jnp.dot(xf2, wihf_ref[...],
                       preferred_element_type=jnp.float32) + bf_ref[...]
    gxb[...] = jnp.dot(xb2, wihb_ref[...],
                       preferred_element_type=jnp.float32) + bb_ref[...]

    def fwd_step(t):
        gates = gxf[pl.ds(t * B, B), :] + jnp.dot(
            h_f[...], whhf_ref[...], preferred_element_type=jnp.float32)
        h_new, c_new = _lstm_cell(gates, c_f[...], H)
        h_f[...] = h_new.astype(h_f.dtype)
        c_f[...] = c_new
        outf_ref[t] = h_new.astype(outf_ref.dtype)

    def bwd_step(t):
        tb = CT - 1 - t
        gates = gxb[pl.ds(tb * B, B), :] + jnp.dot(
            h_b[...], whhb_ref[...], preferred_element_type=jnp.float32)
        h_new, c_new = _lstm_cell(gates, c_b[...], H)
        h_b[...] = h_new.astype(h_b.dtype)
        c_b[...] = c_new
        outb_ref[tb] = h_new.astype(outb_ref.dtype)

    # Unroll by 2: two fwd + two bwd independent-ish steps per iteration give
    # the LLO scheduler ILP to hide EUP/cast latency on the serial chains.
    @pl.loop(0, CT // 2)
    def _(s):
        t0 = s * 2
        fwd_step(t0)
        bwd_step(t0)
        fwd_step(t0 + 1)
        bwd_step(t0 + 1)

    if CT % 2 == 1:            # static remainder step
        fwd_step(CT - 1)
        bwd_step(CT - 1)


def _last_layer_head_kernel(x_ref, wihf_ref, whhf_ref, bf_ref,
                            wihb_ref, bb_ref,
                            w1f_ref, w1b_ref, b1_ref, w2_ref, b2_ref,
                            o_ref, gxf, h_f, c_f):
    """Final bidirectional layer specialized to the last timestep + head.

    Only out[:, -1, :] is consumed by the model, so:
      * forward direction: full recurrence (chunked over T),
      * backward direction: a single step at t = T-1 from zero state,
      * head: fc1 (eval BatchNorm folded in) -> fc2, fused, lane-padded output.
    """
    CT, B, I = x_ref.shape
    H = whhf_ref.shape[0]
    nc = pl.num_programs(0)

    @pl.when(pl.program_id(0) == 0)
    def _():
        h_f[...] = jnp.zeros_like(h_f)
        c_f[...] = jnp.zeros_like(c_f)

    x2 = x_ref[...].reshape(CT * B, I)
    gxf[...] = jnp.dot(x2, wihf_ref[...],
                       preferred_element_type=jnp.float32) + bf_ref[...]

    def fwd_step(t):
        gates = gxf[pl.ds(t * B, B), :] + jnp.dot(
            h_f[...], whhf_ref[...], preferred_element_type=jnp.float32)
        h_new, c_new = _lstm_cell(gates, c_f[...], H)
        h_f[...] = h_new.astype(h_f.dtype)
        c_f[...] = c_new

    @pl.loop(0, CT // 2)
    def _(s):
        fwd_step(s * 2)
        fwd_step(s * 2 + 1)

    if CT % 2 == 1:
        fwd_step(CT - 1)

    @pl.when(pl.program_id(0) == nc - 1)
    def _():
        # Backward direction contributes only its first step (t = T-1, zero
        # initial state): gates reduce to x[T-1] @ W_ih_bwd^T + b.
        gb = jnp.dot(x_ref[CT - 1], wihb_ref[...],
                     preferred_element_type=jnp.float32) + bb_ref[...]
        hb, _ = _lstm_cell(gb, jnp.zeros((B, H), jnp.float32), H)
        # Fused head: fc1 (BN folded) -> fc2, W1 split by direction halves so
        # no in-kernel concat is needed.
        hid = (jnp.dot(h_f[...], w1f_ref[...],
                       preferred_element_type=jnp.float32)
               + jnp.dot(hb.astype(MXU_DTYPE), w1b_ref[...],
                         preferred_element_type=jnp.float32)
               + b1_ref[...])
        o_ref[...] = jnp.dot(hid.astype(MXU_DTYPE), w2_ref[...],
                             preferred_element_type=jnp.float32) + b2_ref[...]


# ----------------------------------------------------------------------------
# Wrappers
# ----------------------------------------------------------------------------
def _choose_chunk(T, target):
    ct = max(1, min(T, target))
    while T % ct:
        ct -= 1
    return ct


def _const_spec(shape):
    n = len(shape)
    return pl.BlockSpec(shape, lambda i, _n=n: (0,) * _n)


def bilstm_layer(x_tbi, layer, time_chunk):
    """x_tbi: (T, B, in) bf16 -> (out_fwd, out_bwd), each (T, B, H) bf16."""
    T, B, I = x_tbi.shape
    H = layer["fwd"]["whh_t"].shape[0]
    ct = _choose_chunk(T, time_chunk)
    nc = T // ct

    grid_spec = pltpu.PrefetchScalarGridSpec(
        num_scalar_prefetch=0,
        grid=(nc,),
        in_specs=[
            pl.BlockSpec((ct, B, I), lambda i: (i, 0, 0)),            # x fwd
            pl.BlockSpec((ct, B, I), lambda i: (nc - 1 - i, 0, 0)),   # x bwd
            _const_spec((I, 4 * H)),      # wih fwd
            _const_spec((H, 4 * H)),      # whh fwd
            _const_spec((1, 4 * H)),      # bias fwd
            _const_spec((I, 4 * H)),      # wih bwd
            _const_spec((H, 4 * H)),      # whh bwd
            _const_spec((1, 4 * H)),      # bias bwd
        ],
        out_specs=[
            pl.BlockSpec((ct, B, H), lambda i: (i, 0, 0)),            # out fwd
            pl.BlockSpec((ct, B, H), lambda i: (nc - 1 - i, 0, 0)),   # out bwd
        ],
        scratch_shapes=[
            pltpu.VMEM((ct * B, 4 * H), jnp.float32),   # gx fwd
            pltpu.VMEM((ct * B, 4 * H), jnp.float32),   # gx bwd
            pltpu.VMEM((B, H), MXU_DTYPE),              # h fwd
            pltpu.VMEM((B, H), jnp.float32),            # c fwd
            pltpu.VMEM((B, H), MXU_DTYPE),              # h bwd
            pltpu.VMEM((B, H), jnp.float32),            # c bwd
        ],
    )
    out_f, out_b = pl.pallas_call(
        _bilstm_layer_kernel,
        out_shape=[jax.ShapeDtypeStruct((T, B, H), MXU_DTYPE),
                   jax.ShapeDtypeStruct((T, B, H), MXU_DTYPE)],
        grid_spec=grid_spec,
        compiler_params=pltpu.CompilerParams(
            dimension_semantics=("arbitrary",),
            vmem_limit_bytes=VMEM_LIMIT),
    )(x_tbi, x_tbi,
      layer["fwd"]["wih_t"], layer["fwd"]["whh_t"], layer["fwd"]["b"],
      layer["bwd"]["wih_t"], layer["bwd"]["whh_t"], layer["bwd"]["b"])
    return out_f, out_b


def last_layer_head(x_tbi, layer, head, time_chunk):
    """Final LSTM layer (last-timestep specialized) fused with fc1+BN+fc2."""
    T, B, I = x_tbi.shape
    H = layer["fwd"]["whh_t"].shape[0]
    Hh = head["w1_t_f"].shape[1]
    n_pad = head["w2_t_pad"].shape[1]
    ct = _choose_chunk(T, time_chunk)
    nc = T // ct

    grid_spec = pltpu.PrefetchScalarGridSpec(
        num_scalar_prefetch=0,
        grid=(nc,),
        in_specs=[
            pl.BlockSpec((ct, B, I), lambda i: (i, 0, 0)),   # x fwd order
            _const_spec((I, 4 * H)),      # wih fwd
            _const_spec((H, 4 * H)),      # whh fwd
            _const_spec((1, 4 * H)),      # bias fwd
            _const_spec((I, 4 * H)),      # wih bwd
            _const_spec((1, 4 * H)),      # bias bwd
            _const_spec((H, Hh)),         # w1 (fwd half)
            _const_spec((H, Hh)),         # w1 (bwd half)
            _const_spec((1, Hh)),         # b1 (BN folded)
            _const_spec((Hh, n_pad)),     # w2 (lane padded)
            _const_spec((1, n_pad)),      # b2 (lane padded)
        ],
        out_specs=pl.BlockSpec((B, n_pad), lambda i: (0, 0)),
        scratch_shapes=[
            pltpu.VMEM((ct * B, 4 * H), jnp.float32),   # gx fwd
            pltpu.VMEM((B, H), MXU_DTYPE),              # h fwd
            pltpu.VMEM((B, H), jnp.float32),            # c fwd
        ],
    )
    return pl.pallas_call(
        _last_layer_head_kernel,
        out_shape=jax.ShapeDtypeStruct((B, n_pad), jnp.float32),
        grid_spec=grid_spec,
        compiler_params=pltpu.CompilerParams(
            dimension_semantics=("arbitrary",),
            vmem_limit_bytes=VMEM_LIMIT),
    )(x_tbi,
      layer["fwd"]["wih_t"], layer["fwd"]["whh_t"], layer["fwd"]["b"],
      layer["bwd"]["wih_t"], layer["bwd"]["b"],
      head["w1_t_f"], head["w1_t_b"], head["b1"],
      head["w2_t_pad"], head["b2_pad"])


def lstm_model_forward(x_bti, params, time_chunk=16):
    """Full forward pass.  x_bti: (B, T, input_size) batch-first, like PyTorch."""
    x = jnp.transpose(x_bti, (1, 0, 2)).astype(MXU_DTYPE)   # (T, B, I) bf16
    layers = params["lstm"]
    for layer in layers[:-1]:
        out_f, out_b = bilstm_layer(x, layer, time_chunk)   # (T,B,H) x 2, bf16
        # TODO(synk): the next layer could consume the two halves as separate
        # operands with split W_ih to avoid this XLA concat HBM round trip.
        x = jnp.concatenate([out_f, out_b], axis=-1)         # (T, B, 2H) bf16
        # inter-layer dropout: identity in eval mode
    out = last_layer_head(x, layers[-1], params["head"], time_chunk)
    # final dropout: identity in eval mode
    return out[:, :params["output_size"]]


# ----------------------------------------------------------------------------
# Parameters: PyTorch-style init, then kernel-ready preparation
# ----------------------------------------------------------------------------
def init_params(key, input_size, hidden_size, num_layers, output_size):
    """PyTorch-layout f32 parameters (uniform(-k, k), k = 1/sqrt(fan))."""
    H = hidden_size
    k = 1.0 / (H ** 0.5)

    def uni(key, shape, bound):
        return jax.random.uniform(key, shape, jnp.float32, -bound, bound)

    lstm = []
    for layer in range(num_layers):
        in_l = input_size if layer == 0 else 2 * H
        dirs = {}
        for d in ("fwd", "bwd"):
            key, k1, k2, k3, k4 = jax.random.split(key, 5)
            dirs[d] = {
                "w_ih": uni(k1, (4 * H, in_l), k),
                "w_hh": uni(k2, (4 * H, H), k),
                "b_ih": uni(k3, (4 * H,), k),
                "b_hh": uni(k4, (4 * H,), k),
            }
        lstm.append(dirs)

    key, k1, k2, k3, k4 = jax.random.split(key, 5)
    kf1 = 1.0 / ((2 * H) ** 0.5)
    kf2 = 1.0 / (H ** 0.5)
    head = {
        "w1": uni(k1, (H, 2 * H), kf1),
        "b1": uni(k2, (H,), kf1),
        "bn_gamma": jnp.ones((H,), jnp.float32),
        "bn_beta": jnp.zeros((H,), jnp.float32),
        "bn_mean": jnp.zeros((H,), jnp.float32),
        "bn_var": jnp.ones((H,), jnp.float32),
        "w2": uni(k3, (output_size, H), kf2),
        "b2": uni(k4, (output_size,), kf2),
    }
    return {"lstm": lstm, "head": head}


def prepare_params(raw, output_size):
    """Kernel-ready params: transposed, bf16 MXU weights, BN folded, padded."""
    lstm = []
    for layer in raw["lstm"]:
        dirs = {}
        for d in ("fwd", "bwd"):
            p = layer[d]
            dirs[d] = {
                "wih_t": p["w_ih"].T.astype(MXU_DTYPE),            # (in, 4H)
                "whh_t": p["w_hh"].T.astype(MXU_DTYPE),            # (H, 4H)
                "b": (p["b_ih"] + p["b_hh"])[None, :],             # (1, 4H) f32
            }
        lstm.append(dirs)

    h = raw["head"]
    Hh, H2 = h["w1"].shape
    H = H2 // 2
    eps = 1e-5
    # Fold eval-mode BatchNorm1d into fc1: y = (x@W1^T + b1 - mean)*s + beta
    scale = h["bn_gamma"] * jax.lax.rsqrt(h["bn_var"] + eps)        # (Hh,)
    w1_fold = h["w1"] * scale[:, None]                              # (Hh, 2H)
    b1_fold = (h["b1"] - h["bn_mean"]) * scale + h["bn_beta"]       # (Hh,)
    w1_t = w1_fold.T                                                # (2H, Hh)

    n_pad = max(128, ((output_size + 127) // 128) * 128)            # lane-dense
    w2_pad = jnp.zeros((Hh, n_pad), jnp.float32).at[:, :output_size].set(h["w2"].T)
    b2_pad = jnp.zeros((1, n_pad), jnp.float32).at[:, :output_size].set(h["b2"][None, :])

    head = {
        "w1_t_f": w1_t[:H].astype(MXU_DTYPE),      # (H, Hh)  fwd-half of fc1
        "w1_t_b": w1_t[H:].astype(MXU_DTYPE),      # (H, Hh)  bwd-half of fc1
        "b1": b1_fold[None, :],                    # (1, Hh)  f32
        "w2_t_pad": w2_pad.astype(MXU_DTYPE),      # (Hh, n_pad)
        "b2_pad": b2_pad,                          # (1, n_pad) f32
    }
    return {"lstm": lstm, "head": head, "output_size": output_size}


# ----------------------------------------------------------------------------
# Pure-JAX reference (f32) for a sanity check
# ----------------------------------------------------------------------------
def reference_forward(x_bti, raw, output_size):
    x = jnp.transpose(x_bti, (1, 0, 2)).astype(jnp.float32)   # (T, B, I)
    T, B, _ = x.shape
    for layer in raw["lstm"]:
        outs = []
        for d, rev in (("fwd", False), ("bwd", True)):
            p = layer[d]
            H = p["w_hh"].shape[1]
            b = p["b_ih"] + p["b_hh"]
            h = jnp.zeros((B, H), jnp.float32)
            c = jnp.zeros((B, H), jnp.float32)
            hs = [None] * T
            order = range(T - 1, -1, -1) if rev else range(T)
            for t in order:
                g = x[t] @ p["w_ih"].T + h @ p["w_hh"].T + b
                i_g = jax.nn.sigmoid(g[:, :H])
                f_g = jax.nn.sigmoid(g[:, H:2 * H])
                g_g = jnp.tanh(g[:, 2 * H:3 * H])
                o_g = jax.nn.sigmoid(g[:, 3 * H:])
                c = f_g * c + i_g * g_g
                h = o_g * jnp.tanh(c)
                hs[t] = h
            outs.append(jnp.stack(hs, 0))
        x = jnp.concatenate(outs, axis=-1)
    last = x[-1]
    hd = raw["head"]
    y = last @ hd["w1"].T + hd["b1"]
    y = (y - hd["bn_mean"]) * (hd["bn_gamma"] *
                               jax.lax.rsqrt(hd["bn_var"] + 1e-5)) + hd["bn_beta"]
    y = y @ hd["w2"].T + hd["b2"]
    return y


# ----------------------------------------------------------------------------
if __name__ == "__main__":
    # Small shapes consistent with the module (scaled down for the test).
    BATCH = 4
    SEQ = 8
    INPUT_SIZE = 16
    HIDDEN_SIZE = 32
    NUM_LAYERS = 2
    OUTPUT_SIZE = 1
    TIME_CHUNK = 4            # 2 chunks -> exercises the carried-state path

    key = jax.random.PRNGKey(0)
    key, pkey, xkey = jax.random.split(key, 3)

    raw = init_params(pkey, INPUT_SIZE, HIDDEN_SIZE, NUM_LAYERS, OUTPUT_SIZE)
    params = prepare_params(raw, OUTPUT_SIZE)
    x = jax.random.normal(xkey, (BATCH, SEQ, INPUT_SIZE), jnp.float32)

    fwd = jax.jit(functools.partial(lstm_model_forward, params=params,
                                    time_chunk=TIME_CHUNK))
    out = fwd(x)
    jax.block_until_ready(out)

    assert out.shape == (BATCH, OUTPUT_SIZE), out.shape
    assert out.dtype == jnp.float32
    assert bool(jnp.all(jnp.isfinite(out)))

    ref = reference_forward(x, raw, OUTPUT_SIZE)
    err = float(jnp.max(jnp.abs(out - ref)))
    assert err < 5e-2, f"max abs err vs f32 reference: {err}"

    print("KERNEL_OK")
</pallas_src>

<mosaic_0001>
module attributes {stable_mosaic.version = 11 : i64} {
  func.func @_bilstm_layer_kernel(%arg0: i32, %arg1: memref<4x4x16xbf16, #tpu.memory_space<vmem>>, %arg2: memref<4x4x16xbf16, #tpu.memory_space<vmem>>, %arg3: memref<16x128xbf16, #tpu.memory_space<vmem>>, %arg4: memref<32x128xbf16, #tpu.memory_space<vmem>>, %arg5: memref<1x128xf32, #tpu.memory_space<vmem>>, %arg6: memref<16x128xbf16, #tpu.memory_space<vmem>>, %arg7: memref<32x128xbf16, #tpu.memory_space<vmem>>, %arg8: memref<1x128xf32, #tpu.memory_space<vmem>>, %arg9: memref<4x4x32xbf16, #tpu.memory_space<vmem>>, %arg10: memref<4x4x32xbf16, #tpu.memory_space<vmem>>, %arg11: memref<16x128xf32, #tpu.memory_space<vmem>>, %arg12: memref<16x128xf32, #tpu.memory_space<vmem>>, %arg13: memref<4x32xbf16, #tpu.memory_space<vmem>>, %arg14: memref<4x32xf32, #tpu.memory_space<vmem>>, %arg15: memref<4x32xbf16, #tpu.memory_space<vmem>>, %arg16: memref<4x32xf32, #tpu.memory_space<vmem>>) attributes {dimension_semantics = [#tpu.dimension_semantics<arbitrary>], iteration_bounds = array<i64: 2>, scalar_prefetch = 0 : i64, scratch_operands = 6 : i64, tpu.core_type = #tpu.core_type<tc>, window_params = [{transform_indices = @transform_0, window_bounds = array<i64: 4, 4, 16>}, {transform_indices = @transform_1, window_bounds = array<i64: 4, 4, 16>}, {pipeline_mode = #tpu.pipeline_mode<synchronous>, transform_indices = @transform_2, window_bounds = array<i64: 16, 128>}, {pipeline_mode = #tpu.pipeline_mode<synchronous>, transform_indices = @transform_3, window_bounds = array<i64: 32, 128>}, {pipeline_mode = #tpu.pipeline_mode<synchronous>, transform_indices = @transform_4, window_bounds = array<i64: 1, 128>}, {pipeline_mode = #tpu.pipeline_mode<synchronous>, transform_indices = @transform_5, window_bounds = array<i64: 16, 128>}, {pipeline_mode = #tpu.pipeline_mode<synchronous>, transform_indices = @transform_6, window_bounds = array<i64: 32, 128>}, {pipeline_mode = #tpu.pipeline_mode<synchronous>, transform_indices = @transform_7, window_bounds = array<i64: 1, 128>}, {transform_indices = @transform_8, window_bounds = array<i64: 4, 4, 32>}, {transform_indices = @transform_9, window_bounds = array<i64: 4, 4, 32>}]} {
    %c0_i32 = arith.constant 0 : i32
    %0 = arith.cmpi eq, %arg0, %c0_i32 : i32
    %1 = arith.extui %0 : i1 to i32
    %c0_i32_0 = arith.constant 0 : i32
    %2 = arith.cmpi ne, %1, %c0_i32_0 : i32
    scf.if %2 {
      %cst_21 = arith.constant 0.000000e+00 : bf16
      %20 = vector.broadcast %cst_21 : bf16 to vector<4x32xbf16>
      %c0_22 = arith.constant 0 : index
      %c0_23 = arith.constant 0 : index
      %21 = vector.load %arg13[%c0_22, %c0_23] : memref<4x32xbf16, #tpu.memory_space<vmem>>, vector<4x32xbf16>
      tpu.vector_store %arg13[%c0_22, %c0_23], %20 {strides = array<i32>} : memref<4x32xbf16, #tpu.memory_space<vmem>>, vector<4x32xbf16>,
      %cst_24 = arith.constant 0.000000e+00 : f32
      %22 = vector.broadcast %cst_24 : f32 to vector<4x32xf32>
      %c0_25 = arith.constant 0 : index
      %c0_26 = arith.constant 0 : index
      %23 = vector.load %arg14[%c0_25, %c0_26] : memref<4x32xf32, #tpu.memory_space<vmem>>, vector<4x32xf32>
      tpu.vector_store %arg14[%c0_25, %c0_26], %22 {strides = array<i32>} : memref<4x32xf32, #tpu.memory_space<vmem>>, vector<4x32xf32>,
      %cst_27 = arith.constant 0.000000e+00 : bf16
      %24 = vector.broadcast %cst_27 : bf16 to vector<4x32xbf16>
      %c0_28 = arith.constant 0 : index
      %c0_29 = arith.constant 0 : index
      %25 = vector.load %arg15[%c0_28, %c0_29] : memref<4x32xbf16, #tpu.memory_space<vmem>>, vector<4x32xbf16>
      tpu.vector_store %arg15[%c0_28, %c0_29], %24 {strides = array<i32>} : memref<4x32xbf16, #tpu.memory_space<vmem>>, vector<4x32xbf16>,
      %cst_30 = arith.constant 0.000000e+00 : f32
      %26 = vector.broadcast %cst_30 : f32 to vector<4x32xf32>
      %c0_31 = arith.constant 0 : index
      %c0_32 = arith.constant 0 : index
      %27 = vector.load %arg16[%c0_31, %c0_32] : memref<4x32xf32, #tpu.memory_space<vmem>>, vector<4x32xf32>
      tpu.vector_store %arg16[%c0_31, %c0_32], %26 {strides = array<i32>} : memref<4x32xf32, #tpu.memory_space<vmem>>, vector<4x32xf32>,
    } else {
    }
    %c0 = arith.constant 0 : index
    %c0_1 = arith.constant 0 : index
    %c0_2 = arith.constant 0 : index
    %3 = vector.load %arg1[%c0, %c0_1, %c0_2] : memref<4x4x16xbf16, #tpu.memory_space<vmem>>, vector<4x4x16xbf16>
    %4 = vector.shape_cast %3 : vector<4x4x16xbf16> to vector<16x16xbf16>
    %c0_3 = arith.constant 0 : index
    %c0_4 = arith.constant 0 : index
    %c0_5 = arith.constant 0 : index
    %5 = vector.load %arg2[%c0_3, %c0_4, %c0_5] : memref<4x4x16xbf16, #tpu.memory_space<vmem>>, vector<4x4x16xbf16>
    %6 = vector.shape_cast %5 : vector<4x4x16xbf16> to vector<16x16xbf16>
    %c0_6 = arith.constant 0 : index
    %c0_7 = arith.constant 0 : index
    %7 = vector.load %arg3[%c0_6, %c0_7] : memref<16x128xbf16, #tpu.memory_space<vmem>>, vector<16x128xbf16>
    %cst = arith.constant dense<0.000000e+00> : vector<16x128xf32>
    %8 = tpu.matmul %4, %7, %cst {dimension_numbers = #tpu.dot_dimension_numbers<[1], [0], [0], [1], [0, 0, 1, 1], [], []>} : vector<16x16xbf16>, vector<16x128xbf16>, vector<16x128xf32> -> vector<16x128xf32>
    %c0_8 = arith.constant 0 : index
    %c0_9 = arith.constant 0 : index
    %9 = vector.load %arg5[%c0_8, %c0_9] : memref<1x128xf32, #tpu.memory_space<vmem>>, vector<1x128xf32>
    %10 = vector.broadcast %9 : vector<1x128xf32> to vector<16x128xf32>
    %11 = arith.addf %8, %10 : vector<16x128xf32>
    %c0_10 = arith.constant 0 : index
    %c0_11 = arith.constant 0 : index
    %12 = vector.load %arg11[%c0_10, %c0_11] : memref<16x128xf32, #tpu.memory_space<vmem>>, vector<16x128xf32>
    tpu.vector_store %arg11[%c0_10, %c0_11], %11 {strides = array<i32>} : memref<16x128xf32, #tpu.memory_space<vmem>>, vector<16x128xf32>,
    %c0_12 = arith.constant 0 : index
    %c0_13 = arith.constant 0 : index
    %13 = vector.load %arg6[%c0_12, %c0_13] : memref<16x128xbf16, #tpu.memory_space<vmem>>, vector<16x128xbf16>
    %cst_14 = arith.constant dense<0.000000e+00> : vector<16x128xf32>
    %14 = tpu.matmul %6, %13, %cst_14 {dimension_numbers = #tpu.dot_dimension_numbers<[1], [0], [0], [1], [0, 0, 1, 1], [], []>} : vector<16x16xbf16>, vector<16x128xbf16>, vector<16x128xf32> -> vector<16x128xf32>
    %c0_15 = arith.constant 0 : index
    %c0_16 = arith.constant 0 : index
    %15 = vector.load %arg8[%c0_15, %c0_16] : memref<1x128xf32, #tpu.memory_space<vmem>>, vector<1x128xf32>
    %16 = vector.broadcast %15 : vector<1x128xf32> to vector<16x128xf32>
    %17 = arith.addf %14, %16 : vector<16x128xf32>
    %c0_17 = arith.constant 0 : index
    %c0_18 = arith.constant 0 : index
    %18 = vector.load %arg12[%c0_17, %c0_18] : memref<16x128xf32, #tpu.memory_space<vmem>>, vector<16x128xf32>
    tpu.vector_store %arg12[%c0_17, %c0_18], %17 {strides = array<i32>} : memref<16x128xf32, #tpu.memory_space<vmem>>, vector<16x128xf32>,
    %c0_i32_19 = arith.constant 0 : i32
    %c2_i32 = arith.constant 2 : i32
    %19 = arith.addi %c0_i32_19, %c2_i32 : i32
    %c1_i32 = arith.constant 1 : i32
    scf.for %arg17 = %c0_i32_19 to %19 step %c1_i32  : i32 {
      %c1_i32_21 = arith.constant 1 : i32
      %20 = arith.muli %arg17, %c1_i32_21 : i32
      %c0_i32_22 = arith.constant 0 : i32
      %21 = arith.addi %c0_i32_22, %20 : i32
      %c2_i32_23 = arith.constant 2 : i32
      %22 = arith.muli %21, %c2_i32_23 : i32
      %c4_i32 = arith.constant 4 : i32
      %23 = arith.muli %22, %c4_i32 : i32
      %24 = arith.index_cast %23 : i32 to index
      %c0_24 = arith.constant 0 : index
      %25 = vector.load %arg11[%24, %c0_24] : memref<16x128xf32, #tpu.memory_space<vmem>>, vector<4x128xf32>
      %c0_25 = arith.constant 0 : index
      %c0_26 = arith.constant 0 : index
      %26 = vector.load %arg13[%c0_25, %c0_26] : memref<4x32xbf16, #tpu.memory_space<vmem>>, vector<4x32xbf16>
      %c0_27 = arith.constant 0 : index
      %c0_28 = arith.constant 0 : index
      %27 = vector.load %arg4[%c0_27, %c0_28] : memref<32x128xbf16, #tpu.memory_space<vmem>>, vector<32x128xbf16>
      %cst_29 = arith.constant dense<0.000000e+00> : vector<4x128xf32>
      %28 = tpu.matmul %26, %27, %cst_29 {dimension_numbers = #tpu.dot_dimension_numbers<[1], [0], [0], [1], [0, 0, 1, 1], [], []>} : vector<4x32xbf16>, vector<32x128xbf16>, vector<4x128xf32> -> vector<4x128xf32>
      %29 = arith.addf %25, %28 : vector<4x128xf32>
      %c0_30 = arith.constant 0 : index
      %c0_31 = arith.constant 0 : index
      %30 = vector.load %arg14[%c0_30, %c0_31] : memref<4x32xf32, #tpu.memory_space<vmem>>, vector<4x32xf32>
      %31 = vector.extract_strided_slice %29 {offsets = [0, 0], sizes = [4, 32], strides = [1, 1]} : vector<4x128xf32> to vector<4x32xf32>
      %32 = arith.negf %31 : vector<4x32xf32>
      %33 = math.exp %32 : vector<4x32xf32>
      %cst_32 = arith.constant 1.000000e+00 : f32
      %34 = vector.broadcast %cst_32 : f32 to vector<4x32xf32>
      %35 = arith.addf %34, %33 : vector<4x32xf32>
      %36 = arith.divf %34, %35 : vector<4x32xf32>
      %37 = vector.extract_strided_slice %29 {offsets = [0, 32], sizes = [4, 32], strides = [1, 1]} : vector<4x128xf32> to vector<4x32xf32>
      %38 = arith.negf %37 : vector<4x32xf32>
      %39 = math.exp %38 : vector<4x32xf32>
      %cst_33 = arith.constant 1.000000e+00 : f32
      %40 = vector.broadcast %cst_33 : f32 to vector<4x32xf32>
      %41 = arith.addf %40, %39 : vector<4x32xf32>
      %42 = arith.divf %40, %41 : vector<4x32xf32>
      %43 = vector.extract_strided_slice %29 {offsets = [0, 64], sizes = [4, 32], strides = [1, 1]} : vector<4x128xf32> to vector<4x32xf32>
      %44 = math.tanh %43 : vector<4x32xf32>
      %45 = vector.extract_strided_slice %29 {offsets = [0, 96], sizes = [4, 32], strides = [1, 1]} : vector<4x128xf32> to vector<4x32xf32>
      %46 = arith.negf %45 : vector<4x32xf32>
      %47 = math.exp %46 : vector<4x32xf32>
      %cst_34 = arith.constant 1.000000e+00 : f32
      %48 = vector.broadcast %cst_34 : f32 to vector<4x32xf32>
      %49 = arith.addf %48, %47 : vector<4x32xf32>
      %50 = arith.divf %48, %49 : vector<4x32xf32>
      %51 = arith.mulf %42, %30 : vector<4x32xf32>
      %52 = arith.mulf %36, %44 : vector<4x32xf32>
      %53 = arith.addf %51, %52 : vector<4x32xf32>
      %54 = math.tanh %53 : vector<4x32xf32>
      %55 = arith.mulf %50, %54 : vector<4x32xf32>
      %56 = arith.truncf %55 : vector<4x32xf32> to vector<4x32xbf16>
      %c0_35 = arith.constant 0 : index
      %c0_36 = arith.constant 0 : index
      %57 = vector.load %arg13[%c0_35, %c0_36] : memref<4x32xbf16, #tpu.memory_space<vmem>>, vector<4x32xbf16>
      tpu.vector_store %arg13[%c0_35, %c0_36], %56 {strides = array<i32>} : memref<4x32xbf16, #tpu.memory_space<vmem>>, vector<4x32xbf16>,
      %c0_37 = arith.constant 0 : index
      %c0_38 = arith.constant 0 : index
      %58 = vector.load %arg14[%c0_37, %c0_38] : memref<4x32xf32, #tpu.memory_space<vmem>>, vector<4x32xf32>
      tpu.vector_store %arg14[%c0_37, %c0_38], %53 {strides = array<i32>} : memref<4x32xf32, #tpu.memory_space<vmem>>, vector<4x32xf32>,
      %59 = arith.truncf %55 : vector<4x32xf32> to vector<4x32xbf16>
      %60 = arith.index_cast %22 : i32 to index
      %c0_39 = arith.constant 0 : index
      %c0_40 = arith.constant 0 : index
      %61 = vector.load %arg9[%60, %c0_39, %c0_40] : memref<4x4x32xbf16, #tpu.memory_space<vmem>>, vector<1x4x32xbf16>
      %62 = vector.shape_cast %61 : vector<1x4x32xbf16> to vector<4x32xbf16>
      %63 = vector.shape_cast %59 : vector<4x32xbf16> to vector<1x4x32xbf16>
      tpu.vector_store %arg9[%60, %c0_39, %c0_40], %63 {strides = array<i32>} : memref<4x4x32xbf16, #tpu.memory_space<vmem>>, vector<1x4x32xbf16>,
      %c3_i32 = arith.constant 3 : i32
      %64 = arith.subi %c3_i32, %22 : i32
      %c4_i32_41 = arith.constant 4 : i32
      %65 = arith.muli %64, %c4_i32_41 : i32
      %66 = arith.index_cast %65 : i32 to index
      %c0_42 = arith.constant 0 : index
      %67 = vector.load %arg12[%66, %c0_42] : memref<16x128xf32, #tpu.memory_space<vmem>>, vector<4x128xf32>
      %c0_43 = arith.constant 0 : index
      %c0_44 = arith.constant 0 : index
      %68 = vector.load %arg15[%c0_43, %c0_44] : memref<4x32xbf16, #tpu.memory_space<vmem>>, vector<4x32xbf16>
      %c0_45 = arith.constant 0 : index
      %c0_46 = arith.constant 0 : index
      %69 = vector.load %arg7[%c0_45, %c0_46] : memref<32x128xbf16, #tpu.memory_space<vmem>>, vector<32x128xbf16>
      %cst_47 = arith.constant dense<0.000000e+00> : vector<4x128xf32>
      %70 = tpu.matmul %68, %69, %cst_47 {dimension_numbers = #tpu.dot_dimension_numbers<[1], [0], [0], [1], [0, 0, 1, 1], [], []>} : vector<4x32xbf16>, vector<32x128xbf16>, vector<4x128xf32> -> vector<4x128xf32>
      %71 = arith.addf %67, %70 : vector<4x128xf32>
      %c0_48 = arith.constant 0 : index
      %c0_49 = arith.constant 0 : index
      %72 = vector.load %arg16[%c0_48, %c0_49] : memref<4x32xf32, #tpu.memory_space<vmem>>, vector<4x32xf32>
      %73 = vector.extract_strided_slice %71 {offsets = [0, 0], sizes = [4, 32], strides = [1, 1]} : vector<4x128xf32> to vector<4x32xf32>
      %74 = arith.negf %73 : vector<4x32xf32>
      %75 = math.exp %74 : vector<4x32xf32>
      %cst_50 = arith.constant 1.000000e+00 : f32
      %76 = vector.broadcast %cst_50 : f32 to vector<4x32xf32>
      %77 = arith.addf %76, %75 : vector<4x32xf32>
      %78 = arith.divf %76, %77 : vector<4x32xf32>
      %79 = vector.extract_strided_slice %71 {offsets = [0, 32], sizes = [4, 32], strides = [1, 1]} : vector<4x128xf32> to vector<4x32xf32>
      %80 = arith.negf %79 : vector<4x32xf32>
      %81 = math.exp %80 : vector<4x32xf32>
      %cst_51 = arith.constant 1.000000e+00 : f32
      %82 = vector.broadcast %cst_51 : f32 to vector<4x32xf32>
      %83 = arith.addf %82, %81 : vector<4x32xf32>
      %84 = arith.divf %82, %83 : vector<4x32xf32>
      %85 = vector.extract_strided_slice %71 {offsets = [0, 64], sizes = [4, 32], strides = [1, 1]} : vector<4x128xf32> to vector<4x32xf32>
      %86 = math.tanh %85 : vector<4x32xf32>
      %87 = vector.extract_strided_slice %71 {offsets = [0, 96], sizes = [4, 32], strides = [1, 1]} : vector<4x128xf32> to vector<4x32xf32>
      %88 = arith.negf %87 : vector<4x32xf32>
      %89 = math.exp %88 : vector<4x32xf32>
      %cst_52 = arith.constant 1.000000e+00 : f32
      %90 = vector.broadcast %cst_52 : f32 to vector<4x32xf32>
      %91 = arith.addf %90, %89 : vector<4x32xf32>
      %92 = arith.divf %90, %91 : vector<4x32xf32>
      %93 = arith.mulf %84, %72 : vector<4x32xf32>
      %94 = arith.mulf %78, %86 : vector<4x32xf32>
      %95 = arith.addf %93, %94 : vector<4x32xf32>
      %96 = math.tanh %95 : vector<4x32xf32>
      %97 = arith.mulf %92, %96 : vector<4x32xf32>
      %98 = arith.truncf %97 : vector<4x32xf32> to vector<4x32xbf16>
      %c0_53 = arith.constant 0 : index
      %c0_54 = arith.constant 0 : index
      %99 = vector.load %arg15[%c0_53, %c0_54] : memref<4x32xbf16, #tpu.memory_space<vmem>>, vector<4x32xbf16>
      tpu.vector_store %arg15[%c0_53, %c0_54], %98 {strides = array<i32>} : memref<4x32xbf16, #tpu.memory_space<vmem>>, vector<4x32xbf16>,
      %c0_55 = arith.constant 0 : index
      %c0_56 = arith.constant 0 : index
      %100 = vector.load %arg16[%c0_55, %c0_56] : memref<4x32xf32, #tpu.memory_space<vmem>>, vector<4x32xf32>
      tpu.vector_store %arg16[%c0_55, %c0_56], %95 {strides = array<i32>} : memref<4x32xf32, #tpu.memory_space<vmem>>, vector<4x32xf32>,
      %101 = arith.truncf %97 : vector<4x32xf32> to vector<4x32xbf16>
      %102 = arith.index_cast %64 : i32 to index
      %c0_57 = arith.constant 0 : index
      %c0_58 = arith.constant 0 : index
      %103 = vector.load %arg10[%102, %c0_57, %c0_58] : memref<4x4x32xbf16, #tpu.memory_space<vmem>>, vector<1x4x32xbf16>
      %104 = vector.shape_cast %103 : vector<1x4x32xbf16> to vector<4x32xbf16>
      %105 = vector.shape_cast %101 : vector<4x32xbf16> to vector<1x4x32xbf16>
      tpu.vector_store %arg10[%102, %c0_57, %c0_58], %105 {strides = array<i32>} : memref<4x4x32xbf16, #tpu.memory_space<vmem>>, vector<1x4x32xbf16>,
      %c1_i32_59 = arith.constant 1 : i32
      %106 = arith.addi %22, %c1_i32_59 : i32
      %c4_i32_60 = arith.constant 4 : i32
      %107 = arith.muli %106, %c4_i32_60 : i32
      %108 = arith.index_cast %107 : i32 to index
      %c0_61 = arith.constant 0 : index
      %109 = vector.load %arg11[%108, %c0_61] : memref<16x128xf32, #tpu.memory_space<vmem>>, vector<4x128xf32>
      %c0_62 = arith.constant 0 : index
      %c0_63 = arith.constant 0 : index
      %110 = vector.load %arg13[%c0_62, %c0_63] : memref<4x32xbf16, #tpu.memory_space<vmem>>, vector<4x32xbf16>
      %c0_64 = arith.constant 0 : index
      %c0_65 = arith.constant 0 : index
      %111 = vector.load %arg4[%c0_64, %c0_65] : memref<32x128xbf16, #tpu.memory_space<vmem>>, vector<32x128xbf16>
      %cst_66 = arith.constant dense<0.000000e+00> : vector<4x128xf32>
      %112 = tpu.matmul %110, %111, %cst_66 {dimension_numbers = #tpu.dot_dimension_numbers<[1], [0], [0], [1], [0, 0, 1, 1], [], []>} : vector<4x32xbf16>, vector<32x128xbf16>, vector<4x128xf32> -> vector<4x128xf32>
      %113 = arith.addf %109, %112 : vector<4x128xf32>
      %c0_67 = arith.constant 0 : index
      %c0_68 = arith.constant 0 : index
      %114 = vector.load %arg14[%c0_67, %c0_68] : memref<4x32xf32, #tpu.memory_space<vmem>>, vector<4x32xf32>
      %115 = vector.extract_strided_slice %113 {offsets = [0, 0], sizes = [4, 32], strides = [1, 1]} : vector<4x128xf32> to vector<4x32xf32>
      %116 = arith.negf %115 : vector<4x32xf32>
      %117 = math.exp %116 : vector<4x32xf32>
      %cst_69 = arith.constant 1.000000e+00 : f32
      %118 = vector.broadcast %cst_69 : f32 to vector<4x32xf32>
      %119 = arith.addf %118, %117 : vector<4x32xf32>
      %120 = arith.divf %118, %119 : vector<4x32xf32>
      %121 = vector.extract_strided_slice %113 {offsets = [0, 32], sizes = [4, 32], strides = [1, 1]} : vector<4x128xf32> to vector<4x32xf32>
      %122 = arith.negf %121 : vector<4x32xf32>
      %123 = math.exp %122 : vector<4x32xf32>
      %cst_70 = arith.constant 1.000000e+00 : f32
      %124 = vector.broadcast %cst_70 : f32 to vector<4x32xf32>
      %125 = arith.addf %124, %123 : vector<4x32xf32>
      %126 = arith.divf %124, %125 : vector<4x32xf32>
      %127 = vector.extract_strided_slice %113 {offsets = [0, 64], sizes = [4, 32], strides = [1, 1]} : vector<4x128xf32> to vector<4x32xf32>
      %128 = math.tanh %127 : vector<4x32xf32>
      %129 = vector.extract_strided_slice %113 {offsets = [0, 96], sizes = [4, 32], strides = [1, 1]} : vector<4x128xf32> to vector<4x32xf32>
      %130 = arith.negf %129 : vector<4x32xf32>
      %131 = math.exp %130 : vector<4x32xf32>
      %cst_71 = arith.constant 1.000000e+00 : f32
      %132 = vector.broadcast %cst_71 : f32 to vector<4x32xf32>
      %133 = arith.addf %132, %131 : vector<4x32xf32>
      %134 = arith.divf %132, %133 : vector<4x32xf32>
      %135 = arith.mulf %126, %114 : vector<4x32xf32>
      %136 = arith.mulf %120, %128 : vector<4x32xf32>
      %137 = arith.addf %135, %136 : vector<4x32xf32>
      %138 = math.tanh %137 : vector<4x32xf32>
      %139 = arith.mulf %134, %138 : vector<4x32xf32>
      %140 = arith.truncf %139 : vector<4x32xf32> to vector<4x32xbf16>
      %c0_72 = arith.constant 0 : index
      %c0_73 = arith.constant 0 : index
      %141 = vector.load %arg13[%c0_72, %c0_73] : memref<4x32xbf16, #tpu.memory_space<vmem>>, vector<4x32xbf16>
      tpu.vector_store %arg13[%c0_72, %c0_73], %140 {strides = array<i32>} : memref<4x32xbf16, #tpu.memory_space<vmem>>, vector<4x32xbf16>,
      %c0_74 = arith.constant 0 : index
      %c0_75 = arith.constant 0 : index
      %142 = vector.load %arg14[%c0_74, %c0_75] : memref<4x32xf32, #tpu.memory_space<vmem>>, vector<4x32xf32>
      tpu.vector_store %arg14[%c0_74, %c0_75], %137 {strides = array<i32>} : memref<4x32xf32, #tpu.memory_space<vmem>>, vector<4x32xf32>,
      %143 = arith.truncf %139 : vector<4x32xf32> to vector<4x32xbf16>
      %144 = arith.index_cast %106 : i32 to index
      %c0_76 = arith.constant 0 : index
      %c0_77 = arith.constant 0 : index
      %145 = vector.load %arg9[%144, %c0_76, %c0_77] : memref<4x4x32xbf16, #tpu.memory_space<vmem>>, vector<1x4x32xbf16>
      %146 = vector.shape_cast %145 : vector<1x4x32xbf16> to vector<4x32xbf16>
      %147 = vector.shape_cast %143 : vector<4x32xbf16> to vector<1x4x32xbf16>
      tpu.vector_store %arg9[%144, %c0_76, %c0_77], %147 {strides = array<i32>} : memref<4x4x32xbf16, #tpu.memory_space<vmem>>, vector<1x4x32xbf16>,
      %c1_i32_78 = arith.constant 1 : i32
      %148 = arith.addi %22, %c1_i32_78 : i32
      %c3_i32_79 = arith.constant 3 : i32
      %149 = arith.subi %c3_i32_79, %148 : i32
      %c4_i32_80 = arith.constant 4 : i32
      %150 = arith.muli %149, %c4_i32_80 : i32
      %151 = arith.index_cast %150 : i32 to index
      %c0_81 = arith.constant 0 : index
      %152 = vector.load %arg12[%151, %c0_81] : memref<16x128xf32, #tpu.memory_space<vmem>>, vector<4x128xf32>
      %c0_82 = arith.constant 0 : index
      %c0_83 = arith.constant 0 : index
      %153 = vector.load %arg15[%c0_82, %c0_83] : memref<4x32xbf16, #tpu.memory_space<vmem>>, vector<4x32xbf16>
      %c0_84 = arith.constant 0 : index
      %c0_85 = arith.constant 0 : index
      %154 = vector.load %arg7[%c0_84, %c0_85] : memref<32x128xbf16, #tpu.memory_space<vmem>>, vector<32x128xbf16>
      %cst_86 = arith.constant dense<0.000000e+00> : vector<4x128xf32>
      %155 = tpu.matmul %153, %154, %cst_86 {dimension_numbers = #tpu.dot_dimension_numbers<[1], [0], [0], [1], [0, 0, 1, 1], [], []>} : vector<4x32xbf16>, vector<32x128xbf16>, vector<4x128xf32> -> vector<4x128xf32>
      %156 = arith.addf %152, %155 : vector<4x128xf32>
      %c0_87 = arith.constant 0 : index
      %c0_88 = arith.constant 0 : index
      %157 = vector.load %arg16[%c0_87, %c0_88] : memref<4x32xf32, #tpu.memory_space<vmem>>, vector<4x32xf32>
      %158 = vector.extract_strided_slice %156 {offsets = [0, 0], sizes = [4, 32], strides = [1, 1]} : vector<4x128xf32> to vector<4x32xf32>
      %159 = arith.negf %158 : vector<4x32xf32>
      %160 = math.exp %159 : vector<4x32xf32>
      %cst_89 = arith.constant 1.000000e+00 : f32
      %161 = vector.broadcast %cst_89 : f32 to vector<4x32xf32>
      %162 = arith.addf %161, %160 : vector<4x32xf32>
      %163 = arith.divf %161, %162 : vector<4x32xf32>
      %164 = vector.extract_strided_slice %156 {offsets = [0, 32], sizes = [4, 32], strides = [1, 1]} : vector<4x128xf32> to vector<4x32xf32>
      %165 = arith.negf %164 : vector<4x32xf32>
      %166 = math.exp %165 : vector<4x32xf32>
      %cst_90 = arith.constant 1.000000e+00 : f32
      %167 = vector.broadcast %cst_90 : f32 to vector<4x32xf32>
      %168 = arith.addf %167, %166 : vector<4x32xf32>
      %169 = arith.divf %167, %168 : vector<4x32xf32>
      %170 = vector.extract_strided_slice %156 {offsets = [0, 64], sizes = [4, 32], strides = [1, 1]} : vector<4x128xf32> to vector<4x32xf32>
      %171 = math.tanh %170 : vector<4x32xf32>
      %172 = vector.extract_strided_slice %156 {offsets = [0, 96], sizes = [4, 32], strides = [1, 1]} : vector<4x128xf32> to vector<4x32xf32>
      %173 = arith.negf %172 : vector<4x32xf32>
      %174 = math.exp %173 : vector<4x32xf32>
      %cst_91 = arith.constant 1.000000e+00 : f32
      %175 = vector.broadcast %cst_91 : f32 to vector<4x32xf32>
      %176 = arith.addf %175, %174 : vector<4x32xf32>
      %177 = arith.divf %175, %176 : vector<4x32xf32>
      %178 = arith.mulf %169, %157 : vector<4x32xf32>
      %179 = arith.mulf %163, %171 : vector<4x32xf32>
      %180 = arith.addf %178, %179 : vector<4x32xf32>
      %181 = math.tanh %180 : vector<4x32xf32>
      %182 = arith.mulf %177, %181 : vector<4x32xf32>
      %183 = arith.truncf %182 : vector<4x32xf32> to vector<4x32xbf16>
      %c0_92 = arith.constant 0 : index
      %c0_93 = arith.constant 0 : index
      %184 = vector.load %arg15[%c0_92, %c0_93] : memref<4x32xbf16, #tpu.memory_space<vmem>>, vector<4x32xbf16>
      tpu.vector_store %arg15[%c0_92, %c0_93], %183 {strides = array<i32>} : memref<4x32xbf16, #tpu.memory_space<vmem>>, vector<4x32xbf16>,
      %c0_94 = arith.constant 0 : index
      %c0_95 = arith.constant 0 : index
      %185 = vector.load %arg16[%c0_94, %c0_95] : memref<4x32xf32, #tpu.memory_space<vmem>>, vector<4x32xf32>
      tpu.vector_store %arg16[%c0_94, %c0_95], %180 {strides = array<i32>} : memref<4x32xf32, #tpu.memory_space<vmem>>, vector<4x32xf32>,
      %186 = arith.truncf %182 : vector<4x32xf32> to vector<4x32xbf16>
      %187 = arith.index_cast %149 : i32 to index
      %c0_96 = arith.constant 0 : index
      %c0_97 = arith.constant 0 : index
      %188 = vector.load %arg10[%187, %c0_96, %c0_97] : memref<4x4x32xbf16, #tpu.memory_space<vmem>>, vector<1x4x32xbf16>
      %189 = vector.shape_cast %188 : vector<1x4x32xbf16> to vector<4x32xbf16>
      %190 = vector.shape_cast %186 : vector<4x32xbf16> to vector<1x4x32xbf16>
      tpu.vector_store %arg10[%187, %c0_96, %c0_97], %190 {strides = array<i32>} : memref<4x4x32xbf16, #tpu.memory_space<vmem>>, vector<1x4x32xbf16>,
    }
    %c2_i32_20 = arith.constant 2 : i32
    return
  }
  func.func @transform_0(%arg0: i32) -> (i32, i32, i32) {
    %c0_i32 = arith.constant 0 : i32
    %c0_i32_0 = arith.constant 0 : i32
    %c0_i32_1 = arith.constant 0 : i32
    return %arg0, %c0_i32, %c0_i32_0 : i32, i32, i32
  }
  func.func @transform_1(%arg0: i32) -> (i32, i32, i32) {
    %c1_i32 = arith.constant 1 : i32
    %0 = arith.subi %c1_i32, %arg0 : i32
    %c0_i32 = arith.constant 0 : i32
    %c0_i32_0 = arith.constant 0 : i32
    %c0_i32_1 = arith.constant 0 : i32
    return %0, %c0_i32, %c0_i32_0 : i32, i32, i32
  }
  func.func @transform_2(%arg0: i32) -> (i32, i32) {
    %c0_i32 = arith.constant 0 : i32
    %c0_i32_0 = arith.constant 0 : i32
    %c0_i32_1 = arith.constant 0 : i32
    return %c0_i32, %c0_i32_0 : i32, i32
  }
  func.func @transform_3(%arg0: i32) -> (i32, i32) {
    %c0_i32 = arith.constant 0 : i32
    %c0_i32_0 = arith.constant 0 : i32
    %c0_i32_1 = arith.constant 0 : i32
    return %c0_i32, %c0_i32_0 : i32, i32
  }
  func.func @transform_4(%arg0: i32) -> (i32, i32) {
    %c0_i32 = arith.constant 0 : i32
    %c0_i32_0 = arith.constant 0 : i32
    %c0_i32_1 = arith.constant 0 : i32
    return %c0_i32, %c0_i32_0 : i32, i32
  }
  func.func @transform_5(%arg0: i32) -> (i32, i32) {
    %c0_i32 = arith.constant 0 : i32
    %c0_i32_0 = arith.constant 0 : i32
    %c0_i32_1 = arith.constant 0 : i32
    return %c0_i32, %c0_i32_0 : i32, i32
  }
  func.func @transform_6(%arg0: i32) -> (i32, i32) {
    %c0_i32 = arith.constant 0 : i32
    %c0_i32_0 = arith.constant 0 : i32
    %c0_i32_1 = arith.constant 0 : i32
    return %c0_i32, %c0_i32_0 : i32, i32
  }
  func.func @transform_7(%arg0: i32) -> (i32, i32) {
    %c0_i32 = arith.constant 0 : i32
    %c0_i32_0 = arith.constant 0 : i32
    %c0_i32_1 = arith.constant 0 : i32
    return %c0_i32, %c0_i32_0 : i32, i32
  }
  func.func @transform_8(%arg0: i32) -> (i32, i32, i32) {
    %c0_i32 = arith.constant 0 : i32
    %c0_i32_0 = arith.constant 0 : i32
    %c0_i32_1 = arith.constant 0 : i32
    return %arg0, %c0_i32, %c0_i32_0 : i32, i32, i32
  }
  func.func @transform_9(%arg0: i32) -> (i32, i32, i32) {
    %c1_i32 = arith.constant 1 : i32
    %0 = arith.subi %c1_i32, %arg0 : i32
    %c0_i32 = arith.constant 0 : i32
    %c0_i32_0 = arith.constant 0 : i32
    %c0_i32_1 = arith.constant 0 : i32
    return %0, %c0_i32, %c0_i32_0 : i32, i32, i32
  }
}

module attributes {stable_mosaic.version = 11 : i64} {
  func.func @_last_layer_head_kernel(%arg0: i32, %arg1: memref<4x4x64xbf16, #tpu.memory_space<vmem>>, %arg2: memref<64x128xbf16, #tpu.memory_space<vmem>>, %arg3: memref<32x128xbf16, #tpu.memory_space<vmem>>, %arg4: memref<1x128xf32, #tpu.memory_space<vmem>>, %arg5: memref<64x128xbf16, #tpu.memory_space<vmem>>, %arg6: memref<1x128xf32, #tpu.memory_space<vmem>>, %arg7: memref<32x32xbf16, #tpu.memory_space<vmem>>, %arg8: memref<32x32xbf16, #tpu.memory_space<vmem>>, %arg9: memref<1x32xf32, #tpu.memory_space<vmem>>, %arg10: memref<32x128xbf16, #tpu.memory_space<vmem>>, %arg11: memref<1x128xf32, #tpu.memory_space<vmem>>, %arg12: memref<4x128xf32, #tpu.memory_space<vmem>>, %arg13: memref<16x128xf32, #tpu.memory_space<vmem>>, %arg14: memref<4x32xbf16, #tpu.memory_space<vmem>>, %arg15: memref<4x32xf32, #tpu.memory_space<vmem>>) attributes {dimension_semantics = [#tpu.dimension_semantics<arbitrary>], iteration_bounds = array<i64: 2>, scalar_prefetch = 0 : i64, scratch_operands = 3 : i64, tpu.core_type = #tpu.core_type<tc>, window_params = [{transform_indices = @transform_0, window_bounds = array<i64: 4, 4, 64>}, {pipeline_mode = #tpu.pipeline_mode<synchronous>, transform_indices = @transform_1, window_bounds = array<i64: 64, 128>}, {pipeline_mode = #tpu.pipeline_mode<synchronous>, transform_indices = @transform_2, window_bounds = array<i64: 32, 128>}, {pipeline_mode = #tpu.pipeline_mode<synchronous>, transform_indices = @transform_3, window_bounds = array<i64: 1, 128>}, {pipeline_mode = #tpu.pipeline_mode<synchronous>, transform_indices = @transform_4, window_bounds = array<i64: 64, 128>}, {pipeline_mode = #tpu.pipeline_mode<synchronous>, transform_indices = @transform_5, window_bounds = array<i64: 1, 128>}, {pipeline_mode = #tpu.pipeline_mode<synchronous>, transform_indices = @transform_6, window_bounds = array<i64: 32, 32>}, {pipeline_mode = #tpu.pipeline_mode<synchronous>, transform_indices = @transform_7, window_bounds = array<i64: 32, 32>}, {pipeline_mode = #tpu.pipeline_mode<synchronous>, transform_indices = @transform_8, window_bounds = array<i64: 1, 32>}, {pipeline_mode = #tpu.pipeline_mode<synchronous>, transform_indices = @transform_9, window_bounds = array<i64: 32, 128>}, {pipeline_mode = #tpu.pipeline_mode<synchronous>, transform_indices = @transform_10, window_bounds = array<i64: 1, 128>}, {pipeline_mode = #tpu.pipeline_mode<synchronous>, transform_indices = @transform_11, window_bounds = array<i64: 4, 128>}]} {
    %c0_i32 = arith.constant 0 : i32
    %0 = arith.cmpi eq, %arg0, %c0_i32 : i32
    %1 = arith.extui %0 : i1 to i32
    %c0_i32_0 = arith.constant 0 : i32
    %2 = arith.cmpi ne, %1, %c0_i32_0 : i32
    scf.if %2 {
      %cst_13 = arith.constant 0.000000e+00 : bf16
      %15 = vector.broadcast %cst_13 : bf16 to vector<4x32xbf16>
      %c0_14 = arith.constant 0 : index
      %c0_15 = arith.constant 0 : index
      %16 = vector.load %arg14[%c0_14, %c0_15] : memref<4x32xbf16, #tpu.memory_space<vmem>>, vector<4x32xbf16>
      tpu.vector_store %arg14[%c0_14, %c0_15], %15 {strides = array<i32>} : memref<4x32xbf16, #tpu.memory_space<vmem>>, vector<4x32xbf16>,
      %cst_16 = arith.constant 0.000000e+00 : f32
      %17 = vector.broadcast %cst_16 : f32 to vector<4x32xf32>
      %c0_17 = arith.constant 0 : index
      %c0_18 = arith.constant 0 : index
      %18 = vector.load %arg15[%c0_17, %c0_18] : memref<4x32xf32, #tpu.memory_space<vmem>>, vector<4x32xf32>
      tpu.vector_store %arg15[%c0_17, %c0_18], %17 {strides = array<i32>} : memref<4x32xf32, #tpu.memory_space<vmem>>, vector<4x32xf32>,
    } else {
    }
    %c0 = arith.constant 0 : index
    %c0_1 = arith.constant 0 : index
    %c0_2 = arith.constant 0 : index
    %3 = vector.load %arg1[%c0, %c0_1, %c0_2] : memref<4x4x64xbf16, #tpu.memory_space<vmem>>, vector<4x4x64xbf16>
    %4 = vector.shape_cast %3 : vector<4x4x64xbf16> to vector<16x64xbf16>
    %c0_3 = arith.constant 0 : index
    %c0_4 = arith.constant 0 : index
    %5 = vector.load %arg2[%c0_3, %c0_4] : memref<64x128xbf16, #tpu.memory_space<vmem>>, vector<64x128xbf16>
    %cst = arith.constant dense<0.000000e+00> : vector<16x128xf32>
    %6 = tpu.matmul %4, %5, %cst {dimension_numbers = #tpu.dot_dimension_numbers<[1], [0], [0], [1], [0, 0, 1, 1], [], []>} : vector<16x64xbf16>, vector<64x128xbf16>, vector<16x128xf32> -> vector<16x128xf32>
    %c0_5 = arith.constant 0 : index
    %c0_6 = arith.constant 0 : index
    %7 = vector.load %arg4[%c0_5, %c0_6] : memref<1x128xf32, #tpu.memory_space<vmem>>, vector<1x128xf32>
    %8 = vector.broadcast %7 : vector<1x128xf32> to vector<16x128xf32>
    %9 = arith.addf %6, %8 : vector<16x128xf32>
    %c0_7 = arith.constant 0 : index
    %c0_8 = arith.constant 0 : index
    %10 = vector.load %arg13[%c0_7, %c0_8] : memref<16x128xf32, #tpu.memory_space<vmem>>, vector<16x128xf32>
    tpu.vector_store %arg13[%c0_7, %c0_8], %9 {strides = array<i32>} : memref<16x128xf32, #tpu.memory_space<vmem>>, vector<16x128xf32>,
    %c0_i32_9 = arith.constant 0 : i32
    %c2_i32 = arith.constant 2 : i32
    %11 = arith.addi %c0_i32_9, %c2_i32 : i32
    %c1_i32 = arith.constant 1 : i32
    scf.for %arg16 = %c0_i32_9 to %11 step %c1_i32  : i32 {
      %c1_i32_13 = arith.constant 1 : i32
      %15 = arith.muli %arg16, %c1_i32_13 : i32
      %c0_i32_14 = arith.constant 0 : i32
      %16 = arith.addi %c0_i32_14, %15 : i32
      %c2_i32_15 = arith.constant 2 : i32
      %17 = arith.muli %16, %c2_i32_15 : i32
      %c4_i32 = arith.constant 4 : i32
      %18 = arith.muli %17, %c4_i32 : i32
      %19 = arith.index_cast %18 : i32 to index
      %c0_16 = arith.constant 0 : index
      %20 = vector.load %arg13[%19, %c0_16] : memref<16x128xf32, #tpu.memory_space<vmem>>, vector<4x128xf32>
      %c0_17 = arith.constant 0 : index
      %c0_18 = arith.constant 0 : index
      %21 = vector.load %arg14[%c0_17, %c0_18] : memref<4x32xbf16, #tpu.memory_space<vmem>>, vector<4x32xbf16>
      %c0_19 = arith.constant 0 : index
      %c0_20 = arith.constant 0 : index
      %22 = vector.load %arg3[%c0_19, %c0_20] : memref<32x128xbf16, #tpu.memory_space<vmem>>, vector<32x128xbf16>
      %cst_21 = arith.constant dense<0.000000e+00> : vector<4x128xf32>
      %23 = tpu.matmul %21, %22, %cst_21 {dimension_numbers = #tpu.dot_dimension_numbers<[1], [0], [0], [1], [0, 0, 1, 1], [], []>} : vector<4x32xbf16>, vector<32x128xbf16>, vector<4x128xf32> -> vector<4x128xf32>
      %24 = arith.addf %20, %23 : vector<4x128xf32>
      %c0_22 = arith.constant 0 : index
      %c0_23 = arith.constant 0 : index
      %25 = vector.load %arg15[%c0_22, %c0_23] : memref<4x32xf32, #tpu.memory_space<vmem>>, vector<4x32xf32>
      %26 = vector.extract_strided_slice %24 {offsets = [0, 0], sizes = [4, 32], strides = [1, 1]} : vector<4x128xf32> to vector<4x32xf32>
      %27 = arith.negf %26 : vector<4x32xf32>
      %28 = math.exp %27 : vector<4x32xf32>
      %cst_24 = arith.constant 1.000000e+00 : f32
      %29 = vector.broadcast %cst_24 : f32 to vector<4x32xf32>
      %30 = arith.addf %29, %28 : vector<4x32xf32>
      %31 = arith.divf %29, %30 : vector<4x32xf32>
      %32 = vector.extract_strided_slice %24 {offsets = [0, 32], sizes = [4, 32], strides = [1, 1]} : vector<4x128xf32> to vector<4x32xf32>
      %33 = arith.negf %32 : vector<4x32xf32>
      %34 = math.exp %33 : vector<4x32xf32>
      %cst_25 = arith.constant 1.000000e+00 : f32
      %35 = vector.broadcast %cst_25 : f32 to vector<4x32xf32>
      %36 = arith.addf %35, %34 : vector<4x32xf32>
      %37 = arith.divf %35, %36 : vector<4x32xf32>
      %38 = vector.extract_strided_slice %24 {offsets = [0, 64], sizes = [4, 32], strides = [1, 1]} : vector<4x128xf32> to vector<4x32xf32>
      %39 = math.tanh %38 : vector<4x32xf32>
      %40 = vector.extract_strided_slice %24 {offsets = [0, 96], sizes = [4, 32], strides = [1, 1]} : vector<4x128xf32> to vector<4x32xf32>
      %41 = arith.negf %40 : vector<4x32xf32>
      %42 = math.exp %41 : vector<4x32xf32>
      %cst_26 = arith.constant 1.000000e+00 : f32
      %43 = vector.broadcast %cst_26 : f32 to vector<4x32xf32>
      %44 = arith.addf %43, %42 : vector<4x32xf32>
      %45 = arith.divf %43, %44 : vector<4x32xf32>
      %46 = arith.mulf %37, %25 : vector<4x32xf32>
      %47 = arith.mulf %31, %39 : vector<4x32xf32>
      %48 = arith.addf %46, %47 : vector<4x32xf32>
      %49 = math.tanh %48 : vector<4x32xf32>
      %50 = arith.mulf %45, %49 : vector<4x32xf32>
      %51 = arith.truncf %50 : vector<4x32xf32> to vector<4x32xbf16>
      %c0_27 = arith.constant 0 : index
      %c0_28 = arith.constant 0 : index
      %52 = vector.load %arg14[%c0_27, %c0_28] : memref<4x32xbf16, #tpu.memory_space<vmem>>, vector<4x32xbf16>
      tpu.vector_store %arg14[%c0_27, %c0_28], %51 {strides = array<i32>} : memref<4x32xbf16, #tpu.memory_space<vmem>>, vector<4x32xbf16>,
      %c0_29 = arith.constant 0 : index
      %c0_30 = arith.constant 0 : index
      %53 = vector.load %arg15[%c0_29, %c0_30] : memref<4x32xf32, #tpu.memory_space<vmem>>, vector<4x32xf32>
      tpu.vector_store %arg15[%c0_29, %c0_30], %48 {strides = array<i32>} : memref<4x32xf32, #tpu.memory_space<vmem>>, vector<4x32xf32>,
      %c2_i32_31 = arith.constant 2 : i32
      %54 = arith.muli %16, %c2_i32_31 : i32
      %c1_i32_32 = arith.constant 1 : i32
      %55 = arith.addi %54, %c1_i32_32 : i32
      %c4_i32_33 = arith.constant 4 : i32
      %56 = arith.muli %55, %c4_i32_33 : i32
      %57 = arith.index_cast %56 : i32 to index
      %c0_34 = arith.constant 0 : index
      %58 = vector.load %arg13[%57, %c0_34] : memref<16x128xf32, #tpu.memory_space<vmem>>, vector<4x128xf32>
      %c0_35 = arith.constant 0 : index
      %c0_36 = arith.constant 0 : index
      %59 = vector.load %arg14[%c0_35, %c0_36] : memref<4x32xbf16, #tpu.memory_space<vmem>>, vector<4x32xbf16>
      %c0_37 = arith.constant 0 : index
      %c0_38 = arith.constant 0 : index
      %60 = vector.load %arg3[%c0_37, %c0_38] : memref<32x128xbf16, #tpu.memory_space<vmem>>, vector<32x128xbf16>
      %cst_39 = arith.constant dense<0.000000e+00> : vector<4x128xf32>
      %61 = tpu.matmul %59, %60, %cst_39 {dimension_numbers = #tpu.dot_dimension_numbers<[1], [0], [0], [1], [0, 0, 1, 1], [], []>} : vector<4x32xbf16>, vector<32x128xbf16>, vector<4x128xf32> -> vector<4x128xf32>
      %62 = arith.addf %58, %61 : vector<4x128xf32>
      %c0_40 = arith.constant 0 : index
      %c0_41 = arith.constant 0 : index
      %63 = vector.load %arg15[%c0_40, %c0_41] : memref<4x32xf32, #tpu.memory_space<vmem>>, vector<4x32xf32>
      %64 = vector.extract_strided_slice %62 {offsets = [0, 0], sizes = [4, 32], strides = [1, 1]} : vector<4x128xf32> to vector<4x32xf32>
      %65 = arith.negf %64 : vector<4x32xf32>
      %66 = math.exp %65 : vector<4x32xf32>
      %cst_42 = arith.constant 1.000000e+00 : f32
      %67 = vector.broadcast %cst_42 : f32 to vector<4x32xf32>
      %68 = arith.addf %67, %66 : vector<4x32xf32>
      %69 = arith.divf %67, %68 : vector<4x32xf32>
      %70 = vector.extract_strided_slice %62 {offsets = [0, 32], sizes = [4, 32], strides = [1, 1]} : vector<4x128xf32> to vector<4x32xf32>
      %71 = arith.negf %70 : vector<4x32xf32>
      %72 = math.exp %71 : vector<4x32xf32>
      %cst_43 = arith.constant 1.000000e+00 : f32
      %73 = vector.broadcast %cst_43 : f32 to vector<4x32xf32>
      %74 = arith.addf %73, %72 : vector<4x32xf32>
      %75 = arith.divf %73, %74 : vector<4x32xf32>
      %76 = vector.extract_strided_slice %62 {offsets = [0, 64], sizes = [4, 32], strides = [1, 1]} : vector<4x128xf32> to vector<4x32xf32>
      %77 = math.tanh %76 : vector<4x32xf32>
      %78 = vector.extract_strided_slice %62 {offsets = [0, 96], sizes = [4, 32], strides = [1, 1]} : vector<4x128xf32> to vector<4x32xf32>
      %79 = arith.negf %78 : vector<4x32xf32>
      %80 = math.exp %79 : vector<4x32xf32>
      %cst_44 = arith.constant 1.000000e+00 : f32
      %81 = vector.broadcast %cst_44 : f32 to vector<4x32xf32>
      %82 = arith.addf %81, %80 : vector<4x32xf32>
      %83 = arith.divf %81, %82 : vector<4x32xf32>
      %84 = arith.mulf %75, %63 : vector<4x32xf32>
      %85 = arith.mulf %69, %77 : vector<4x32xf32>
      %86 = arith.addf %84, %85 : vector<4x32xf32>
      %87 = math.tanh %86 : vector<4x32xf32>
      %88 = arith.mulf %83, %87 : vector<4x32xf32>
      %89 = arith.truncf %88 : vector<4x32xf32> to vector<4x32xbf16>
      %c0_45 = arith.constant 0 : index
      %c0_46 = arith.constant 0 : index
      %90 = vector.load %arg14[%c0_45, %c0_46] : memref<4x32xbf16, #tpu.memory_space<vmem>>, vector<4x32xbf16>
      tpu.vector_store %arg14[%c0_45, %c0_46], %89 {strides = array<i32>} : memref<4x32xbf16, #tpu.memory_space<vmem>>, vector<4x32xbf16>,
      %c0_47 = arith.constant 0 : index
      %c0_48 = arith.constant 0 : index
      %91 = vector.load %arg15[%c0_47, %c0_48] : memref<4x32xf32, #tpu.memory_space<vmem>>, vector<4x32xf32>
      tpu.vector_store %arg15[%c0_47, %c0_48], %86 {strides = array<i32>} : memref<4x32xf32, #tpu.memory_space<vmem>>, vector<4x32xf32>,
    }
    %c2_i32_10 = arith.constant 2 : i32
    %c1_i32_11 = arith.constant 1 : i32
    %12 = arith.cmpi eq, %arg0, %c1_i32_11 : i32
    %13 = arith.extui %12 : i1 to i32
    %c0_i32_12 = arith.constant 0 : i32
    %14 = arith.cmpi ne, %13, %c0_i32_12 : i32
    scf.if %14 {
      %c3 = arith.constant 3 : index
      %c0_13 = arith.constant 0 : index
      %c0_14 = arith.constant 0 : index
      %15 = vector.load %arg1[%c3, %c0_13, %c0_14] : memref<4x4x64xbf16, #tpu.memory_space<vmem>>, vector<1x4x64xbf16>
      %16 = vector.shape_cast %15 : vector<1x4x64xbf16> to vector<4x64xbf16>
      %c0_15 = arith.constant 0 : index
      %c0_16 = arith.constant 0 : index
      %17 = vector.load %arg5[%c0_15, %c0_16] : memref<64x128xbf16, #tpu.memory_space<vmem>>, vector<64x128xbf16>
      %cst_17 = arith.constant dense<0.000000e+00> : vector<4x128xf32>
      %18 = tpu.matmul %16, %17, %cst_17 {dimension_numbers = #tpu.dot_dimension_numbers<[1], [0], [0], [1], [0, 0, 1, 1], [], []>} : vector<4x64xbf16>, vector<64x128xbf16>, vector<4x128xf32> -> vector<4x128xf32>
      %c0_18 = arith.constant 0 : index
      %c0_19 = arith.constant 0 : index
      %19 = vector.load %arg6[%c0_18, %c0_19] : memref<1x128xf32, #tpu.memory_space<vmem>>, vector<1x128xf32>
      %20 = vector.broadcast %19 : vector<1x128xf32> to vector<4x128xf32>
      %21 = arith.addf %18, %20 : vector<4x128xf32>
      %cst_20 = arith.constant 0.000000e+00 : f32
      %22 = vector.broadcast %cst_20 : f32 to vector<4x32xf32>
      %23 = vector.extract_strided_slice %21 {offsets = [0, 0], sizes = [4, 32], strides = [1, 1]} : vector<4x128xf32> to vector<4x32xf32>
      %24 = arith.negf %23 : vector<4x32xf32>
      %25 = math.exp %24 : vector<4x32xf32>
      %cst_21 = arith.constant 1.000000e+00 : f32
      %26 = vector.broadcast %cst_21 : f32 to vector<4x32xf32>
      %27 = arith.addf %26, %25 : vector<4x32xf32>
      %28 = arith.divf %26, %27 : vector<4x32xf32>
      %29 = vector.extract_strided_slice %21 {offsets = [0, 32], sizes = [4, 32], strides = [1, 1]} : vector<4x128xf32> to vector<4x32xf32>
      %30 = arith.negf %29 : vector<4x32xf32>
      %31 = math.exp %30 : vector<4x32xf32>
      %cst_22 = arith.constant 1.000000e+00 : f32
      %32 = vector.broadcast %cst_22 : f32 to vector<4x32xf32>
      %33 = arith.addf %32, %31 : vector<4x32xf32>
      %34 = arith.divf %32, %33 : vector<4x32xf32>
      %35 = vector.extract_strided_slice %21 {offsets = [0, 64], sizes = [4, 32], strides = [1, 1]} : vector<4x128xf32> to vector<4x32xf32>
      %36 = math.tanh %35 : vector<4x32xf32>
      %37 = vector.extract_strided_slice %21 {offsets = [0, 96], sizes = [4, 32], strides = [1, 1]} : vector<4x128xf32> to vector<4x32xf32>
      %38 = arith.negf %37 : vector<4x32xf32>
      %39 = math.exp %38 : vector<4x32xf32>
      %cst_23 = arith.constant 1.000000e+00 : f32
      %40 = vector.broadcast %cst_23 : f32 to vector<4x32xf32>
      %41 = arith.addf %40, %39 : vector<4x32xf32>
      %42 = arith.divf %40, %41 : vector<4x32xf32>
      %43 = arith.mulf %34, %22 : vector<4x32xf32>
      %44 = arith.mulf %28, %36 : vector<4x32xf32>
      %45 = arith.addf %43, %44 : vector<4x32xf32>
      %46 = math.tanh %45 : vector<4x32xf32>
      %47 = arith.mulf %42, %46 : vector<4x32xf32>
      %c0_24 = arith.constant 0 : index
      %c0_25 = arith.constant 0 : index
      %48 = vector.load %arg14[%c0_24, %c0_25] : memref<4x32xbf16, #tpu.memory_space<vmem>>, vector<4x32xbf16>
      %c0_26 = arith.constant 0 : index
      %c0_27 = arith.constant 0 : index
      %49 = vector.load %arg7[%c0_26, %c0_27] : memref<32x32xbf16, #tpu.memory_space<vmem>>, vector<32x32xbf16>
      %cst_28 = arith.constant dense<0.000000e+00> : vector<4x32xf32>
      %50 = tpu.matmul %48, %49, %cst_28 {dimension_numbers = #tpu.dot_dimension_numbers<[1], [0], [0], [1], [0, 0, 1, 1], [], []>} : vector<4x32xbf16>, vector<32x32xbf16>, vector<4x32xf32> -> vector<4x32xf32>
      %51 = arith.truncf %47 : vector<4x32xf32> to vector<4x32xbf16>
      %c0_29 = arith.constant 0 : index
      %c0_30 = arith.constant 0 : index
      %52 = vector.load %arg8[%c0_29, %c0_30] : memref<32x32xbf16, #tpu.memory_space<vmem>>, vector<32x32xbf16>
      %cst_31 = arith.constant dense<0.000000e+00> : vector<4x32xf32>
      %53 = tpu.matmul %51, %52, %cst_31 {dimension_numbers = #tpu.dot_dimension_numbers<[1], [0], [0], [1], [0, 0, 1, 1], [], []>} : vector<4x32xbf16>, vector<32x32xbf16>, vector<4x32xf32> -> vector<4x32xf32>
      %54 = arith.addf %50, %53 : vector<4x32xf32>
      %c0_32 = arith.constant 0 : index
      %c0_33 = arith.constant 0 : index
      %55 = vector.load %arg9[%c0_32, %c0_33] : memref<1x32xf32, #tpu.memory_space<vmem>>, vector<1x32xf32>
      %56 = vector.broadcast %55 : vector<1x32xf32> to vector<4x32xf32>
      %57 = arith.addf %54, %56 : vector<4x32xf32>
      %58 = arith.truncf %57 : vector<4x32xf32> to vector<4x32xbf16>
      %c0_34 = arith.constant 0 : index
      %c0_35 = arith.constant 0 : index
      %59 = vector.load %arg10[%c0_34, %c0_35] : memref<32x128xbf16, #tpu.memory_space<vmem>>, vector<32x128xbf16>
      %cst_36 = arith.constant dense<0.000000e+00> : vector<4x128xf32>
      %60 = tpu.matmul %58, %59, %cst_36 {dimension_numbers = #tpu.dot_dimension_numbers<[1], [0], [0], [1], [0, 0, 1, 1], [], []>} : vector<4x32xbf16>, vector<32x128xbf16>, vector<4x128xf32> -> vector<4x128xf32>
      %c0_37 = arith.constant 0 : index
      %c0_38 = arith.constant 0 : index
      %61 = vector.load %arg11[%c0_37, %c0_38] : memref<1x128xf32, #tpu.memory_space<vmem>>, vector<1x128xf32>
      %62 = vector.broadcast %61 : vector<1x128xf32> to vector<4x128xf32>
      %63 = arith.addf %60, %62 : vector<4x128xf32>
      %c0_39 = arith.constant 0 : index
      %c0_40 = arith.constant 0 : index
      %64 = vector.load %arg12[%c0_39, %c0_40] : memref<4x128xf32, #tpu.memory_space<vmem>>, vector<4x128xf32>
      tpu.vector_store %arg12[%c0_39, %c0_40], %63 {strides = array<i32>} : memref<4x128xf32, #tpu.memory_space<vmem>>, vector<4x128xf32>,
    } else {
    }
    return
  }
  func.func @transform_0(%arg0: i32) -> (i32, i32, i32) {
    %c0_i32 = arith.constant 0 : i32
    %c0_i32_0 = arith.constant 0 : i32
    %c0_i32_1 = arith.constant 0 : i32
    return %arg0, %c0_i32, %c0_i32_0 : i32, i32, i32
  }
  func.func @transform_1(%arg0: i32) -> (i32, i32) {
    %c0_i32 = arith.constant 0 : i32
    %c0_i32_0 = arith.constant 0 : i32
    %c0_i32_1 = arith.constant 0 : i32
    return %c0_i32, %c0_i32_0 : i32, i32
  }
  func.func @transform_2(%arg0: i32) -> (i32, i32) {
    %c0_i32 = arith.constant 0 : i32
    %c0_i32_0 = arith.constant 0 : i32
    %c0_i32_1 = arith.constant 0 : i32
    return %c0_i32, %c0_i32_0 : i32, i32
  }
  func.func @transform_3(%arg0: i32) -> (i32, i32) {
    %c0_i32 = arith.constant 0 : i32
    %c0_i32_0 = arith.constant 0 : i32
    %c0_i32_1 = arith.constant 0 : i32
    return %c0_i32, %c0_i32_0 : i32, i32
  }
  func.func @transform_4(%arg0: i32) -> (i32, i32) {
    %c0_i32 = arith.constant 0 : i32
    %c0_i32_0 = arith.constant 0 : i32
    %c0_i32_1 = arith.constant 0 : i32
    return %c0_i32, %c0_i32_0 : i32, i32
  }
  func.func @transform_5(%arg0: i32) -> (i32, i32) {
    %c0_i32 = arith.constant 0 : i32
    %c0_i32_0 = arith.constant 0 : i32
    %c0_i32_1 = arith.constant 0 : i32
    return %c0_i32, %c0_i32_0 : i32, i32
  }
  func.func @transform_6(%arg0: i32) -> (i32, i32) {
    %c0_i32 = arith.constant 0 : i32
    %c0_i32_0 = arith.constant 0 : i32
    %c0_i32_1 = arith.constant 0 : i32
    return %c0_i32, %c0_i32_0 : i32, i32
  }
  func.func @transform_7(%arg0: i32) -> (i32, i32) {
    %c0_i32 = arith.constant 0 : i32
    %c0_i32_0 = arith.constant 0 : i32
    %c0_i32_1 = arith.constant 0 : i32
    return %c0_i32, %c0_i32_0 : i32, i32
  }
  func.func @transform_8(%arg0: i32) -> (i32, i32) {
    %c0_i32 = arith.constant 0 : i32
    %c0_i32_0 = arith.constant 0 : i32
    %c0_i32_1 = arith.constant 0 : i32
    return %c0_i32, %c0_i32_0 : i32, i32
  }
  func.func @transform_9(%arg0: i32) -> (i32, i32) {
    %c0_i32 = arith.constant 0 : i32
    %c0_i32_0 = arith.constant 0 : i32
    %c0_i32_1 = arith.constant 0 : i32
    return %c0_i32, %c0_i32_0 : i32, i32
  }
  func.func @transform_10(%arg0: i32) -> (i32, i32) {
    %c0_i32 = arith.constant 0 : i32
    %c0_i32_0 = arith.constant 0 : i32
    %c0_i32_1 = arith.constant 0 : i32
    return %c0_i32, %c0_i32_0 : i32, i32
  }
  func.func @transform_11(%arg0: i32) -> (i32, i32) {
    %c0_i32 = arith.constant 0 : i32
    %c0_i32_0 = arith.constant 0 : i32
    %c0_i32_1 = arith.constant 0 : i32
    return %c0_i32, %c0_i32_0 : i32, i32
  }
}

</mosaic_0001>

<llo_original>
// kernel: lstm_model_forward.2
$region0: #{lstm_model_forward.2}
  #allocation0 [shape = 'u32[]', space=smem, size = 0x4, offset = 0x4, fixed_abs, tag = 'smem constant byte address 0x4 - core index']
  #allocation1 [shape = 'u32[144,128]{1,0:T(1,128)}', space=vmem, size = 0x12000, scoped, tag = 'internal scratch']
  #allocation2 [shape = 'f32[16,128]{1,0:T(8,128)}', space=vmem, size = 0x2000, scoped, tag = 'scratch operand']
  #allocation3 [shape = 'f32[16,128]{1,0:T(8,128)}', space=vmem, size = 0x2000, scoped, tag = 'scratch operand']
  #allocation4 [shape = 'bf16[4,32]{1,0:T(4,128)(2,1)}', space=vmem, size = 0x400, scoped, tag = 'scratch operand']
  #allocation5 [shape = 'f32[4,32]{1,0:T(4,128)}', space=vmem, size = 0x800, scoped, tag = 'scratch operand']
  #allocation6 [shape = 'bf16[4,32]{1,0:T(4,128)(2,1)}', space=vmem, size = 0x400, scoped, tag = 'scratch operand']
  #allocation7 [shape = 'f32[4,32]{1,0:T(4,128)}', space=vmem, size = 0x800, scoped, tag = 'scratch operand']
  %s0 = inlined_call_operand.vmem [shape: bf16[8,4,16], index: 0, kind: input, shape index: {}, may-alias: {0,1}]
  %s1 = inlined_call_operand.vmem [shape: bf16[8,4,16], index: 1, kind: input, shape index: {}, may-alias: {0,1}]
  %s2 = inlined_call_operand.vmem [shape: bf16[16,128], index: 2, kind: input, shape index: {}]
  %s3 = inlined_call_operand.vmem [shape: bf16[32,128], index: 3, kind: input, shape index: {}]
  %s4 = inlined_call_operand.vmem [shape: f32[1,128], index: 4, kind: input, shape index: {}]
  %s5 = inlined_call_operand.vmem [shape: bf16[16,128], index: 5, kind: input, shape index: {}]
  %s6 = inlined_call_operand.vmem [shape: bf16[32,128], index: 6, kind: input, shape index: {}]
  %s7 = inlined_call_operand.vmem [shape: f32[1,128], index: 7, kind: input, shape index: {}]
  %s8 = inlined_call_operand.vmem [shape: bf16[8,4,32], index: 8, kind: output, shape index: {0}]
  %s9 = inlined_call_operand.vmem [shape: bf16[8,4,32], index: 9, kind: output, shape index: {1}]
  %10 = xla_tuple %s8, %s9
  %s11 = sld [smem:[#allocation0]]
  $region84: #{lstm_model_forward.2} parent=0
    _
  %s13 = ssub.s32 1, %s11
  %s14 = scalar_select 0, %s13, %s11
  loop: start=0, step=1, limit=4
  $region2: #{lstm_model_forward.2} parent=0 // loop_pre_header
    _
  $region3: #{lstm_model_forward.2} parent=0 // loop_header
    %s16 = sphi 0, %s20
    %p17 = scmp.ge.s32.totalorder %s16, 4
    %s26 = sphi 0, %s28
    %s29 = sphi 0, %s26
    %s30 = sphi 0, %s29
    %s46 = sphi 0, %s30
    %s54 = sphi 0, %s56
    %s57 = sphi 0, %s54
    %s58 = sphi 0, %s57
    %s74 = sphi 0, %s58
    %s78 = sphi 0, %s78
    %s80 = sphi 0, %s78
    %s81 = sphi 0, %s80
    %s95 = sphi 0, %s81
    %s99 = sphi 0, %s99
    %s101 = sphi 0, %s99
    %s102 = sphi 0, %s101
    %s116 = sphi 0, %s102
    %s120 = sphi 0, %s120
    %s122 = sphi 0, %s120
    %s123 = sphi 0, %s122
    %s137 = sphi 0, %s123
    %s141 = sphi 0, %s141
    %s143 = sphi 0, %s141
    %s144 = sphi 0, %s143
    %s158 = sphi 0, %s144
    %s162 = sphi 0, %s162
    %s164 = sphi 0, %s162
    %s165 = sphi 0, %s164
    %s179 = sphi 0, %s165
    %s183 = sphi 0, %s183
    %s185 = sphi 0, %s183
    %s186 = sphi 0, %s185
    %s200 = sphi 0, %s186
    %s206 = sphi 0, %s208
    %s209 = sphi 0, %s206
    %s210 = sphi 0, %s209
    %s226 = sphi 0, %s210
    %s234 = sphi 0, %s236
    %s237 = sphi 0, %s234
    %s238 = sphi 0, %s237
    %s254 = sphi 0, %s238
  $region4: #{lstm_model_forward.2} parent=0 // loop_header_branch
    %19 = sbr.rel (%p17) target = $region8
  $region5: #{lstm_model_forward.2} parent=0 // loop_body
    %s21 = ssub.s32 %s16, 1
    %s22 = ssub.s32 %s16, 2
    %s23 = sadd.s32 %s16, 1
    %s24 = ssub.s32 %s16, %s23
    %p25 = scmp.eq.s32.totalorder %s24, 0
    %s27 = sadd.s32 %s26, 1
    %s28 = scalar_select %p25, %s26, %s27
    %p31 = pneg %p25
    %p32 = scmp.eq.s32.totalorder %s16, 1
    %p33 = por %p31, %p32
    %p34 = scmp.ne.s32.totalorder %s26, %s29
    %p35 = scmp.eq.s32.totalorder %s16, 0
    %p36 = por %p34, %p35
    %p37 = scmp.ne.s32.totalorder %s26, %s29
    %p38 = scmp.eq.s32.totalorder %s21, 1
    %p39 = por %p37, %p38
    %p40 = scmp.ne.s32.totalorder %s29, %s30
    %p41 = scmp.eq.s32.totalorder %s21, 0
    %p42 = por %p40, %p41
    %p43 = scmp.ne.s32.totalorder %s29, %s30
    %p44 = scmp.eq.s32.totalorder %s22, 1
    %p45 = por %p43, %p44
    %p47 = scmp.ne.s32.totalorder %s30, %s46
    %p48 = scmp.eq.s32.totalorder %s22, 0
    %p49 = por %p47, %p48
    %s50 = ssub.s32 1, %s16
    %s51 = ssub.s32 1, %s23
    %s52 = ssub.s32 %s50, %s51
    %p53 = scmp.eq.s32.totalorder %s52, 0
    %s55 = sadd.s32 %s54, 1
    %s56 = scalar_select %p53, %s54, %s55
    %p59 = pneg %p53
    %p60 = scmp.eq.s32.totalorder %s16, 1
    %p61 = por %p59, %p60
    %p62 = scmp.ne.s32.totalorder %s54, %s57
    %p63 = scmp.eq.s32.totalorder %s16, 0
    %p64 = por %p62, %p63
    %p65 = scmp.ne.s32.totalorder %s54, %s57
    %p66 = scmp.eq.s32.totalorder %s21, 1
    %p67 = por %p65, %p66
    %p68 = scmp.ne.s32.totalorder %s57, %s58
    %p69 = scmp.eq.s32.totalorder %s21, 0
    %p70 = por %p68, %p69
    %p71 = scmp.ne.s32.totalorder %s57, %s58
    %p72 = scmp.eq.s32.totalorder %s22, 1
    %p73 = por %p71, %p72
    %p75 = scmp.ne.s32.totalorder %s58, %s74
    %p76 = scmp.eq.s32.totalorder %s22, 0
    %p77 = por %p75, %p76
    %s79 = sadd.s32 %s78, 1
    %p82 = scmp.eq.s32.totalorder %s16, 1
    %p83 = scmp.ne.s32.totalorder %s78, %s80
    %p84 = scmp.eq.s32.totalorder %s16, 0
    %p85 = por %p83, %p84
    %p86 = scmp.ne.s32.totalorder %s78, %s80
    %p87 = scmp.eq.s32.totalorder %s21, 1
    %p88 = por %p86, %p87
    %p89 = scmp.ne.s32.totalorder %s80, %s81
    %p90 = scmp.eq.s32.totalorder %s21, 0
    %p91 = por %p89, %p90
    %p92 = scmp.ne.s32.totalorder %s80, %s81
    %p93 = scmp.eq.s32.totalorder %s22, 1
    %p94 = por %p92, %p93
    %p96 = scmp.ne.s32.totalorder %s81, %s95
    %p97 = scmp.eq.s32.totalorder %s22, 0
    %p98 = por %p96, %p97
    %s100 = sadd.s32 %s99, 1
    %p103 = scmp.eq.s32.totalorder %s16, 1
    %p104 = scmp.ne.s32.totalorder %s99, %s101
    %p105 = scmp.eq.s32.totalorder %s16, 0
    %p106 = por %p104, %p105
    %p107 = scmp.ne.s32.totalorder %s99, %s101
    %p108 = scmp.eq.s32.totalorder %s21, 1
    %p109 = por %p107, %p108
    %p110 = scmp.ne.s32.totalorder %s101, %s102
    %p111 = scmp.eq.s32.totalorder %s21, 0
    %p112 = por %p110, %p111
    %p113 = scmp.ne.s32.totalorder %s101, %s102
    %p114 = scmp.eq.s32.totalorder %s22, 1
    %p115 = por %p113, %p114
    %p117 = scmp.ne.s32.totalorder %s102, %s116
    %p118 = scmp.eq.s32.totalorder %s22, 0
    %p119 = por %p117, %p118
    %s121 = sadd.s32 %s120, 1
    %p124 = scmp.eq.s32.totalorder %s16, 1
    %p125 = scmp.ne.s32.totalorder %s120, %s122
    %p126 = scmp.eq.s32.totalorder %s16, 0
    %p127 = por %p125, %p126
    %p128 = scmp.ne.s32.totalorder %s120, %s122
    %p129 = scmp.eq.s32.totalorder %s21, 1
    %p130 = por %p128, %p129
    %p131 = scmp.ne.s32.totalorder %s122, %s123
    %p132 = scmp.eq.s32.totalorder %s21, 0
    %p133 = por %p131, %p132
    %p134 = scmp.ne.s32.totalorder %s122, %s123
    %p135 = scmp.eq.s32.totalorder %s22, 1
    %p136 = por %p134, %p135
    %p138 = scmp.ne.s32.totalorder %s123, %s137
    %p139 = scmp.eq.s32.totalorder %s22, 0
    %p140 = por %p138, %p139
    %s142 = sadd.s32 %s141, 1
    %p145 = scmp.eq.s32.totalorder %s16, 1
    %p146 = scmp.ne.s32.totalorder %s141, %s143
    %p147 = scmp.eq.s32.totalorder %s16, 0
    %p148 = por %p146, %p147
    %p149 = scmp.ne.s32.totalorder %s141, %s143
    %p150 = scmp.eq.s32.totalorder %s21, 1
    %p151 = por %p149, %p150
    %p152 = scmp.ne.s32.totalorder %s143, %s144
    %p153 = scmp.eq.s32.totalorder %s21, 0
    %p154 = por %p152, %p153
    %p155 = scmp.ne.s32.totalorder %s143, %s144
    %p156 = scmp.eq.s32.totalorder %s22, 1
    %p157 = por %p155, %p156
    %p159 = scmp.ne.s32.totalorder %s144, %s158
    %p160 = scmp.eq.s32.totalorder %s22, 0
    %p161 = por %p159, %p160
    %s163 = sadd.s32 %s162, 1
    %p166 = scmp.eq.s32.totalorder %s16, 1
    %p167 = scmp.ne.s32.totalorder %s162, %s164
    %p168 = scmp.eq.s32.totalorder %s16, 0
    %p169 = por %p167, %p168
    %p170 = scmp.ne.s32.totalorder %s162, %s164
    %p171 = scmp.eq.s32.totalorder %s21, 1
    %p172 = por %p170, %p171
    %p173 = scmp.ne.s32.totalorder %s164, %s165
    %p174 = scmp.eq.s32.totalorder %s21, 0
    %p175 = por %p173, %p174
    %p176 = scmp.ne.s32.totalorder %s164, %s165
    %p177 = scmp.eq.s32.totalorder %s22, 1
    %p178 = por %p176, %p177
    %p180 = scmp.ne.s32.totalorder %s165, %s179
    %p181 = scmp.eq.s32.totalorder %s22, 0
    %p182 = por %p180, %p181
    %s184 = sadd.s32 %s183, 1
    %p187 = scmp.eq.s32.totalorder %s16, 1
    %p188 = scmp.ne.s32.totalorder %s183, %s185
    %p189 = scmp.eq.s32.totalorder %s16, 0
    %p190 = por %p188, %p189
    %p191 = scmp.ne.s32.totalorder %s183, %s185
    %p192 = scmp.eq.s32.totalorder %s21, 1
    %p193 = por %p191, %p192
    %p194 = scmp.ne.s32.totalorder %s185, %s186
    %p195 = scmp.eq.s32.totalorder %s21, 0
    %p196 = por %p194, %p195
    %p197 = scmp.ne.s32.totalorder %s185, %s186
    %p198 = scmp.eq.s32.totalorder %s22, 1
    %p199 = por %p197, %p198
    %p201 = scmp.ne.s32.totalorder %s186, %s200
    %p202 = scmp.eq.s32.totalorder %s22, 0
    %p203 = por %p201, %p202
    %s204 = ssub.s32 %s16, %s23
    %p205 = scmp.eq.s32.totalorder %s204, 0
    %s207 = sadd.s32 %s206, 1
    %s208 = scalar_select %p205, %s206, %s207
    %p211 = pneg %p205
    %p212 = scmp.eq.s32.totalorder %s16, 1
    %p213 = por %p211, %p212
    %p214 = scmp.ne.s32.totalorder %s206, %s209
    %p215 = scmp.eq.s32.totalorder %s16, 0
    %p216 = por %p214, %p215
    %p217 = scmp.ne.s32.totalorder %s206, %s209
    %p218 = scmp.eq.s32.totalorder %s21, 1
    %p219 = por %p217, %p218
    %p220 = scmp.ne.s32.totalorder %s209, %s210
    %p221 = scmp.eq.s32.totalorder %s21, 0
    %p222 = por %p220, %p221
    %p223 = scmp.ne.s32.totalorder %s209, %s210
    %p224 = scmp.eq.s32.totalorder %s22, 1
    %p225 = por %p223, %p224
    %p227 = scmp.ne.s32.totalorder %s210, %s226
    %p228 = scmp.eq.s32.totalorder %s22, 0
    %p229 = por %p227, %p228
    %s230 = ssub.s32 1, %s16
    %s231 = ssub.s32 1, %s23
    %s232 = ssub.s32 %s230, %s231
    %p233 = scmp.eq.s32.totalorder %s232, 0
    %s235 = sadd.s32 %s234, 1
    %s236 = scalar_select %p233, %s234, %s235
    %p239 = pneg %p233
    %p240 = scmp.eq.s32.totalorder %s16, 1
    %p241 = por %p239, %p240
    %p242 = scmp.ne.s32.totalorder %s234, %s237
    %p243 = scmp.eq.s32.totalorder %s16, 0
    %p244 = por %p242, %p243
    %p245 = scmp.ne.s32.totalorder %s234, %s237
    %p246 = scmp.eq.s32.totalorder %s21, 1
    %p247 = por %p245, %p246
    %p248 = scmp.ne.s32.totalorder %s237, %s238
    %p249 = scmp.eq.s32.totalorder %s21, 0
    %p250 = por %p248, %p249
    %p251 = scmp.ne.s32.totalorder %s237, %s238
    %p252 = scmp.eq.s32.totalorder %s22, 1
    %p253 = por %p251, %p252
    %p255 = scmp.ne.s32.totalorder %s238, %s254
    %p256 = scmp.eq.s32.totalorder %s22, 0
    %p257 = por %p255, %p256
    %p258 = scmp.le.s32.totalorder 1, %s16
    %p259 = scmp.lt.s32.totalorder %s16, 3
    %p260 = pnand %p258, %p259
    %p261 = pneg %p260
    // Predicated region
    $region9: #{lstm_model_forward.2} parent=5 // pred_check
      _
    $region10: #{lstm_model_forward.2} parent=5 // pred_check_branch
      %263 = sbr.rel (%p260) target = $region12
    $region11: #{lstm_model_forward.2} parent=5 // pred_region
      %s264 = ssub.s32 %s16, 1
      // Predicated region
      $region13: #{lstm_model_forward.2} parent=11 // pred_check
        %p265 = pneg %p91
      $region14: #{lstm_model_forward.2} parent=11 // pred_check_branch
        %267 = sbr.rel (%p265) target = $region16
      $region15: #{lstm_model_forward.2} parent=11 // pred_region
        _
      $region16: #{lstm_model_forward.2} parent=11 // pred_fallthru
        _
      // Predicated region
      $region17: #{lstm_model_forward.2} parent=11 // pred_check
        %p268 = pneg %p112
      $region18: #{lstm_model_forward.2} parent=11 // pred_check_branch
        %270 = sbr.rel (%p268) target = $region20
      $region19: #{lstm_model_forward.2} parent=11 // pred_region
        _
      $region20: #{lstm_model_forward.2} parent=11 // pred_fallthru
        _
      // Predicated region
      $region21: #{lstm_model_forward.2} parent=11 // pred_check
        %p271 = pneg %p133
      $region22: #{lstm_model_forward.2} parent=11 // pred_check_branch
        %273 = sbr.rel (%p271) target = $region24
      $region23: #{lstm_model_forward.2} parent=11 // pred_region
        _
      $region24: #{lstm_model_forward.2} parent=11 // pred_fallthru
        _
      // Predicated region
      $region25: #{lstm_model_forward.2} parent=11 // pred_check
        %p274 = pneg %p154
      $region26: #{lstm_model_forward.2} parent=11 // pred_check_branch
        %276 = sbr.rel (%p274) target = $region28
      $region27: #{lstm_model_forward.2} parent=11 // pred_region
        _
      $region28: #{lstm_model_forward.2} parent=11 // pred_fallthru
        _
      // Predicated region
      $region29: #{lstm_model_forward.2} parent=11 // pred_check
        %p277 = pneg %p175
      $region30: #{lstm_model_forward.2} parent=11 // pred_check_branch
        %279 = sbr.rel (%p277) target = $region32
      $region31: #{lstm_model_forward.2} parent=11 // pred_region
        _
      $region32: #{lstm_model_forward.2} parent=11 // pred_fallthru
        _
      // Predicated region
      $region33: #{lstm_model_forward.2} parent=11 // pred_check
        %p280 = pneg %p196
      $region34: #{lstm_model_forward.2} parent=11 // pred_check_branch
        %282 = sbr.rel (%p280) target = $region36
      $region35: #{lstm_model_forward.2} parent=11 // pred_region
        _
      $region36: #{lstm_model_forward.2} parent=11 // pred_fallthru
        _
    $region12: #{lstm_model_forward.2} parent=5 // pred_fallthru
      _
    %p283 = scmp.lt.s32.totalorder %s16, 2
    // Predicated region
    $region37: #{lstm_model_forward.2} parent=5 // pred_check
      %p284 = pneg %p283
    $region38: #{lstm_model_forward.2} parent=5 // pred_check_branch
      %286 = sbr.rel (%p284) target = $region40
    $region39: #{lstm_model_forward.2} parent=5 // pred_region
      // Predicated region
      $region41: #{lstm_model_forward.2} parent=39 // pred_check
        %p287 = pneg %p36
      $region42: #{lstm_model_forward.2} parent=39 // pred_check_branch
        %289 = sbr.rel (%p287) target = $region44
      $region43: #{lstm_model_forward.2} parent=39 // pred_region
        %s290 = smul.u32 4, %s16
        %p291 = scmp.lt.s32.totalorder %s290, 7
        %s292 = scalar_select %p291, %s290, 7
        %s293 = smul.addr %s292, 2
        %s294 = scalar_lea.vmem %s0, %s293
        %s295 = smul.u32 4, %s16
      $region44: #{lstm_model_forward.2} parent=39 // pred_fallthru
        _
      // Predicated region
      $region45: #{lstm_model_forward.2} parent=39 // pred_check
        %p296 = pneg %p64
      $region46: #{lstm_model_forward.2} parent=39 // pred_check_branch
        %298 = sbr.rel (%p296) target = $region48
      $region47: #{lstm_model_forward.2} parent=39 // pred_region
        %s299 = ssub.s32 1, %s16
        %s300 = smul.u32 4, %s299
        %p301 = scmp.lt.s32.totalorder %s300, 7
        %s302 = scalar_select %p301, %s300, 7
        %s303 = smul.addr %s302, 2
        %s304 = scalar_lea.vmem %s1, %s303
        %s305 = ssub.s32 1, %s16
        %s306 = smul.u32 4, %s305
      $region48: #{lstm_model_forward.2} parent=39 // pred_fallthru
        _
    $region40: #{lstm_model_forward.2} parent=5 // pred_fallthru
      _
    %p307 = scmp.le.s32.totalorder 1, %s16
    %p308 = scmp.lt.s32.totalorder %s16, 3
    %p309 = pnand %p307, %p308
    %p310 = pneg %p309
    // Predicated region
    $region49: #{lstm_model_forward.2} parent=5 // pred_check
      _
    $region50: #{lstm_model_forward.2} parent=5 // pred_check_branch
      %312 = sbr.rel (%p309) target = $region52
    $region51: #{lstm_model_forward.2} parent=5 // pred_region
      %s313 = ssub.s32 %s16, 1
      %s314 = smul.u32 4, %s21
      %p315 = scmp.lt.s32.totalorder %s314, 7
      %s316 = scalar_select %p315, %s314, 7
      %s317 = smul.addr %s316, 2
      %s318 = scalar_lea.vmem %s0, %s317
      %p319 = pneg %p42
      %p320 = pneg %p39
      %s321 = ssub.s32 1, %s21
      %s322 = smul.u32 4, %s321
      %p323 = scmp.lt.s32.totalorder %s322, 7
      %s324 = scalar_select %p323, %s322, 7
      %s325 = smul.addr %s324, 2
      %s326 = scalar_lea.vmem %s1, %s325
      %p327 = pneg %p70
      %p328 = pneg %p67
      %p329 = pneg %p91
      %p330 = pneg %p88
      %p331 = pneg %p112
      %p332 = pneg %p109
      %p333 = pneg %p133
      %p334 = pneg %p130
      %p335 = pneg %p154
      %p336 = pneg %p151
      %p337 = pneg %p175
      %p338 = pneg %p172
      %p339 = pneg %p196
      %p340 = pneg %p193
      %p341 = pneg %p222
      %p342 = pneg %p219
      %s343 = smul.u32 4, %s21
      %p344 = scmp.lt.s32.totalorder %s343, 7
      %s345 = scalar_select %p344, %s343, 7
      %s346 = smul.addr %s345, 2
      %s347 = scalar_lea.vmem %s8, %s346
      %p348 = pneg %p250
      %p349 = pneg %p247
      %s350 = ssub.s32 1, %s21
      %s351 = smul.u32 4, %s350
      %p352 = scmp.lt.s32.totalorder %s351, 7
      %s353 = scalar_select %p352, %s351, 7
      %s354 = smul.addr %s353, 2
      %s355 = scalar_lea.vmem %s9, %s354
      %s356 = smul.u32 4, %s21
      %p357 = scmp.lt.s32.totalorder %s356, 7
      %s358 = scalar_select %p357, %s356, 7
      %s359 = smul.addr %s358, 2
      %s360 = scalar_lea.vmem %s0, %s359
      %s361 = smul.u32 4, %s21
      %s362 = ssub.s32 1, %s21
      %s363 = smul.u32 4, %s362
      %p364 = scmp.lt.s32.totalorder %s363, 7
      %s365 = scalar_select %p364, %s363, 7
      %s366 = smul.addr %s365, 2
      %s367 = scalar_lea.vmem %s1, %s366
      %s368 = ssub.s32 1, %s21
      %s369 = smul.u32 4, %s368
      %s370 = smul.u32 4, %s21
      %p371 = scmp.lt.s32.totalorder %s370, 7
      %s372 = scalar_select %p371, %s370, 7
      %s373 = smul.addr %s372, 2
      %s374 = scalar_lea.vmem %s8, %s373
      %s375 = smul.u32 4, %s21
      %s376 = ssub.s32 1, %s21
      %s377 = smul.u32 4, %s376
      %p378 = scmp.lt.s32.totalorder %s377, 7
      %s379 = scalar_select %p378, %s377, 7
      %s380 = smul.addr %s379, 2
      %s381 = scalar_lea.vmem %s9, %s380
      %s382 = ssub.s32 1, %s21
      %s383 = smul.u32 4, %s382
      %p385 = scmp.eq.s32.totalorder %s21, 0
      // Predicated region
      $region53: #{lstm_model_forward.2} parent=51 // pred_check
        %p386 = pneg %p385
      $region54: #{lstm_model_forward.2} parent=51 // pred_check_branch
        %388 = sbr.rel (%p386) target = $region56
      $region55: #{lstm_model_forward.2} parent=51 // pred_region
        %vm389 = vcmask 254976
        %390 = vst.msk [vmem:[#allocation4] sm:$0x3] %vm389, 0
        %vm391 = vcmask 257024
        %392 = vst.msk [vmem:[#allocation5] sm:$0xf] %vm391, 0.0
        %393 = vst.msk [vmem:[#allocation6] sm:$0x3] %vm389, 0
        %394 = vst.msk [vmem:[#allocation7] sm:$0xf] %vm391, 0.0
      $region56: #{lstm_model_forward.2} parent=51 // pred_fallthru
        _
      %v395 = vld [vmem:[%s360] sm:$0x3]
      %v396 = vld [vmem:[%s360 + $0x2] sm:$0x3]
      %v397 = vld [vmem:[%s360 + $0x4] sm:$0x3]
      %v398 = vld [vmem:[%s360 + $0x6] sm:$0x3]
      %v399 = vld [vmem:[%s367] sm:$0x3]
      %v400 = vld [vmem:[%s367 + $0x2] sm:$0x3]
      %v401 = vld [vmem:[%s367 + $0x4] sm:$0x3]
      %v402 = vld [vmem:[%s367 + $0x6] sm:$0x3]
      %v403 = vld [vmem:[%s2] sm:$0xf]
      %v404 = vld [vmem:[%s2 + $0x4] sm:$0xf]
      %v405 = vld [vmem:[%s4] sm:$0x1]
      %v407 = vlaneseq
      %v408 = vshrl.u32 %v407, 7
      %v409 = vsub.s32 0, %v408
      %v410 = vrot.slane %v405, %v409
      %v416 = vcombine.low %v395, %v396
      %v417 = vcombine.low %v397, %v398
      %v419 = vunpack.c.l.s4 1983009808
      %v420 = vunpack.c.0.s8 %v419
      %v421 = vlaneseq
      %v422 = vshrl.u32 %v421, 7
      %v423 = vsub.s32 %v420, %v422
      %v424 = vrot.slane %v416, %v423
      %v426 = vunpack.c.l.s4 1983009808
      %v427 = vunpack.c.0.s8 %v426
      %v428 = vlaneseq
      %v429 = vshrl.u32 %v428, 7
      %v430 = vsub.s32 %v427, %v429
      %v431 = vrot.slane %v417, %v430
      %v432 = vcombine.low %v424, %v431
      %v435 = vunpack.c.l.b16 %v403
      %v436 = vunpack.c.l.b16 %v404
      %v437 = vpack.c.b16 %v436, %v435
      %vm439 = vcmask 130048
      %v441 = vsel %vm439, %v432, 0
      %443 = vmatprep.subr.bf16.mxu0 0
      %444 = vmatpush1.bf16.msra.mxu0 %v437
      %445 = vmatprep.subr.bf16.mxu0 0
      %446 = vmatpush1.bf16.msra.mxu0 0
      %447 = vmatprep.subr.bf16.mxu0 0
      %448 = vmatpush1.bf16.msra.mxu0 0
      %449 = vmatprep.subr.bf16.mxu0 0
      %450 = vmatpush1.bf16.msra.mxu0 0
      %451 = vmatprep.subr.bf16.mxu0 0
      %452 = vmatpush1.bf16.msra.mxu0 0
      %453 = vmatprep.subr.bf16.mxu0 0
      %454 = vmatpush1.bf16.msra.mxu0 0
      %455 = vmatprep.subr.bf16.mxu0 0
      %456 = vmatpush1.bf16.msra.mxu0 0
      %457 = vmatprep.subr.bf16.mxu0 0
      %458 = vmatpush1.bf16.msra.mxu0 0
      %459 = vmatprep.subr.bf16.mxu0 0
      %460 = vmatpush1.bf16.msra.mxu0 0
      %461 = vmatprep.subr.bf16.mxu0 0
      %462 = vmatpush1.bf16.msra.mxu0 0
      %463 = vmatprep.subr.bf16.mxu0 0
      %464 = vmatpush1.bf16.msra.mxu0 0
      %465 = vmatprep.subr.bf16.mxu0 0
      %466 = vmatpush1.bf16.msra.mxu0 0
      %467 = vmatprep.subr.bf16.mxu0 0
      %468 = vmatpush1.bf16.msra.mxu0 0
      %469 = vmatprep.subr.bf16.mxu0 0
      %470 = vmatpush1.bf16.msra.mxu0 0
      %471 = vmatprep.subr.bf16.mxu0 0
      %472 = vmatpush1.bf16.msra.mxu0 0
      %473 = vmatprep.subr.bf16.mxu0 0
      %474 = vmatpush1.bf16.msra.mxu0 0
      %475 = vmatprep.mubr.bf16.mxu0 0
      %476 = vmatmul.mubr.bf16.gmra.mrb[0].mxu0 %v441
      %v477 = vpop.f32.mrb[0].mxu0
      %v478 = vadd.f32 %v410, %v477
      %v479 = vpop.f32.mrb[0].mxu0
      %v480 = vpop.f32.mrb[0].mxu0
      %v481 = vadd.f32 %v410, %v480
      %v482 = vpop.f32.mrb[0].mxu0
      %483 = vdwg.mxu0
      %484 = vst [vmem:[#allocation2] sm:$0xff] %v478
      %485 = vst [vmem:[#allocation2 + $0x8] sm:$0xff] %v481
      %v486 = vld [vmem:[%s5] sm:$0xf]
      %v487 = vld [vmem:[%s5 + $0x4] sm:$0xf]
      %v488 = vld [vmem:[%s7] sm:$0x1]
      %v490 = vlaneseq
      %v491 = vshrl.u32 %v490, 7
      %v492 = vsub.s32 0, %v491
      %v493 = vrot.slane %v488, %v492
      %v499 = vcombine.low %v399, %v400
      %v500 = vcombine.low %v401, %v402
      %v502 = vunpack.c.l.s4 1983009808
      %v503 = vunpack.c.0.s8 %v502
      %v504 = vlaneseq
      %v505 = vshrl.u32 %v504, 7
      %v506 = vsub.s32 %v503, %v505
      %v507 = vrot.slane %v499, %v506
      %v509 = vunpack.c.l.s4 1983009808
      %v510 = vunpack.c.0.s8 %v509
      %v511 = vlaneseq
      %v512 = vshrl.u32 %v511, 7
      %v513 = vsub.s32 %v510, %v512
      %v514 = vrot.slane %v500, %v513
      %v515 = vcombine.low %v507, %v514
      %v518 = vunpack.c.l.b16 %v486
      %v519 = vunpack.c.l.b16 %v487
      %v520 = vpack.c.b16 %v519, %v518
      %v523 = vsel %vm439, %v515, 0
      %525 = vmatprep.subr.bf16.mxu0 0
      %526 = vmatpush1.bf16.msra.mxu0 %v520
      %527 = vmatprep.subr.bf16.mxu0 0
      %528 = vmatpush1.bf16.msra.mxu0 0
      %529 = vmatprep.subr.bf16.mxu0 0
      %530 = vmatpush1.bf16.msra.mxu0 0
      %531 = vmatprep.subr.bf16.mxu0 0
      %532 = vmatpush1.bf16.msra.mxu0 0
      %533 = vmatprep.subr.bf16.mxu0 0
      %534 = vmatpush1.bf16.msra.mxu0 0
      %535 = vmatprep.subr.bf16.mxu0 0
      %536 = vmatpush1.bf16.msra.mxu0 0
      %537 = vmatprep.subr.bf16.mxu0 0
      %538 = vmatpush1.bf16.msra.mxu0 0
      %539 = vmatprep.subr.bf16.mxu0 0
      %540 = vmatpush1.bf16.msra.mxu0 0
      %541 = vmatprep.subr.bf16.mxu0 0
      %542 = vmatpush1.bf16.msra.mxu0 0
      %543 = vmatprep.subr.bf16.mxu0 0
      %544 = vmatpush1.bf16.msra.mxu0 0
      %545 = vmatprep.subr.bf16.mxu0 0
      %546 = vmatpush1.bf16.msra.mxu0 0
      %547 = vmatprep.subr.bf16.mxu0 0
      %548 = vmatpush1.bf16.msra.mxu0 0
      %549 = vmatprep.subr.bf16.mxu0 0
      %550 = vmatpush1.bf16.msra.mxu0 0
      %551 = vmatprep.subr.bf16.mxu0 0
      %552 = vmatpush1.bf16.msra.mxu0 0
      %553 = vmatprep.subr.bf16.mxu0 0
      %554 = vmatpush1.bf16.msra.mxu0 0
      %555 = vmatprep.subr.bf16.mxu0 0
      %556 = vmatpush1.bf16.msra.mxu0 0
      %557 = vmatprep.mubr.bf16.mxu0 0
      %558 = vmatmul.mubr.bf16.gmra.mrb[0].mxu0 %v523
      %v559 = vpop.f32.mrb[0].mxu0
      %v560 = vadd.f32 %v493, %v559
      %v561 = vpop.f32.mrb[0].mxu0
      %v562 = vpop.f32.mrb[0].mxu0
      %v563 = vadd.f32 %v493, %v562
      %v564 = vpop.f32.mrb[0].mxu0
      %565 = vdwg.mxu0
      %566 = vst [vmem:[#allocation3] sm:$0xff] %v560
      %567 = vst [vmem:[#allocation3 + $0x8] sm:$0xff] %v563
      loop: start=0, step=1, limit=2
      $region57: #{lstm_model_forward.2} parent=51 // loop_pre_header
        _
      $region58: #{lstm_model_forward.2} parent=51 // loop_header
        %s569 = sphi 0, %s573
        %p570 = scmp.ge.s32.totalorder %s569, 2
      $region59: #{lstm_model_forward.2} parent=51 // loop_header_branch
        %572 = sbr.rel (%p570) target = $region63
      $region60: #{lstm_model_forward.2} parent=51 // loop_body
        %s574 = smul.u32 %s569, 2
        %s575 = smul.u32 %s569, 8
        %s576 = scalar_lea.vmem [#allocation2], %s575
        %v577 = vld [vmem:[%s576] sm:$0xf]
        %v578 = vld [vmem:[#allocation4] sm:$0x3]
        %v579 = vld [vmem:[%s3] sm:$0xf]
        %v580 = vld [vmem:[%s3 + $0x4] sm:$0xf]
        %v581 = vld [vmem:[%s3 + $0x8] sm:$0xf]
        %v582 = vld [vmem:[%s3 + $0xc] sm:$0xf]
        %v587 = vunpack.c.l.b16 %v579
        %v588 = vunpack.c.l.b16 %v580
        %v589 = vunpack.c.l.b16 %v581
        %v590 = vunpack.c.l.b16 %v582
        %v591 = vpack.c.b16 %v588, %v587
        %v592 = vpack.c.b16 %v590, %v589
        %vm595 = vcmask 261120
        %v597 = vsel %vm595, %v578, 0
        %599 = vmatprep.subr.bf16.mxu0 0
        %600 = vmatpush1.bf16.msra.mxu0 %v591
        %601 = vmatprep.subr.bf16.mxu0 0
        %602 = vmatpush1.bf16.msra.mxu0 %v592
        %603 = vmatprep.subr.bf16.mxu0 0
        %604 = vmatpush1.bf16.msra.mxu0 0
        %605 = vmatprep.subr.bf16.mxu0 0
        %606 = vmatpush1.bf16.msra.mxu0 0
        %607 = vmatprep.subr.bf16.mxu0 0
        %608 = vmatpush1.bf16.msra.mxu0 0
        %609 = vmatprep.subr.bf16.mxu0 0
        %610 = vmatpush1.bf16.msra.mxu0 0
        %611 = vmatprep.subr.bf16.mxu0 0
        %612 = vmatpush1.bf16.msra.mxu0 0
        %613 = vmatprep.subr.bf16.mxu0 0
        %614 = vmatpush1.bf16.msra.mxu0 0
        %615 = vmatprep.subr.bf16.mxu0 0
        %616 = vmatpush1.bf16.msra.mxu0 0
        %617 = vmatprep.subr.bf16.mxu0 0
        %618 = vmatpush1.bf16.msra.mxu0 0
        %619 = vmatprep.subr.bf16.mxu0 0
        %620 = vmatpush1.bf16.msra.mxu0 0
        %621 = vmatprep.subr.bf16.mxu0 0
        %622 = vmatpush1.bf16.msra.mxu0 0
        %623 = vmatprep.subr.bf16.mxu0 0
        %624 = vmatpush1.bf16.msra.mxu0 0
        %625 = vmatprep.subr.bf16.mxu0 0
        %626 = vmatpush1.bf16.msra.mxu0 0
        %627 = vmatprep.subr.bf16.mxu0 0
        %628 = vmatpush1.bf16.msra.mxu0 0
        %629 = vmatprep.subr.bf16.mxu0 0
        %630 = vmatpush1.bf16.msra.mxu0 0
        %631 = vmatprep.mubr.bf16.mxu0 0
        %632 = vmatmul.mubr.bf16.gmra.mrb[0].mxu0 %v597
        %v633 = vpop.f32.mrb[0].mxu0
        %v634 = vadd.f32 0.0, %v633
        %v635 = vpop.f32.mrb[0].mxu0
        %v636 = vpop.f32.mrb[0].mxu0
        %v637 = vpop.f32.mrb[0].mxu0
        %638 = vdwg.mxu0
        %v639 = vadd.f32 %v577, %v634
        %v640 = vld [vmem:[#allocation5] sm:$0xf]
        %v641 = vxor.u32 %v639, 2147483648
        %v642 = vmul.f32 %v641, 1.442695
        %v643 = vpow.pop %v642
        %v644 = vadd.f32 %v643, 1.0
        %v645 = vrcp.pop %v644
        %v646 = vmul.f32 1.0, %v645
        %v647 = vtanh.pop %v639
        %649 = vrot.lane.b32.xlu0 %v640, 32
        %v650 = vpop.permute.xlu0 %649
        %v652 = vmul.f32 %v646, %v650
        %654 = vrot.lane.b32.xlu0 %v647, 64
        %v655 = vpop.permute.xlu0 %654
        %v657 = vmul.f32 %v646, %v655
        %659 = vrot.lane.b32.xlu0 %v657, 32
        %v660 = vpop.permute.xlu0 %659
        %v662 = vadd.f32 %v652, %v660
        %v663 = vtanh.pop %v662
        %665 = vrot.lane.b32.xlu0 %v663, 64
        %v666 = vpop.permute.xlu0 %665
        %v668 = vmul.f32 %v646, %v666
        %v669 = vpack.c.bf16 %v668, %v668
        %v672 = vunpack.c.l.s4 1983009808
        %v673 = vunpack.c.0.s8 %v672
        %v674 = vlaneseq
        %v675 = vshrl.u32 %v674, 7
        %v676 = vsub.s32 %v673, %v675
        %v677 = vrot.slane %v669, %v676
        %678 = vrot.lane.b32.xlu0 %v677, 32
        %v679 = vpop.permute.xlu0 %678
        %vm681 = vcmask 254976
        %682 = vst.msk [vmem:[#allocation4] sm:$0x3] %vm681, %v679
        %684 = vrot.lane.b32.xlu0 %v662, 96
        %v685 = vpop.permute.xlu0 %684
        %vm687 = vcmask 257024
        %688 = vst.msk [vmem:[#allocation5] sm:$0xf] %vm687, %v685
        %s689 = smul.addr %s574, 2
        %s690 = scalar_lea.vmem %s374, %s689
        %691 = vst.msk [vmem:[%s690] sm:$0x3] %vm681, %v679
        %s692 = ssub.s32 3, %s574
        %s693 = smul.u32 %s692, 4
        %s694 = scalar_lea.vmem [#allocation3], %s693
        %v695 = vld [vmem:[%s694] sm:$0xf]
        %v696 = vld [vmem:[#allocation6] sm:$0x3]
        %v697 = vld [vmem:[%s6] sm:$0xf]
        %v698 = vld [vmem:[%s6 + $0x4] sm:$0xf]
        %v699 = vld [vmem:[%s6 + $0x8] sm:$0xf]
        %v700 = vld [vmem:[%s6 + $0xc] sm:$0xf]
        %v705 = vunpack.c.l.b16 %v697
        %v706 = vunpack.c.l.b16 %v698
        %v707 = vunpack.c.l.b16 %v699
        %v708 = vunpack.c.l.b16 %v700
        %v709 = vpack.c.b16 %v706, %v705
        %v710 = vpack.c.b16 %v708, %v707
        %v714 = vsel %vm595, %v696, 0
        %716 = vmatprep.subr.bf16.mxu0 0
        %717 = vmatpush1.bf16.msra.mxu0 %v709
        %718 = vmatprep.subr.bf16.mxu0 0
        %719 = vmatpush1.bf16.msra.mxu0 %v710
        %720 = vmatprep.subr.bf16.mxu0 0
        %721 = vmatpush1.bf16.msra.mxu0 0
        %722 = vmatprep.subr.bf16.mxu0 0
        %723 = vmatpush1.bf16.msra.mxu0 0
        %724 = vmatprep.subr.bf16.mxu0 0
        %725 = vmatpush1.bf16.msra.mxu0 0
        %726 = vmatprep.subr.bf16.mxu0 0
        %727 = vmatpush1.bf16.msra.mxu0 0
        %728 = vmatprep.subr.bf16.mxu0 0
        %729 = vmatpush1.bf16.msra.mxu0 0
        %730 = vmatprep.subr.bf16.mxu0 0
        %731 = vmatpush1.bf16.msra.mxu0 0
        %732 = vmatprep.subr.bf16.mxu0 0
        %733 = vmatpush1.bf16.msra.mxu0 0
        %734 = vmatprep.subr.bf16.mxu0 0
        %735 = vmatpush1.bf16.msra.mxu0 0
        %736 = vmatprep.subr.bf16.mxu0 0
        %737 = vmatpush1.bf16.msra.mxu0 0
        %738 = vmatprep.subr.bf16.mxu0 0
        %739 = vmatpush1.bf16.msra.mxu0 0
        %740 = vmatprep.subr.bf16.mxu0 0
        %741 = vmatpush1.bf16.msra.mxu0 0
        %742 = vmatprep.subr.bf16.mxu0 0
        %743 = vmatpush1.bf16.msra.mxu0 0
        %744 = vmatprep.subr.bf16.mxu0 0
        %745 = vmatpush1.bf16.msra.mxu0 0
        %746 = vmatprep.subr.bf16.mxu0 0
        %747 = vmatpush1.bf16.msra.mxu0 0
        %748 = vmatprep.mubr.bf16.mxu0 0
        %749 = vmatmul.mubr.bf16.gmra.mrb[0].mxu0 %v714
        %v750 = vpop.f32.mrb[0].mxu0
        %v751 = vadd.f32 0.0, %v750
        %v752 = vpop.f32.mrb[0].mxu0
        %v753 = vpop.f32.mrb[0].mxu0
        %v754 = vpop.f32.mrb[0].mxu0
        %755 = vdwg.mxu0
        %v756 = vadd.f32 %v695, %v751
        %v757 = vld [vmem:[#allocation7] sm:$0xf]
        %v758 = vxor.u32 %v756, 2147483648
        %v759 = vmul.f32 %v758, 1.442695
        %v760 = vpow.pop %v759
        %v761 = vadd.f32 %v760, 1.0
        %v762 = vrcp.pop %v761
        %v763 = vmul.f32 1.0, %v762
        %v764 = vtanh.pop %v756
        %766 = vrot.lane.b32.xlu0 %v757, 32
        %v767 = vpop.permute.xlu0 %766
        %v769 = vmul.f32 %v763, %v767
        %771 = vrot.lane.b32.xlu0 %v764, 64
        %v772 = vpop.permute.xlu0 %771
        %v774 = vmul.f32 %v763, %v772
        %776 = vrot.lane.b32.xlu0 %v774, 32
        %v777 = vpop.permute.xlu0 %776
        %v779 = vadd.f32 %v769, %v777
        %v780 = vtanh.pop %v779
        %782 = vrot.lane.b32.xlu0 %v780, 64
        %v783 = vpop.permute.xlu0 %782
        %v785 = vmul.f32 %v763, %v783
        %v786 = vpack.c.bf16 %v785, %v785
        %v789 = vunpack.c.l.s4 1983009808
        %v790 = vunpack.c.0.s8 %v789
        %v791 = vlaneseq
        %v792 = vshrl.u32 %v791, 7
        %v793 = vsub.s32 %v790, %v792
        %v794 = vrot.slane %v786, %v793
        %795 = vrot.lane.b32.xlu0 %v794, 32
        %v796 = vpop.permute.xlu0 %795
        %798 = vst.msk [vmem:[#allocation6] sm:$0x3] %vm681, %v796
        %800 = vrot.lane.b32.xlu0 %v779, 96
        %v801 = vpop.permute.xlu0 %800
        %803 = vst.msk [vmem:[#allocation7] sm:$0xf] %vm687, %v801
        %s804 = smul.addr %s692, 2
        %s805 = scalar_lea.vmem %s381, %s804
        %806 = vst.msk [vmem:[%s805] sm:$0x3] %vm681, %v796
        %s807 = sadd.s32 %s574, 1
        %s808 = smul.u32 %s807, 4
        %s809 = scalar_lea.vmem [#allocation2], %s808
        %v810 = vld [vmem:[%s809] sm:$0xf]
        %v811 = vld [vmem:[#allocation4] sm:$0x3]
        %v812 = vld [vmem:[%s3] sm:$0xf]
        %v813 = vld [vmem:[%s3 + $0x4] sm:$0xf]
        %v814 = vld [vmem:[%s3 + $0x8] sm:$0xf]
        %v815 = vld [vmem:[%s3 + $0xc] sm:$0xf]
        %v820 = vunpack.c.l.b16 %v812
        %v821 = vunpack.c.l.b16 %v813
        %v822 = vunpack.c.l.b16 %v814
        %v823 = vunpack.c.l.b16 %v815
        %v824 = vpack.c.b16 %v821, %v820
        %v825 = vpack.c.b16 %v823, %v822
        %v829 = vsel %vm595, %v811, 0
        %831 = vmatprep.subr.bf16.mxu0 0
        %832 = vmatpush1.bf16.msra.mxu0 %v824
        %833 = vmatprep.subr.bf16.mxu0 0
        %834 = vmatpush1.bf16.msra.mxu0 %v825
        %835 = vmatprep.subr.bf16.mxu0 0
        %836 = vmatpush1.bf16.msra.mxu0 0
        %837 = vmatprep.subr.bf16.mxu0 0
        %838 = vmatpush1.bf16.msra.mxu0 0
        %839 = vmatprep.subr.bf16.mxu0 0
        %840 = vmatpush1.bf16.msra.mxu0 0
        %841 = vmatprep.subr.bf16.mxu0 0
        %842 = vmatpush1.bf16.msra.mxu0 0
        %843 = vmatprep.subr.bf16.mxu0 0
        %844 = vmatpush1.bf16.msra.mxu0 0
        %845 = vmatprep.subr.bf16.mxu0 0
        %846 = vmatpush1.bf16.msra.mxu0 0
        %847 = vmatprep.subr.bf16.mxu0 0
        %848 = vmatpush1.bf16.msra.mxu0 0
        %849 = vmatprep.subr.bf16.mxu0 0
        %850 = vmatpush1.bf16.msra.mxu0 0
        %851 = vmatprep.subr.bf16.mxu0 0
        %852 = vmatpush1.bf16.msra.mxu0 0
        %853 = vmatprep.subr.bf16.mxu0 0
        %854 = vmatpush1.bf16.msra.mxu0 0
        %855 = vmatprep.subr.bf16.mxu0 0
        %856 = vmatpush1.bf16.msra.mxu0 0
        %857 = vmatprep.subr.bf16.mxu0 0
        %858 = vmatpush1.bf16.msra.mxu0 0
        %859 = vmatprep.subr.bf16.mxu0 0
        %860 = vmatpush1.bf16.msra.mxu0 0
        %861 = vmatprep.subr.bf16.mxu0 0
        %862 = vmatpush1.bf16.msra.mxu0 0
        %863 = vmatprep.mubr.bf16.mxu0 0
        %864 = vmatmul.mubr.bf16.gmra.mrb[0].mxu0 %v829
        %v865 = vpop.f32.mrb[0].mxu0
        %v866 = vadd.f32 0.0, %v865
        %v867 = vpop.f32.mrb[0].mxu0
        %v868 = vpop.f32.mrb[0].mxu0
        %v869 = vpop.f32.mrb[0].mxu0
        %870 = vdwg.mxu0
        %v871 = vadd.f32 %v810, %v866
        %v872 = vld [vmem:[#allocation5] sm:$0xf]
        %v873 = vxor.u32 %v871, 2147483648
        %v874 = vmul.f32 %v873, 1.442695
        %v875 = vpow.pop %v874
        %v876 = vadd.f32 %v875, 1.0
        %v877 = vrcp.pop %v876
        %v878 = vmul.f32 1.0, %v877
        %v879 = vtanh.pop %v871
        %881 = vrot.lane.b32.xlu0 %v872, 32
        %v882 = vpop.permute.xlu0 %881
        %v884 = vmul.f32 %v878, %v882
        %886 = vrot.lane.b32.xlu0 %v879, 64
        %v887 = vpop.permute.xlu0 %886
        %v889 = vmul.f32 %v878, %v887
        %891 = vrot.lane.b32.xlu0 %v889, 32
        %v892 = vpop.permute.xlu0 %891
        %v894 = vadd.f32 %v884, %v892
        %v895 = vtanh.pop %v894
        %897 = vrot.lane.b32.xlu0 %v895, 64
        %v898 = vpop.permute.xlu0 %897
        %v900 = vmul.f32 %v878, %v898
        %v901 = vpack.c.bf16 %v900, %v900
        %v904 = vunpack.c.l.s4 1983009808
        %v905 = vunpack.c.0.s8 %v904
        %v906 = vlaneseq
        %v907 = vshrl.u32 %v906, 7
        %v908 = vsub.s32 %v905, %v907
        %v909 = vrot.slane %v901, %v908
        %910 = vrot.lane.b32.xlu0 %v909, 32
        %v911 = vpop.permute.xlu0 %910
        %913 = vst.msk [vmem:[#allocation4] sm:$0x3] %vm681, %v911
        %915 = vrot.lane.b32.xlu0 %v894, 96
        %v916 = vpop.permute.xlu0 %915
        %918 = vst.msk [vmem:[#allocation5] sm:$0xf] %vm687, %v916
        %s919 = smul.addr %s807, 2
        %s920 = scalar_lea.vmem %s374, %s919
        %921 = vst.msk [vmem:[%s920] sm:$0x3] %vm681, %v911
        %s922 = ssub.s32 2, %s574
        %s923 = smul.u32 %s922, 4
        %s924 = scalar_lea.vmem [#allocation3], %s923
        %v925 = vld [vmem:[%s924] sm:$0xf]
        %v926 = vld [vmem:[#allocation6] sm:$0x3]
        %v927 = vld [vmem:[%s6] sm:$0xf]
        %v928 = vld [vmem:[%s6 + $0x4] sm:$0xf]
        %v929 = vld [vmem:[%s6 + $0x8] sm:$0xf]
        %v930 = vld [vmem:[%s6 + $0xc] sm:$0xf]
        %v935 = vunpack.c.l.b16 %v927
        %v936 = vunpack.c.l.b16 %v928
        %v937 = vunpack.c.l.b16 %v929
        %v938 = vunpack.c.l.b16 %v930
        %v939 = vpack.c.b16 %v936, %v935
        %v940 = vpack.c.b16 %v938, %v937
        %v944 = vsel %vm595, %v926, 0
        %946 = vmatprep.subr.bf16.mxu0 0
        %947 = vmatpush1.bf16.msra.mxu0 %v939
        %948 = vmatprep.subr.bf16.mxu0 0
        %949 = vmatpush1.bf16.msra.mxu0 %v940
        %950 = vmatprep.subr.bf16.mxu0 0
        %951 = vmatpush1.bf16.msra.mxu0 0
        %952 = vmatprep.subr.bf16.mxu0 0
        %953 = vmatpush1.bf16.msra.mxu0 0
        %954 = vmatprep.subr.bf16.mxu0 0
        %955 = vmatpush1.bf16.msra.mxu0 0
        %956 = vmatprep.subr.bf16.mxu0 0
        %957 = vmatpush1.bf16.msra.mxu0 0
        %958 = vmatprep.subr.bf16.mxu0 0
        %959 = vmatpush1.bf16.msra.mxu0 0
        %960 = vmatprep.subr.bf16.mxu0 0
        %961 = vmatpush1.bf16.msra.mxu0 0
        %962 = vmatprep.subr.bf16.mxu0 0
        %963 = vmatpush1.bf16.msra.mxu0 0
        %964 = vmatprep.subr.bf16.mxu0 0
        %965 = vmatpush1.bf16.msra.mxu0 0
        %966 = vmatprep.subr.bf16.mxu0 0
        %967 = vmatpush1.bf16.msra.mxu0 0
        %968 = vmatprep.subr.bf16.mxu0 0
        %969 = vmatpush1.bf16.msra.mxu0 0
        %970 = vmatprep.subr.bf16.mxu0 0
        %971 = vmatpush1.bf16.msra.mxu0 0
        %972 = vmatprep.subr.bf16.mxu0 0
        %973 = vmatpush1.bf16.msra.mxu0 0
        %974 = vmatprep.subr.bf16.mxu0 0
        %975 = vmatpush1.bf16.msra.mxu0 0
        %976 = vmatprep.subr.bf16.mxu0 0
        %977 = vmatpush1.bf16.msra.mxu0 0
        %978 = vmatprep.mubr.bf16.mxu0 0
        %979 = vmatmul.mubr.bf16.gmra.mrb[0].mxu0 %v944
        %v980 = vpop.f32.mrb[0].mxu0
        %v981 = vadd.f32 0.0, %v980
        %v982 = vpop.f32.mrb[0].mxu0
        %v983 = vpop.f32.mrb[0].mxu0
        %v984 = vpop.f32.mrb[0].mxu0
        %985 = vdwg.mxu0
        %v986 = vadd.f32 %v925, %v981
        %v987 = vld [vmem:[#allocation7] sm:$0xf]
        %v988 = vxor.u32 %v986, 2147483648
        %v989 = vmul.f32 %v988, 1.442695
        %v990 = vpow.pop %v989
        %v991 = vadd.f32 %v990, 1.0
        %v992 = vrcp.pop %v991
        %v993 = vmul.f32 1.0, %v992
        %v994 = vtanh.pop %v986
        %996 = vrot.lane.b32.xlu0 %v987, 32
        %v997 = vpop.permute.xlu0 %996
        %v999 = vmul.f32 %v993, %v997
        %1001 = vrot.lane.b32.xlu0 %v994, 64
        %v1002 = vpop.permute.xlu0 %1001
        %v1004 = vmul.f32 %v993, %v1002
        %1006 = vrot.lane.b32.xlu0 %v1004, 32
        %v1007 = vpop.permute.xlu0 %1006
        %v1009 = vadd.f32 %v999, %v1007
        %v1010 = vtanh.pop %v1009
        %1012 = vrot.lane.b32.xlu0 %v1010, 64
        %v1013 = vpop.permute.xlu0 %1012
        %v1015 = vmul.f32 %v993, %v1013
        %v1016 = vpack.c.bf16 %v1015, %v1015
        %v1019 = vunpack.c.l.s4 1983009808
        %v1020 = vunpack.c.0.s8 %v1019
        %v1021 = vlaneseq
        %v1022 = vshrl.u32 %v1021, 7
        %v1023 = vsub.s32 %v1020, %v1022
        %v1024 = vrot.slane %v1016, %v1023
        %1025 = vrot.lane.b32.xlu0 %v1024, 32
        %v1026 = vpop.permute.xlu0 %1025
        %1028 = vst.msk [vmem:[#allocation6] sm:$0x3] %vm681, %v1026
        %1030 = vrot.lane.b32.xlu0 %v1009, 96
        %v1031 = vpop.permute.xlu0 %1030
        %1033 = vst.msk [vmem:[#allocation7] sm:$0xf] %vm687, %v1031
        %s1034 = smul.addr %s922, 2
        %s1035 = scalar_lea.vmem %s381, %s1034
        %1036 = vst.msk [vmem:[%s1035] sm:$0x3] %vm681, %v1026
      $region61: #{lstm_model_forward.2} parent=51 // loop_footer
        %s573 = sadd.s32 1, %s569
      $region62: #{lstm_model_forward.2} parent=51 // loop_footer_branch
        %568 = sbr.rel target = $region58
      $region63: #{lstm_model_forward.2} parent=51 // loop_exit
        _
      %s1037 = smul.u32 4, %s21
      %p1038 = scmp.lt.s32.totalorder %s1037, 7
      %s1039 = scalar_select %p1038, %s1037, 7
      %s1040 = smul.addr %s1039, 2
      %s1041 = scalar_lea.vmem %s8, %s1040
      %s1042 = ssub.s32 1, %s21
      %s1043 = smul.u32 4, %s1042
      %p1044 = scmp.lt.s32.totalorder %s1043, 7
      %s1045 = scalar_select %p1044, %s1043, 7
      %s1046 = smul.addr %s1045, 2
      %s1047 = scalar_lea.vmem %s9, %s1046
      // Predicated region
      $region64: #{lstm_model_forward.2} parent=51 // pred_check
        %p1048 = pneg %p219
      $region65: #{lstm_model_forward.2} parent=51 // pred_check_branch
        %1050 = sbr.rel (%p1048) target = $region67
      $region66: #{lstm_model_forward.2} parent=51 // pred_region
        %s1051 = smul.u32 4, %s21
      $region67: #{lstm_model_forward.2} parent=51 // pred_fallthru
        _
      // Predicated region
      $region68: #{lstm_model_forward.2} parent=51 // pred_check
        %p1052 = pneg %p247
      $region69: #{lstm_model_forward.2} parent=51 // pred_check_branch
        %1054 = sbr.rel (%p1052) target = $region71
      $region70: #{lstm_model_forward.2} parent=51 // pred_region
        %s1055 = ssub.s32 1, %s21
        %s1056 = smul.u32 4, %s1055
      $region71: #{lstm_model_forward.2} parent=51 // pred_fallthru
        _
    $region52: #{lstm_model_forward.2} parent=5 // pred_fallthru
      _
    %p1057 = scmp.le.s32.totalorder 2, %s16
    // Predicated region
    $region72: #{lstm_model_forward.2} parent=5 // pred_check
      %p1058 = pneg %p1057
    $region73: #{lstm_model_forward.2} parent=5 // pred_check_branch
      %1060 = sbr.rel (%p1058) target = $region75
    $region74: #{lstm_model_forward.2} parent=5 // pred_region
      %s1061 = ssub.s32 %s16, 2
      // Predicated region
      $region76: #{lstm_model_forward.2} parent=74 // pred_check
        %p1062 = pneg %p225
      $region77: #{lstm_model_forward.2} parent=74 // pred_check_branch
        %1064 = sbr.rel (%p1062) target = $region79
      $region78: #{lstm_model_forward.2} parent=74 // pred_region
        %s1065 = smul.u32 4, %s22
        %p1066 = scmp.lt.s32.totalorder %s1065, 7
        %s1067 = scalar_select %p1066, %s1065, 7
        %s1068 = smul.addr %s1067, 2
        %s1069 = scalar_lea.vmem %s8, %s1068
      $region79: #{lstm_model_forward.2} parent=74 // pred_fallthru
        _
      // Predicated region
      $region80: #{lstm_model_forward.2} parent=74 // pred_check
        %p1070 = pneg %p253
      $region81: #{lstm_model_forward.2} parent=74 // pred_check_branch
        %1072 = sbr.rel (%p1070) target = $region83
      $region82: #{lstm_model_forward.2} parent=74 // pred_region
        %s1073 = ssub.s32 1, %s22
        %s1074 = smul.u32 4, %s1073
        %p1075 = scmp.lt.s32.totalorder %s1074, 7
        %s1076 = scalar_select %p1075, %s1074, 7
        %s1077 = smul.addr %s1076, 2
        %s1078 = scalar_lea.vmem %s9, %s1077
      $region83: #{lstm_model_forward.2} parent=74 // pred_fallthru
        _
    $region75: #{lstm_model_forward.2} parent=5 // pred_fallthru
      _
  $region6: #{lstm_model_forward.2} parent=0 // loop_footer
    %s20 = sadd.s32 1, %s16
  $region7: #{lstm_model_forward.2} parent=0 // loop_footer_branch
    %15 = sbr.rel target = $region3
  $region8: #{lstm_model_forward.2} parent=0 // loop_exit
    _

// kernel: lstm_model_forward.3
$region0: #{lstm_model_forward.3}
  #allocation0 [shape = 'u32[]', space=smem, size = 0x4, offset = 0x4, fixed_abs, tag = 'smem constant byte address 0x4 - core index']
  #allocation1 [shape = 'u32[144,128]{1,0:T(1,128)}', space=vmem, size = 0x12000, scoped, tag = 'internal scratch']
  #allocation2 [shape = 'f32[16,128]{1,0:T(8,128)}', space=vmem, size = 0x2000, scoped, tag = 'scratch operand']
  #allocation3 [shape = 'bf16[4,32]{1,0:T(4,128)(2,1)}', space=vmem, size = 0x400, scoped, tag = 'scratch operand']
  #allocation4 [shape = 'f32[4,32]{1,0:T(4,128)}', space=vmem, size = 0x800, scoped, tag = 'scratch operand']
  %s0 = inlined_call_operand.vmem [shape: bf16[8,4,64], index: 0, kind: input, shape index: {}]
  %s1 = inlined_call_operand.vmem [shape: bf16[64,128], index: 1, kind: input, shape index: {}]
  %s2 = inlined_call_operand.vmem [shape: bf16[32,128], index: 2, kind: input, shape index: {}]
  %s3 = inlined_call_operand.vmem [shape: f32[1,128], index: 3, kind: input, shape index: {}]
  %s4 = inlined_call_operand.vmem [shape: bf16[64,128], index: 4, kind: input, shape index: {}]
  %s5 = inlined_call_operand.vmem [shape: f32[1,128], index: 5, kind: input, shape index: {}]
  %s6 = inlined_call_operand.vmem [shape: bf16[32,32], index: 6, kind: input, shape index: {}]
  %s7 = inlined_call_operand.vmem [shape: bf16[32,32], index: 7, kind: input, shape index: {}]
  %s8 = inlined_call_operand.vmem [shape: f32[1,32], index: 8, kind: input, shape index: {}]
  %s9 = inlined_call_operand.vmem [shape: bf16[32,128], index: 9, kind: input, shape index: {}]
  %s10 = inlined_call_operand.vmem [shape: f32[1,128], index: 10, kind: input, shape index: {}]
  %s11 = inlined_call_operand.vmem [shape: f32[4,128], index: 11, kind: output, shape index: {}]
  %s12 = sld [smem:[#allocation0]]
  $region92: #{lstm_model_forward.3} parent=0
    _
  %s14 = ssub.s32 1, %s12
  %s15 = scalar_select 0, %s14, %s12
  loop: start=0, step=1, limit=4
  $region2: #{lstm_model_forward.3} parent=0 // loop_pre_header
    _
  $region3: #{lstm_model_forward.3} parent=0 // loop_header
    %s17 = sphi 0, %s21
    %p18 = scmp.ge.s32.totalorder %s17, 4
    %s27 = sphi 0, %s29
    %s30 = sphi 0, %s27
    %s31 = sphi 0, %s30
    %s47 = sphi 0, %s31
    %s51 = sphi 0, %s51
    %s53 = sphi 0, %s51
    %s54 = sphi 0, %s53
    %s68 = sphi 0, %s54
    %s72 = sphi 0, %s72
    %s74 = sphi 0, %s72
    %s75 = sphi 0, %s74
    %s89 = sphi 0, %s75
    %s93 = sphi 0, %s93
    %s95 = sphi 0, %s93
    %s96 = sphi 0, %s95
    %s110 = sphi 0, %s96
    %s114 = sphi 0, %s114
    %s116 = sphi 0, %s114
    %s117 = sphi 0, %s116
    %s131 = sphi 0, %s117
    %s135 = sphi 0, %s135
    %s137 = sphi 0, %s135
    %s138 = sphi 0, %s137
    %s152 = sphi 0, %s138
    %s156 = sphi 0, %s156
    %s158 = sphi 0, %s156
    %s159 = sphi 0, %s158
    %s173 = sphi 0, %s159
    %s177 = sphi 0, %s177
    %s179 = sphi 0, %s177
    %s180 = sphi 0, %s179
    %s194 = sphi 0, %s180
    %s198 = sphi 0, %s198
    %s200 = sphi 0, %s198
    %s201 = sphi 0, %s200
    %s215 = sphi 0, %s201
    %s219 = sphi 0, %s219
    %s221 = sphi 0, %s219
    %s222 = sphi 0, %s221
    %s236 = sphi 0, %s222
    %s240 = sphi 0, %s240
    %s242 = sphi 0, %s240
    %s243 = sphi 0, %s242
    %s257 = sphi 0, %s243
    %s261 = sphi 0, %s261
    %s263 = sphi 0, %s261
    %s264 = sphi 0, %s263
    %s278 = sphi 0, %s264
  $region4: #{lstm_model_forward.3} parent=0 // loop_header_branch
    %20 = sbr.rel (%p18) target = $region8
  $region5: #{lstm_model_forward.3} parent=0 // loop_body
    %s22 = ssub.s32 %s17, 1
    %s23 = ssub.s32 %s17, 2
    %s24 = sadd.s32 %s17, 1
    %s25 = ssub.s32 %s17, %s24
    %p26 = scmp.eq.s32.totalorder %s25, 0
    %s28 = sadd.s32 %s27, 1
    %s29 = scalar_select %p26, %s27, %s28
    %p32 = pneg %p26
    %p33 = scmp.eq.s32.totalorder %s17, 1
    %p34 = por %p32, %p33
    %p35 = scmp.ne.s32.totalorder %s27, %s30
    %p36 = scmp.eq.s32.totalorder %s17, 0
    %p37 = por %p35, %p36
    %p38 = scmp.ne.s32.totalorder %s27, %s30
    %p39 = scmp.eq.s32.totalorder %s22, 1
    %p40 = por %p38, %p39
    %p41 = scmp.ne.s32.totalorder %s30, %s31
    %p42 = scmp.eq.s32.totalorder %s22, 0
    %p43 = por %p41, %p42
    %p44 = scmp.ne.s32.totalorder %s30, %s31
    %p45 = scmp.eq.s32.totalorder %s23, 1
    %p46 = por %p44, %p45
    %p48 = scmp.ne.s32.totalorder %s31, %s47
    %p49 = scmp.eq.s32.totalorder %s23, 0
    %p50 = por %p48, %p49
    %s52 = sadd.s32 %s51, 1
    %p55 = scmp.eq.s32.totalorder %s17, 1
    %p56 = scmp.ne.s32.totalorder %s51, %s53
    %p57 = scmp.eq.s32.totalorder %s17, 0
    %p58 = por %p56, %p57
    %p59 = scmp.ne.s32.totalorder %s51, %s53
    %p60 = scmp.eq.s32.totalorder %s22, 1
    %p61 = por %p59, %p60
    %p62 = scmp.ne.s32.totalorder %s53, %s54
    %p63 = scmp.eq.s32.totalorder %s22, 0
    %p64 = por %p62, %p63
    %p65 = scmp.ne.s32.totalorder %s53, %s54
    %p66 = scmp.eq.s32.totalorder %s23, 1
    %p67 = por %p65, %p66
    %p69 = scmp.ne.s32.totalorder %s54, %s68
    %p70 = scmp.eq.s32.totalorder %s23, 0
    %p71 = por %p69, %p70
    %s73 = sadd.s32 %s72, 1
    %p76 = scmp.eq.s32.totalorder %s17, 1
    %p77 = scmp.ne.s32.totalorder %s72, %s74
    %p78 = scmp.eq.s32.totalorder %s17, 0
    %p79 = por %p77, %p78
    %p80 = scmp.ne.s32.totalorder %s72, %s74
    %p81 = scmp.eq.s32.totalorder %s22, 1
    %p82 = por %p80, %p81
    %p83 = scmp.ne.s32.totalorder %s74, %s75
    %p84 = scmp.eq.s32.totalorder %s22, 0
    %p85 = por %p83, %p84
    %p86 = scmp.ne.s32.totalorder %s74, %s75
    %p87 = scmp.eq.s32.totalorder %s23, 1
    %p88 = por %p86, %p87
    %p90 = scmp.ne.s32.totalorder %s75, %s89
    %p91 = scmp.eq.s32.totalorder %s23, 0
    %p92 = por %p90, %p91
    %s94 = sadd.s32 %s93, 1
    %p97 = scmp.eq.s32.totalorder %s17, 1
    %p98 = scmp.ne.s32.totalorder %s93, %s95
    %p99 = scmp.eq.s32.totalorder %s17, 0
    %p100 = por %p98, %p99
    %p101 = scmp.ne.s32.totalorder %s93, %s95
    %p102 = scmp.eq.s32.totalorder %s22, 1
    %p103 = por %p101, %p102
    %p104 = scmp.ne.s32.totalorder %s95, %s96
    %p105 = scmp.eq.s32.totalorder %s22, 0
    %p106 = por %p104, %p105
    %p107 = scmp.ne.s32.totalorder %s95, %s96
    %p108 = scmp.eq.s32.totalorder %s23, 1
    %p109 = por %p107, %p108
    %p111 = scmp.ne.s32.totalorder %s96, %s110
    %p112 = scmp.eq.s32.totalorder %s23, 0
    %p113 = por %p111, %p112
    %s115 = sadd.s32 %s114, 1
    %p118 = scmp.eq.s32.totalorder %s17, 1
    %p119 = scmp.ne.s32.totalorder %s114, %s116
    %p120 = scmp.eq.s32.totalorder %s17, 0
    %p121 = por %p119, %p120
    %p122 = scmp.ne.s32.totalorder %s114, %s116
    %p123 = scmp.eq.s32.totalorder %s22, 1
    %p124 = por %p122, %p123
    %p125 = scmp.ne.s32.totalorder %s116, %s117
    %p126 = scmp.eq.s32.totalorder %s22, 0
    %p127 = por %p125, %p126
    %p128 = scmp.ne.s32.totalorder %s116, %s117
    %p129 = scmp.eq.s32.totalorder %s23, 1
    %p130 = por %p128, %p129
    %p132 = scmp.ne.s32.totalorder %s117, %s131
    %p133 = scmp.eq.s32.totalorder %s23, 0
    %p134 = por %p132, %p133
    %s136 = sadd.s32 %s135, 1
    %p139 = scmp.eq.s32.totalorder %s17, 1
    %p140 = scmp.ne.s32.totalorder %s135, %s137
    %p141 = scmp.eq.s32.totalorder %s17, 0
    %p142 = por %p140, %p141
    %p143 = scmp.ne.s32.totalorder %s135, %s137
    %p144 = scmp.eq.s32.totalorder %s22, 1
    %p145 = por %p143, %p144
    %p146 = scmp.ne.s32.totalorder %s137, %s138
    %p147 = scmp.eq.s32.totalorder %s22, 0
    %p148 = por %p146, %p147
    %p149 = scmp.ne.s32.totalorder %s137, %s138
    %p150 = scmp.eq.s32.totalorder %s23, 1
    %p151 = por %p149, %p150
    %p153 = scmp.ne.s32.totalorder %s138, %s152
    %p154 = scmp.eq.s32.totalorder %s23, 0
    %p155 = por %p153, %p154
    %s157 = sadd.s32 %s156, 1
    %p160 = scmp.eq.s32.totalorder %s17, 1
    %p161 = scmp.ne.s32.totalorder %s156, %s158
    %p162 = scmp.eq.s32.totalorder %s17, 0
    %p163 = por %p161, %p162
    %p164 = scmp.ne.s32.totalorder %s156, %s158
    %p165 = scmp.eq.s32.totalorder %s22, 1
    %p166 = por %p164, %p165
    %p167 = scmp.ne.s32.totalorder %s158, %s159
    %p168 = scmp.eq.s32.totalorder %s22, 0
    %p169 = por %p167, %p168
    %p170 = scmp.ne.s32.totalorder %s158, %s159
    %p171 = scmp.eq.s32.totalorder %s23, 1
    %p172 = por %p170, %p171
    %p174 = scmp.ne.s32.totalorder %s159, %s173
    %p175 = scmp.eq.s32.totalorder %s23, 0
    %p176 = por %p174, %p175
    %s178 = sadd.s32 %s177, 1
    %p181 = scmp.eq.s32.totalorder %s17, 1
    %p182 = scmp.ne.s32.totalorder %s177, %s179
    %p183 = scmp.eq.s32.totalorder %s17, 0
    %p184 = por %p182, %p183
    %p185 = scmp.ne.s32.totalorder %s177, %s179
    %p186 = scmp.eq.s32.totalorder %s22, 1
    %p187 = por %p185, %p186
    %p188 = scmp.ne.s32.totalorder %s179, %s180
    %p189 = scmp.eq.s32.totalorder %s22, 0
    %p190 = por %p188, %p189
    %p191 = scmp.ne.s32.totalorder %s179, %s180
    %p192 = scmp.eq.s32.totalorder %s23, 1
    %p193 = por %p191, %p192
    %p195 = scmp.ne.s32.totalorder %s180, %s194
    %p196 = scmp.eq.s32.totalorder %s23, 0
    %p197 = por %p195, %p196
    %s199 = sadd.s32 %s198, 1
    %p202 = scmp.eq.s32.totalorder %s17, 1
    %p203 = scmp.ne.s32.totalorder %s198, %s200
    %p204 = scmp.eq.s32.totalorder %s17, 0
    %p205 = por %p203, %p204
    %p206 = scmp.ne.s32.totalorder %s198, %s200
    %p207 = scmp.eq.s32.totalorder %s22, 1
    %p208 = por %p206, %p207
    %p209 = scmp.ne.s32.totalorder %s200, %s201
    %p210 = scmp.eq.s32.totalorder %s22, 0
    %p211 = por %p209, %p210
    %p212 = scmp.ne.s32.totalorder %s200, %s201
    %p213 = scmp.eq.s32.totalorder %s23, 1
    %p214 = por %p212, %p213
    %p216 = scmp.ne.s32.totalorder %s201, %s215
    %p217 = scmp.eq.s32.totalorder %s23, 0
    %p218 = por %p216, %p217
    %s220 = sadd.s32 %s219, 1
    %p223 = scmp.eq.s32.totalorder %s17, 1
    %p224 = scmp.ne.s32.totalorder %s219, %s221
    %p225 = scmp.eq.s32.totalorder %s17, 0
    %p226 = por %p224, %p225
    %p227 = scmp.ne.s32.totalorder %s219, %s221
    %p228 = scmp.eq.s32.totalorder %s22, 1
    %p229 = por %p227, %p228
    %p230 = scmp.ne.s32.totalorder %s221, %s222
    %p231 = scmp.eq.s32.totalorder %s22, 0
    %p232 = por %p230, %p231
    %p233 = scmp.ne.s32.totalorder %s221, %s222
    %p234 = scmp.eq.s32.totalorder %s23, 1
    %p235 = por %p233, %p234
    %p237 = scmp.ne.s32.totalorder %s222, %s236
    %p238 = scmp.eq.s32.totalorder %s23, 0
    %p239 = por %p237, %p238
    %s241 = sadd.s32 %s240, 1
    %p244 = scmp.eq.s32.totalorder %s17, 1
    %p245 = scmp.ne.s32.totalorder %s240, %s242
    %p246 = scmp.eq.s32.totalorder %s17, 0
    %p247 = por %p245, %p246
    %p248 = scmp.ne.s32.totalorder %s240, %s242
    %p249 = scmp.eq.s32.totalorder %s22, 1
    %p250 = por %p248, %p249
    %p251 = scmp.ne.s32.totalorder %s242, %s243
    %p252 = scmp.eq.s32.totalorder %s22, 0
    %p253 = por %p251, %p252
    %p254 = scmp.ne.s32.totalorder %s242, %s243
    %p255 = scmp.eq.s32.totalorder %s23, 1
    %p256 = por %p254, %p255
    %p258 = scmp.ne.s32.totalorder %s243, %s257
    %p259 = scmp.eq.s32.totalorder %s23, 0
    %p260 = por %p258, %p259
    %s262 = sadd.s32 %s261, 1
    %p265 = scmp.eq.s32.totalorder %s17, 1
    %p266 = scmp.ne.s32.totalorder %s261, %s263
    %p267 = scmp.eq.s32.totalorder %s17, 0
    %p268 = por %p266, %p267
    %p269 = scmp.ne.s32.totalorder %s261, %s263
    %p270 = scmp.eq.s32.totalorder %s22, 1
    %p271 = por %p269, %p270
    %p272 = scmp.ne.s32.totalorder %s263, %s264
    %p273 = scmp.eq.s32.totalorder %s22, 0
    %p274 = por %p272, %p273
    %p275 = scmp.ne.s32.totalorder %s263, %s264
    %p276 = scmp.eq.s32.totalorder %s23, 1
    %p277 = por %p275, %p276
    %p279 = scmp.ne.s32.totalorder %s264, %s278
    %p280 = scmp.eq.s32.totalorder %s23, 0
    %p281 = por %p279, %p280
    %p282 = scmp.le.s32.totalorder 1, %s17
    %p283 = scmp.lt.s32.totalorder %s17, 3
    %p284 = pnand %p282, %p283
    %p285 = pneg %p284
    // Predicated region
    $region9: #{lstm_model_forward.3} parent=5 // pred_check
      _
    $region10: #{lstm_model_forward.3} parent=5 // pred_check_branch
      %287 = sbr.rel (%p284) target = $region12
    $region11: #{lstm_model_forward.3} parent=5 // pred_region
      %s288 = ssub.s32 %s17, 1
      // Predicated region
      $region13: #{lstm_model_forward.3} parent=11 // pred_check
        %p289 = pneg %p64
      $region14: #{lstm_model_forward.3} parent=11 // pred_check_branch
        %291 = sbr.rel (%p289) target = $region16
      $region15: #{lstm_model_forward.3} parent=11 // pred_region
        _
      $region16: #{lstm_model_forward.3} parent=11 // pred_fallthru
        _
      // Predicated region
      $region17: #{lstm_model_forward.3} parent=11 // pred_check
        %p292 = pneg %p85
      $region18: #{lstm_model_forward.3} parent=11 // pred_check_branch
        %294 = sbr.rel (%p292) target = $region20
      $region19: #{lstm_model_forward.3} parent=11 // pred_region
        _
      $region20: #{lstm_model_forward.3} parent=11 // pred_fallthru
        _
      // Predicated region
      $region21: #{lstm_model_forward.3} parent=11 // pred_check
        %p295 = pneg %p106
      $region22: #{lstm_model_forward.3} parent=11 // pred_check_branch
        %297 = sbr.rel (%p295) target = $region24
      $region23: #{lstm_model_forward.3} parent=11 // pred_region
        _
      $region24: #{lstm_model_forward.3} parent=11 // pred_fallthru
        _
      // Predicated region
      $region25: #{lstm_model_forward.3} parent=11 // pred_check
        %p298 = pneg %p127
      $region26: #{lstm_model_forward.3} parent=11 // pred_check_branch
        %300 = sbr.rel (%p298) target = $region28
      $region27: #{lstm_model_forward.3} parent=11 // pred_region
        _
      $region28: #{lstm_model_forward.3} parent=11 // pred_fallthru
        _
      // Predicated region
      $region29: #{lstm_model_forward.3} parent=11 // pred_check
        %p301 = pneg %p148
      $region30: #{lstm_model_forward.3} parent=11 // pred_check_branch
        %303 = sbr.rel (%p301) target = $region32
      $region31: #{lstm_model_forward.3} parent=11 // pred_region
        _
      $region32: #{lstm_model_forward.3} parent=11 // pred_fallthru
        _
      // Predicated region
      $region33: #{lstm_model_forward.3} parent=11 // pred_check
        %p304 = pneg %p169
      $region34: #{lstm_model_forward.3} parent=11 // pred_check_branch
        %306 = sbr.rel (%p304) target = $region36
      $region35: #{lstm_model_forward.3} parent=11 // pred_region
        _
      $region36: #{lstm_model_forward.3} parent=11 // pred_fallthru
        _
      // Predicated region
      $region37: #{lstm_model_forward.3} parent=11 // pred_check
        %p307 = pneg %p190
      $region38: #{lstm_model_forward.3} parent=11 // pred_check_branch
        %309 = sbr.rel (%p307) target = $region40
      $region39: #{lstm_model_forward.3} parent=11 // pred_region
        _
      $region40: #{lstm_model_forward.3} parent=11 // pred_fallthru
        _
      // Predicated region
      $region41: #{lstm_model_forward.3} parent=11 // pred_check
        %p310 = pneg %p211
      $region42: #{lstm_model_forward.3} parent=11 // pred_check_branch
        %312 = sbr.rel (%p310) target = $region44
      $region43: #{lstm_model_forward.3} parent=11 // pred_region
        _
      $region44: #{lstm_model_forward.3} parent=11 // pred_fallthru
        _
      // Predicated region
      $region45: #{lstm_model_forward.3} parent=11 // pred_check
        %p313 = pneg %p232
      $region46: #{lstm_model_forward.3} parent=11 // pred_check_branch
        %315 = sbr.rel (%p313) target = $region48
      $region47: #{lstm_model_forward.3} parent=11 // pred_region
        _
      $region48: #{lstm_model_forward.3} parent=11 // pred_fallthru
        _
      // Predicated region
      $region49: #{lstm_model_forward.3} parent=11 // pred_check
        %p316 = pneg %p253
      $region50: #{lstm_model_forward.3} parent=11 // pred_check_branch
        %318 = sbr.rel (%p316) target = $region52
      $region51: #{lstm_model_forward.3} parent=11 // pred_region
        _
      $region52: #{lstm_model_forward.3} parent=11 // pred_fallthru
        _
    $region12: #{lstm_model_forward.3} parent=5 // pred_fallthru
      _
    %p319 = scmp.lt.s32.totalorder %s17, 2
    // Predicated region
    $region53: #{lstm_model_forward.3} parent=5 // pred_check
      %p320 = pneg %p319
    $region54: #{lstm_model_forward.3} parent=5 // pred_check_branch
      %322 = sbr.rel (%p320) target = $region56
    $region55: #{lstm_model_forward.3} parent=5 // pred_region
      // Predicated region
      $region57: #{lstm_model_forward.3} parent=55 // pred_check
        %p323 = pneg %p37
      $region58: #{lstm_model_forward.3} parent=55 // pred_check_branch
        %325 = sbr.rel (%p323) target = $region60
      $region59: #{lstm_model_forward.3} parent=55 // pred_region
        %s326 = smul.u32 4, %s17
        %p327 = scmp.lt.s32.totalorder %s326, 7
        %s328 = scalar_select %p327, %s326, 7
        %s329 = smul.addr %s328, 2
        %s330 = scalar_lea.vmem %s0, %s329
        %s331 = smul.u32 4, %s17
      $region60: #{lstm_model_forward.3} parent=55 // pred_fallthru
        _
    $region56: #{lstm_model_forward.3} parent=5 // pred_fallthru
      _
    %p332 = scmp.le.s32.totalorder 1, %s17
    %p333 = scmp.lt.s32.totalorder %s17, 3
    %p334 = pnand %p332, %p333
    %p335 = pneg %p334
    // Predicated region
    $region61: #{lstm_model_forward.3} parent=5 // pred_check
      _
    $region62: #{lstm_model_forward.3} parent=5 // pred_check_branch
      %337 = sbr.rel (%p334) target = $region64
    $region63: #{lstm_model_forward.3} parent=5 // pred_region
      %s338 = ssub.s32 %s17, 1
      %s339 = smul.u32 4, %s22
      %p340 = scmp.lt.s32.totalorder %s339, 7
      %s341 = scalar_select %p340, %s339, 7
      %s342 = smul.addr %s341, 2
      %s343 = scalar_lea.vmem %s0, %s342
      %p344 = pneg %p43
      %p345 = pneg %p40
      %p346 = pneg %p64
      %p347 = pneg %p61
      %p348 = pneg %p85
      %p349 = pneg %p82
      %p350 = pneg %p106
      %p351 = pneg %p103
      %p352 = pneg %p127
      %p353 = pneg %p124
      %p354 = pneg %p148
      %p355 = pneg %p145
      %p356 = pneg %p169
      %p357 = pneg %p166
      %p358 = pneg %p190
      %p359 = pneg %p187
      %p360 = pneg %p211
      %p361 = pneg %p208
      %p362 = pneg %p232
      %p363 = pneg %p229
      %p364 = pneg %p253
      %p365 = pneg %p250
      %p366 = pneg %p274
      %p367 = pneg %p271
      %s368 = smul.u32 4, %s22
      %p369 = scmp.lt.s32.totalorder %s368, 7
      %s370 = scalar_select %p369, %s368, 7
      %s371 = smul.addr %s370, 2
      %s372 = scalar_lea.vmem %s0, %s371
      %s373 = smul.u32 4, %s22
      %p375 = scmp.eq.s32.totalorder %s22, 0
      // Predicated region
      $region65: #{lstm_model_forward.3} parent=63 // pred_check
        %p376 = pneg %p375
      $region66: #{lstm_model_forward.3} parent=63 // pred_check_branch
        %378 = sbr.rel (%p376) target = $region68
      $region67: #{lstm_model_forward.3} parent=63 // pred_region
        %vm379 = vcmask 254976
        %380 = vst.msk [vmem:[#allocation3] sm:$0x3] %vm379, 0
        %vm381 = vcmask 257024
        %382 = vst.msk [vmem:[#allocation4] sm:$0xf] %vm381, 0.0
      $region68: #{lstm_model_forward.3} parent=63 // pred_fallthru
        _
      %v383 = vld [vmem:[%s372] sm:$0x3]
      %v384 = vld [vmem:[%s372 + $0x2] sm:$0x3]
      %v385 = vld [vmem:[%s372 + $0x4] sm:$0x3]
      %v386 = vld [vmem:[%s372 + $0x6] sm:$0x3]
      %v387 = vld [vmem:[%s1] sm:$0xf]
      %v388 = vld [vmem:[%s1 + $0x4] sm:$0xf]
      %v389 = vld [vmem:[%s1 + $0x8] sm:$0xf]
      %v390 = vld [vmem:[%s1 + $0xc] sm:$0xf]
      %v391 = vld [vmem:[%s1 + $0x10] sm:$0xf]
      %v392 = vld [vmem:[%s1 + $0x14] sm:$0xf]
      %v393 = vld [vmem:[%s1 + $0x18] sm:$0xf]
      %v394 = vld [vmem:[%s1 + $0x1c] sm:$0xf]
      %v395 = vld [vmem:[%s3] sm:$0x1]
      %v397 = vlaneseq
      %v398 = vshrl.u32 %v397, 7
      %v399 = vsub.s32 0, %v398
      %v400 = vrot.slane %v395, %v399
      %v406 = vcombine.low %v383, %v384
      %v407 = vcombine.low %v385, %v386
      %v409 = vunpack.c.l.s4 1983009808
      %v410 = vunpack.c.0.s8 %v409
      %v411 = vlaneseq
      %v412 = vshrl.u32 %v411, 7
      %v413 = vsub.s32 %v410, %v412
      %v414 = vrot.slane %v406, %v413
      %v416 = vunpack.c.l.s4 1983009808
      %v417 = vunpack.c.0.s8 %v416
      %v418 = vlaneseq
      %v419 = vshrl.u32 %v418, 7
      %v420 = vsub.s32 %v417, %v419
      %v421 = vrot.slane %v407, %v420
      %v422 = vcombine.low %v414, %v421
      %v431 = vunpack.c.l.b16 %v387
      %v432 = vunpack.c.l.b16 %v388
      %v433 = vunpack.c.l.b16 %v389
      %v434 = vunpack.c.l.b16 %v390
      %v435 = vunpack.c.l.b16 %v391
      %v436 = vunpack.c.l.b16 %v392
      %v437 = vunpack.c.l.b16 %v393
      %v438 = vunpack.c.l.b16 %v394
      %v439 = vpack.c.b16 %v432, %v431
      %v440 = vpack.c.b16 %v434, %v433
      %v441 = vpack.c.b16 %v436, %v435
      %v442 = vpack.c.b16 %v438, %v437
      %vm447 = vcmask 523264
      %v449 = vsel %vm447, %v422, 0
      %451 = vmatprep.subr.bf16.mxu0 0
      %452 = vmatpush1.bf16.msra.mxu0 %v439
      %453 = vmatprep.subr.bf16.mxu0 0
      %454 = vmatpush1.bf16.msra.mxu0 %v440
      %455 = vmatprep.subr.bf16.mxu0 0
      %456 = vmatpush1.bf16.msra.mxu0 %v441
      %457 = vmatprep.subr.bf16.mxu0 0
      %458 = vmatpush1.bf16.msra.mxu0 %v442
      %459 = vmatprep.subr.bf16.mxu0 0
      %460 = vmatpush1.bf16.msra.mxu0 0
      %461 = vmatprep.subr.bf16.mxu0 0
      %462 = vmatpush1.bf16.msra.mxu0 0
      %463 = vmatprep.subr.bf16.mxu0 0
      %464 = vmatpush1.bf16.msra.mxu0 0
      %465 = vmatprep.subr.bf16.mxu0 0
      %466 = vmatpush1.bf16.msra.mxu0 0
      %467 = vmatprep.subr.bf16.mxu0 0
      %468 = vmatpush1.bf16.msra.mxu0 0
      %469 = vmatprep.subr.bf16.mxu0 0
      %470 = vmatpush1.bf16.msra.mxu0 0
      %471 = vmatprep.subr.bf16.mxu0 0
      %472 = vmatpush1.bf16.msra.mxu0 0
      %473 = vmatprep.subr.bf16.mxu0 0
      %474 = vmatpush1.bf16.msra.mxu0 0
      %475 = vmatprep.subr.bf16.mxu0 0
      %476 = vmatpush1.bf16.msra.mxu0 0
      %477 = vmatprep.subr.bf16.mxu0 0
      %478 = vmatpush1.bf16.msra.mxu0 0
      %479 = vmatprep.subr.bf16.mxu0 0
      %480 = vmatpush1.bf16.msra.mxu0 0
      %481 = vmatprep.subr.bf16.mxu0 0
      %482 = vmatpush1.bf16.msra.mxu0 0
      %483 = vmatprep.mubr.bf16.mxu0 0
      %484 = vmatmul.mubr.bf16.gmra.mrb[0].mxu0 %v449
      %v485 = vpop.f32.mrb[0].mxu0
      %v486 = vadd.f32 %v400, %v485
      %v487 = vpop.f32.mrb[0].mxu0
      %v488 = vpop.f32.mrb[0].mxu0
      %v489 = vadd.f32 %v400, %v488
      %v490 = vpop.f32.mrb[0].mxu0
      %491 = vdwg.mxu0
      %492 = vst [vmem:[#allocation2] sm:$0xff] %v486
      %493 = vst [vmem:[#allocation2 + $0x8] sm:$0xff] %v489
      loop: start=0, step=1, limit=2
      $region69: #{lstm_model_forward.3} parent=63 // loop_pre_header
        _
      $region70: #{lstm_model_forward.3} parent=63 // loop_header
        %s495 = sphi 0, %s499
        %p496 = scmp.ge.s32.totalorder %s495, 2
      $region71: #{lstm_model_forward.3} parent=63 // loop_header_branch
        %498 = sbr.rel (%p496) target = $region75
      $region72: #{lstm_model_forward.3} parent=63 // loop_body
        %s500 = smul.u32 %s495, 8
        %s501 = scalar_lea.vmem [#allocation2], %s500
        %v502 = vld [vmem:[%s501] sm:$0xf]
        %v503 = vld [vmem:[#allocation3] sm:$0x3]
        %v504 = vld [vmem:[%s2] sm:$0xf]
        %v505 = vld [vmem:[%s2 + $0x4] sm:$0xf]
        %v506 = vld [vmem:[%s2 + $0x8] sm:$0xf]
        %v507 = vld [vmem:[%s2 + $0xc] sm:$0xf]
        %v512 = vunpack.c.l.b16 %v504
        %v513 = vunpack.c.l.b16 %v505
        %v514 = vunpack.c.l.b16 %v506
        %v515 = vunpack.c.l.b16 %v507
        %v516 = vpack.c.b16 %v513, %v512
        %v517 = vpack.c.b16 %v515, %v514
        %vm520 = vcmask 261120
        %v522 = vsel %vm520, %v503, 0
        %524 = vmatprep.subr.bf16.mxu0 0
        %525 = vmatpush1.bf16.msra.mxu0 %v516
        %526 = vmatprep.subr.bf16.mxu0 0
        %527 = vmatpush1.bf16.msra.mxu0 %v517
        %528 = vmatprep.subr.bf16.mxu0 0
        %529 = vmatpush1.bf16.msra.mxu0 0
        %530 = vmatprep.subr.bf16.mxu0 0
        %531 = vmatpush1.bf16.msra.mxu0 0
        %532 = vmatprep.subr.bf16.mxu0 0
        %533 = vmatpush1.bf16.msra.mxu0 0
        %534 = vmatprep.subr.bf16.mxu0 0
        %535 = vmatpush1.bf16.msra.mxu0 0
        %536 = vmatprep.subr.bf16.mxu0 0
        %537 = vmatpush1.bf16.msra.mxu0 0
        %538 = vmatprep.subr.bf16.mxu0 0
        %539 = vmatpush1.bf16.msra.mxu0 0
        %540 = vmatprep.subr.bf16.mxu0 0
        %541 = vmatpush1.bf16.msra.mxu0 0
        %542 = vmatprep.subr.bf16.mxu0 0
        %543 = vmatpush1.bf16.msra.mxu0 0
        %544 = vmatprep.subr.bf16.mxu0 0
        %545 = vmatpush1.bf16.msra.mxu0 0
        %546 = vmatprep.subr.bf16.mxu0 0
        %547 = vmatpush1.bf16.msra.mxu0 0
        %548 = vmatprep.subr.bf16.mxu0 0
        %549 = vmatpush1.bf16.msra.mxu0 0
        %550 = vmatprep.subr.bf16.mxu0 0
        %551 = vmatpush1.bf16.msra.mxu0 0
        %552 = vmatprep.subr.bf16.mxu0 0
        %553 = vmatpush1.bf16.msra.mxu0 0
        %554 = vmatprep.subr.bf16.mxu0 0
        %555 = vmatpush1.bf16.msra.mxu0 0
        %556 = vmatprep.mubr.bf16.mxu0 0
        %557 = vmatmul.mubr.bf16.gmra.mrb[0].mxu0 %v522
        %v558 = vpop.f32.mrb[0].mxu0
        %v559 = vadd.f32 0.0, %v558
        %v560 = vpop.f32.mrb[0].mxu0
        %v561 = vpop.f32.mrb[0].mxu0
        %v562 = vpop.f32.mrb[0].mxu0
        %563 = vdwg.mxu0
        %v564 = vadd.f32 %v502, %v559
        %v565 = vld [vmem:[#allocation4] sm:$0xf]
        %v566 = vxor.u32 %v564, 2147483648
        %v567 = vmul.f32 %v566, 1.442695
        %v568 = vpow.pop %v567
        %v569 = vadd.f32 %v568, 1.0
        %v570 = vrcp.pop %v569
        %v571 = vmul.f32 1.0, %v570
        %v572 = vtanh.pop %v564
        %574 = vrot.lane.b32.xlu0 %v565, 32
        %v575 = vpop.permute.xlu0 %574
        %v577 = vmul.f32 %v571, %v575
        %579 = vrot.lane.b32.xlu0 %v572, 64
        %v580 = vpop.permute.xlu0 %579
        %v582 = vmul.f32 %v571, %v580
        %584 = vrot.lane.b32.xlu0 %v582, 32
        %v585 = vpop.permute.xlu0 %584
        %v587 = vadd.f32 %v577, %v585
        %v588 = vtanh.pop %v587
        %590 = vrot.lane.b32.xlu0 %v588, 64
        %v591 = vpop.permute.xlu0 %590
        %v593 = vmul.f32 %v571, %v591
        %v594 = vpack.c.bf16 %v593, %v593
        %v597 = vunpack.c.l.s4 1983009808
        %v598 = vunpack.c.0.s8 %v597
        %v599 = vlaneseq
        %v600 = vshrl.u32 %v599, 7
        %v601 = vsub.s32 %v598, %v600
        %v602 = vrot.slane %v594, %v601
        %603 = vrot.lane.b32.xlu0 %v602, 32
        %v604 = vpop.permute.xlu0 %603
        %vm606 = vcmask 254976
        %607 = vst.msk [vmem:[#allocation3] sm:$0x3] %vm606, %v604
        %609 = vrot.lane.b32.xlu0 %v587, 96
        %v610 = vpop.permute.xlu0 %609
        %vm612 = vcmask 257024
        %613 = vst.msk [vmem:[#allocation4] sm:$0xf] %vm612, %v610
        %s614 = smul.u32 %s495, 2
        %s615 = sadd.s32 %s614, 1
        %s616 = smul.u32 %s615, 4
        %s617 = scalar_lea.vmem [#allocation2], %s616
        %v618 = vld [vmem:[%s617] sm:$0xf]
        %v619 = vld [vmem:[#allocation3] sm:$0x3]
        %v620 = vld [vmem:[%s2] sm:$0xf]
        %v621 = vld [vmem:[%s2 + $0x4] sm:$0xf]
        %v622 = vld [vmem:[%s2 + $0x8] sm:$0xf]
        %v623 = vld [vmem:[%s2 + $0xc] sm:$0xf]
        %v628 = vunpack.c.l.b16 %v620
        %v629 = vunpack.c.l.b16 %v621
        %v630 = vunpack.c.l.b16 %v622
        %v631 = vunpack.c.l.b16 %v623
        %v632 = vpack.c.b16 %v629, %v628
        %v633 = vpack.c.b16 %v631, %v630
        %v637 = vsel %vm520, %v619, 0
        %639 = vmatprep.subr.bf16.mxu0 0
        %640 = vmatpush1.bf16.msra.mxu0 %v632
        %641 = vmatprep.subr.bf16.mxu0 0
        %642 = vmatpush1.bf16.msra.mxu0 %v633
        %643 = vmatprep.subr.bf16.mxu0 0
        %644 = vmatpush1.bf16.msra.mxu0 0
        %645 = vmatprep.subr.bf16.mxu0 0
        %646 = vmatpush1.bf16.msra.mxu0 0
        %647 = vmatprep.subr.bf16.mxu0 0
        %648 = vmatpush1.bf16.msra.mxu0 0
        %649 = vmatprep.subr.bf16.mxu0 0
        %650 = vmatpush1.bf16.msra.mxu0 0
        %651 = vmatprep.subr.bf16.mxu0 0
        %652 = vmatpush1.bf16.msra.mxu0 0
        %653 = vmatprep.subr.bf16.mxu0 0
        %654 = vmatpush1.bf16.msra.mxu0 0
        %655 = vmatprep.subr.bf16.mxu0 0
        %656 = vmatpush1.bf16.msra.mxu0 0
        %657 = vmatprep.subr.bf16.mxu0 0
        %658 = vmatpush1.bf16.msra.mxu0 0
        %659 = vmatprep.subr.bf16.mxu0 0
        %660 = vmatpush1.bf16.msra.mxu0 0
        %661 = vmatprep.subr.bf16.mxu0 0
        %662 = vmatpush1.bf16.msra.mxu0 0
        %663 = vmatprep.subr.bf16.mxu0 0
        %664 = vmatpush1.bf16.msra.mxu0 0
        %665 = vmatprep.subr.bf16.mxu0 0
        %666 = vmatpush1.bf16.msra.mxu0 0
        %667 = vmatprep.subr.bf16.mxu0 0
        %668 = vmatpush1.bf16.msra.mxu0 0
        %669 = vmatprep.subr.bf16.mxu0 0
        %670 = vmatpush1.bf16.msra.mxu0 0
        %671 = vmatprep.mubr.bf16.mxu0 0
        %672 = vmatmul.mubr.bf16.gmra.mrb[0].mxu0 %v637
        %v673 = vpop.f32.mrb[0].mxu0
        %v674 = vadd.f32 0.0, %v673
        %v675 = vpop.f32.mrb[0].mxu0
        %v676 = vpop.f32.mrb[0].mxu0
        %v677 = vpop.f32.mrb[0].mxu0
        %678 = vdwg.mxu0
        %v679 = vadd.f32 %v618, %v674
        %v680 = vld [vmem:[#allocation4] sm:$0xf]
        %v681 = vxor.u32 %v679, 2147483648
        %v682 = vmul.f32 %v681, 1.442695
        %v683 = vpow.pop %v682
        %v684 = vadd.f32 %v683, 1.0
        %v685 = vrcp.pop %v684
        %v686 = vmul.f32 1.0, %v685
        %v687 = vtanh.pop %v679
        %689 = vrot.lane.b32.xlu0 %v680, 32
        %v690 = vpop.permute.xlu0 %689
        %v692 = vmul.f32 %v686, %v690
        %694 = vrot.lane.b32.xlu0 %v687, 64
        %v695 = vpop.permute.xlu0 %694
        %v697 = vmul.f32 %v686, %v695
        %699 = vrot.lane.b32.xlu0 %v697, 32
        %v700 = vpop.permute.xlu0 %699
        %v702 = vadd.f32 %v692, %v700
        %v703 = vtanh.pop %v702
        %705 = vrot.lane.b32.xlu0 %v703, 64
        %v706 = vpop.permute.xlu0 %705
        %v708 = vmul.f32 %v686, %v706
        %v709 = vpack.c.bf16 %v708, %v708
        %v712 = vunpack.c.l.s4 1983009808
        %v713 = vunpack.c.0.s8 %v712
        %v714 = vlaneseq
        %v715 = vshrl.u32 %v714, 7
        %v716 = vsub.s32 %v713, %v715
        %v717 = vrot.slane %v709, %v716
        %718 = vrot.lane.b32.xlu0 %v717, 32
        %v719 = vpop.permute.xlu0 %718
        %721 = vst.msk [vmem:[#allocation3] sm:$0x3] %vm606, %v719
        %723 = vrot.lane.b32.xlu0 %v702, 96
        %v724 = vpop.permute.xlu0 %723
        %726 = vst.msk [vmem:[#allocation4] sm:$0xf] %vm612, %v724
      $region73: #{lstm_model_forward.3} parent=63 // loop_footer
        %s499 = sadd.s32 1, %s495
      $region74: #{lstm_model_forward.3} parent=63 // loop_footer_branch
        %494 = sbr.rel target = $region70
      $region75: #{lstm_model_forward.3} parent=63 // loop_exit
        _
      %p727 = scmp.eq.s32.totalorder %s22, 1
      // Predicated region
      $region76: #{lstm_model_forward.3} parent=63 // pred_check
        %p728 = pneg %p727
      $region77: #{lstm_model_forward.3} parent=63 // pred_check_branch
        %730 = sbr.rel (%p728) target = $region79
      $region78: #{lstm_model_forward.3} parent=63 // pred_region
        %s731 = scalar_lea.vmem %s372, 6
        %v732 = vld [vmem:[%s731] sm:$0x3]
        %v733 = vld [vmem:[%s4] sm:$0xf]
        %v734 = vld [vmem:[%s4 + $0x4] sm:$0xf]
        %v735 = vld [vmem:[%s4 + $0x8] sm:$0xf]
        %v736 = vld [vmem:[%s4 + $0xc] sm:$0xf]
        %v737 = vld [vmem:[%s4 + $0x10] sm:$0xf]
        %v738 = vld [vmem:[%s4 + $0x14] sm:$0xf]
        %v739 = vld [vmem:[%s4 + $0x18] sm:$0xf]
        %v740 = vld [vmem:[%s4 + $0x1c] sm:$0xf]
        %v741 = vld [vmem:[%s5] sm:$0x1]
        %v743 = vlaneseq
        %v744 = vshrl.u32 %v743, 7
        %v745 = vsub.s32 0, %v744
        %v746 = vrot.slane %v741, %v745
        %v756 = vunpack.c.l.b16 %v733
        %v757 = vunpack.c.l.b16 %v734
        %v758 = vunpack.c.l.b16 %v735
        %v759 = vunpack.c.l.b16 %v736
        %v760 = vunpack.c.l.b16 %v737
        %v761 = vunpack.c.l.b16 %v738
        %v762 = vunpack.c.l.b16 %v739
        %v763 = vunpack.c.l.b16 %v740
        %v764 = vpack.c.b16 %v757, %v756
        %v765 = vpack.c.b16 %v759, %v758
        %v766 = vpack.c.b16 %v761, %v760
        %v767 = vpack.c.b16 %v763, %v762
        %v773 = vsel %vm447, %v732, 0
        %775 = vmatprep.subr.bf16.mxu0 0
        %776 = vmatpush1.bf16.msra.mxu0 %v764
        %777 = vmatprep.subr.bf16.mxu0 0
        %778 = vmatpush1.bf16.msra.mxu0 %v765
        %779 = vmatprep.subr.bf16.mxu0 0
        %780 = vmatpush1.bf16.msra.mxu0 %v766
        %781 = vmatprep.subr.bf16.mxu0 0
        %782 = vmatpush1.bf16.msra.mxu0 %v767
        %783 = vmatprep.subr.bf16.mxu0 0
        %784 = vmatpush1.bf16.msra.mxu0 0
        %785 = vmatprep.subr.bf16.mxu0 0
        %786 = vmatpush1.bf16.msra.mxu0 0
        %787 = vmatprep.subr.bf16.mxu0 0
        %788 = vmatpush1.bf16.msra.mxu0 0
        %789 = vmatprep.subr.bf16.mxu0 0
        %790 = vmatpush1.bf16.msra.mxu0 0
        %791 = vmatprep.subr.bf16.mxu0 0
        %792 = vmatpush1.bf16.msra.mxu0 0
        %793 = vmatprep.subr.bf16.mxu0 0
        %794 = vmatpush1.bf16.msra.mxu0 0
        %795 = vmatprep.subr.bf16.mxu0 0
        %796 = vmatpush1.bf16.msra.mxu0 0
        %797 = vmatprep.subr.bf16.mxu0 0
        %798 = vmatpush1.bf16.msra.mxu0 0
        %799 = vmatprep.subr.bf16.mxu0 0
        %800 = vmatpush1.bf16.msra.mxu0 0
        %801 = vmatprep.subr.bf16.mxu0 0
        %802 = vmatpush1.bf16.msra.mxu0 0
        %803 = vmatprep.subr.bf16.mxu0 0
        %804 = vmatpush1.bf16.msra.mxu0 0
        %805 = vmatprep.subr.bf16.mxu0 0
        %806 = vmatpush1.bf16.msra.mxu0 0
        %807 = vmatprep.mubr.bf16.mxu0 0
        %808 = vmatmul.mubr.bf16.gmra.mrb[0].mxu0 %v773
        %v809 = vpop.f32.mrb[0].mxu0
        %v810 = vadd.f32 %v746, %v809
        %v811 = vpop.f32.mrb[0].mxu0
        %v812 = vpop.f32.mrb[0].mxu0
        %v813 = vpop.f32.mrb[0].mxu0
        %814 = vdwg.mxu0
        %v815 = vxor.u32 %v810, 2147483648
        %v816 = vmul.f32 %v815, 1.442695
        %v817 = vpow.pop %v816
        %v818 = vadd.f32 %v817, 1.0
        %v819 = vrcp.pop %v818
        %v820 = vmul.f32 1.0, %v819
        %v821 = vtanh.pop %v810
        %v822 = vmul.f32 %v820, 0.0
        %824 = vrot.lane.b32.xlu0 %v821, 64
        %v825 = vpop.permute.xlu0 %824
        %v827 = vmul.f32 %v820, %v825
        %829 = vrot.lane.b32.xlu0 %v827, 32
        %v830 = vpop.permute.xlu0 %829
        %v832 = vadd.f32 %v822, %v830
        %v833 = vtanh.pop %v832
        %835 = vrot.lane.b32.xlu0 %v833, 64
        %v836 = vpop.permute.xlu0 %835
        %v838 = vmul.f32 %v820, %v836
        %v839 = vld [vmem:[#allocation3] sm:$0x3]
        %v840 = vld [vmem:[%s6] sm:$0xf]
        %v841 = vld [vmem:[%s6 + $0x4] sm:$0xf]
        %v842 = vld [vmem:[%s6 + $0x8] sm:$0xf]
        %v843 = vld [vmem:[%s6 + $0xc] sm:$0xf]
        %v844 = vpack.c.bf16 %v838, %v838
        %v845 = vld [vmem:[%s7] sm:$0xf]
        %v846 = vld [vmem:[%s7 + $0x4] sm:$0xf]
        %v847 = vld [vmem:[%s7 + $0x8] sm:$0xf]
        %v848 = vld [vmem:[%s7 + $0xc] sm:$0xf]
        %850 = vrot.lane.b32.xlu0 %v844, 32
        %v851 = vpop.permute.xlu0 %850
        %v856 = vunpack.c.l.b16 %v845
        %v857 = vunpack.c.l.b16 %v846
        %v858 = vunpack.c.l.b16 %v847
        %v859 = vunpack.c.l.b16 %v848
        %v860 = vpack.c.b16 %v857, %v856
        %v861 = vpack.c.b16 %v859, %v858
        %vm864 = vcmask 261120
        %v866 = vsel %vm864, %v851, 0
        %868 = vmatprep.subr.bf16.mxu0 0
        %869 = vmatpush1.bf16.msra.mxu0 %v860
        %870 = vmatprep.subr.bf16.mxu0 0
        %871 = vmatpush1.bf16.msra.mxu0 %v861
        %872 = vmatprep.subr.bf16.mxu0 0
        %873 = vmatpush1.bf16.msra.mxu0 0
        %874 = vmatprep.subr.bf16.mxu0 0
        %875 = vmatpush1.bf16.msra.mxu0 0
        %876 = vmatprep.subr.bf16.mxu0 0
        %877 = vmatpush1.bf16.msra.mxu0 0
        %878 = vmatprep.subr.bf16.mxu0 0
        %879 = vmatpush1.bf16.msra.mxu0 0
        %880 = vmatprep.subr.bf16.mxu0 0
        %881 = vmatpush1.bf16.msra.mxu0 0
        %882 = vmatprep.subr.bf16.mxu0 0
        %883 = vmatpush1.bf16.msra.mxu0 0
        %884 = vmatprep.subr.bf16.mxu0 0
        %885 = vmatpush1.bf16.msra.mxu0 0
        %886 = vmatprep.subr.bf16.mxu0 0
        %887 = vmatpush1.bf16.msra.mxu0 0
        %888 = vmatprep.subr.bf16.mxu0 0
        %889 = vmatpush1.bf16.msra.mxu0 0
        %890 = vmatprep.subr.bf16.mxu0 0
        %891 = vmatpush1.bf16.msra.mxu0 0
        %892 = vmatprep.subr.bf16.mxu0 0
        %893 = vmatpush1.bf16.msra.mxu0 0
        %894 = vmatprep.subr.bf16.mxu0 0
        %895 = vmatpush1.bf16.msra.mxu0 0
        %896 = vmatprep.subr.bf16.mxu0 0
        %897 = vmatpush1.bf16.msra.mxu0 0
        %898 = vmatprep.subr.bf16.mxu0 0
        %899 = vmatpush1.bf16.msra.mxu0 0
        %900 = vmatprep.mubr.bf16.mxu0 0
        %901 = vmatmul.mubr.bf16.gmra.mrb[0].mxu0 %v866
        %v902 = vpop.f32.mrb[0].mxu0
        %v903 = vadd.f32 0.0, %v902
        %v904 = vpop.f32.mrb[0].mxu0
        %v905 = vpop.f32.mrb[0].mxu0
        %v906 = vpop.f32.mrb[0].mxu0
        %907 = vdwg.mxu0
        %v912 = vunpack.c.l.b16 %v840
        %v913 = vunpack.c.l.b16 %v841
        %v914 = vunpack.c.l.b16 %v842
        %v915 = vunpack.c.l.b16 %v843
        %v916 = vpack.c.b16 %v913, %v912
        %v917 = vpack.c.b16 %v915, %v914
        %v921 = vsel %vm864, %v839, 0
        %923 = vmatprep.subr.bf16.mxu0 0
        %924 = vmatpush1.bf16.msra.mxu0 %v916
        %925 = vmatprep.subr.bf16.mxu0 0
        %926 = vmatpush1.bf16.msra.mxu0 %v917
        %927 = vmatprep.subr.bf16.mxu0 0
        %928 = vmatpush1.bf16.msra.mxu0 0
        %929 = vmatprep.subr.bf16.mxu0 0
        %930 = vmatpush1.bf16.msra.mxu0 0
        %931 = vmatprep.subr.bf16.mxu0 0
        %932 = vmatpush1.bf16.msra.mxu0 0
        %933 = vmatprep.subr.bf16.mxu0 0
        %934 = vmatpush1.bf16.msra.mxu0 0
        %935 = vmatprep.subr.bf16.mxu0 0
        %936 = vmatpush1.bf16.msra.mxu0 0
        %937 = vmatprep.subr.bf16.mxu0 0
        %938 = vmatpush1.bf16.msra.mxu0 0
        %939 = vmatprep.subr.bf16.mxu0 0
        %940 = vmatpush1.bf16.msra.mxu0 0
        %941 = vmatprep.subr.bf16.mxu0 0
        %942 = vmatpush1.bf16.msra.mxu0 0
        %943 = vmatprep.subr.bf16.mxu0 0
        %944 = vmatpush1.bf16.msra.mxu0 0
        %945 = vmatprep.subr.bf16.mxu0 0
        %946 = vmatpush1.bf16.msra.mxu0 0
        %947 = vmatprep.subr.bf16.mxu0 0
        %948 = vmatpush1.bf16.msra.mxu0 0
        %949 = vmatprep.subr.bf16.mxu0 0
        %950 = vmatpush1.bf16.msra.mxu0 0
        %951 = vmatprep.subr.bf16.mxu0 0
        %952 = vmatpush1.bf16.msra.mxu0 0
        %953 = vmatprep.subr.bf16.mxu0 0
        %954 = vmatpush1.bf16.msra.mxu0 0
        %955 = vmatprep.mubr.bf16.mxu0 0
        %956 = vmatmul.mubr.bf16.gmra.mrb[0].mxu0 %v921
        %v957 = vpop.f32.mrb[0].mxu0
        %v958 = vadd.f32 %v903, %v957
        %v959 = vpop.f32.mrb[0].mxu0
        %v960 = vpop.f32.mrb[0].mxu0
        %v961 = vpop.f32.mrb[0].mxu0
        %962 = vdwg.mxu0
        %v963 = vld [vmem:[%s8] sm:$0x1]
        %v965 = vlaneseq
        %v966 = vshrl.u32 %v965, 7
        %v967 = vsub.s32 0, %v966
        %v968 = vrot.slane %v963, %v967
        %v970 = vadd.f32 %v958, %v968
        %v971 = vpack.c.bf16 %v970, %v970
        %v972 = vld [vmem:[%s9] sm:$0xf]
        %v973 = vld [vmem:[%s9 + $0x4] sm:$0xf]
        %v974 = vld [vmem:[%s9 + $0x8] sm:$0xf]
        %v975 = vld [vmem:[%s9 + $0xc] sm:$0xf]
        %v976 = vld [vmem:[%s10] sm:$0x1]
        %v978 = vlaneseq
        %v979 = vshrl.u32 %v978, 7
        %v980 = vsub.s32 0, %v979
        %v981 = vrot.slane %v976, %v980
        %v987 = vunpack.c.l.b16 %v972
        %v988 = vunpack.c.l.b16 %v973
        %v989 = vunpack.c.l.b16 %v974
        %v990 = vunpack.c.l.b16 %v975
        %v991 = vpack.c.b16 %v988, %v987
        %v992 = vpack.c.b16 %v990, %v989
        %v996 = vsel %vm864, %v971, 0
        %998 = vmatprep.subr.bf16.mxu0 0
        %999 = vmatpush1.bf16.msra.mxu0 %v991
        %1000 = vmatprep.subr.bf16.mxu0 0
        %1001 = vmatpush1.bf16.msra.mxu0 %v992
        %1002 = vmatprep.subr.bf16.mxu0 0
        %1003 = vmatpush1.bf16.msra.mxu0 0
        %1004 = vmatprep.subr.bf16.mxu0 0
        %1005 = vmatpush1.bf16.msra.mxu0 0
        %1006 = vmatprep.subr.bf16.mxu0 0
        %1007 = vmatpush1.bf16.msra.mxu0 0
        %1008 = vmatprep.subr.bf16.mxu0 0
        %1009 = vmatpush1.bf16.msra.mxu0 0
        %1010 = vmatprep.subr.bf16.mxu0 0
        %1011 = vmatpush1.bf16.msra.mxu0 0
        %1012 = vmatprep.subr.bf16.mxu0 0
        %1013 = vmatpush1.bf16.msra.mxu0 0
        %1014 = vmatprep.subr.bf16.mxu0 0
        %1015 = vmatpush1.bf16.msra.mxu0 0
        %1016 = vmatprep.subr.bf16.mxu0 0
        %1017 = vmatpush1.bf16.msra.mxu0 0
        %1018 = vmatprep.subr.bf16.mxu0 0
        %1019 = vmatpush1.bf16.msra.mxu0 0
        %1020 = vmatprep.subr.bf16.mxu0 0
        %1021 = vmatpush1.bf16.msra.mxu0 0
        %1022 = vmatprep.subr.bf16.mxu0 0
        %1023 = vmatpush1.bf16.msra.mxu0 0
        %1024 = vmatprep.subr.bf16.mxu0 0
        %1025 = vmatpush1.bf16.msra.mxu0 0
        %1026 = vmatprep.subr.bf16.mxu0 0
        %1027 = vmatpush1.bf16.msra.mxu0 0
        %1028 = vmatprep.subr.bf16.mxu0 0
        %1029 = vmatpush1.bf16.msra.mxu0 0
        %1030 = vmatprep.mubr.bf16.mxu0 0
        %1031 = vmatmul.mubr.bf16.gmra.mrb[0].mxu0 %v996
        %v1032 = vpop.f32.mrb[0].mxu0
        %v1033 = vadd.f32 %v981, %v1032
        %v1034 = vpop.f32.mrb[0].mxu0
        %v1035 = vpop.f32.mrb[0].mxu0
        %v1036 = vpop.f32.mrb[0].mxu0
        %1037 = vdwg.mxu0
        %1038 = vst [vmem:[%s11] sm:$0xf] %v1033
      $region79: #{lstm_model_forward.3} parent=63 // pred_fallthru
        _
      // Predicated region
      $region80: #{lstm_model_forward.3} parent=63 // pred_check
        %p1039 = pneg %p271
      $region81: #{lstm_model_forward.3} parent=63 // pred_check_branch
        %1041 = sbr.rel (%p1039) target = $region83
      $region82: #{lstm_model_forward.3} parent=63 // pred_region
        _
      $region83: #{lstm_model_forward.3} parent=63 // pred_fallthru
        _
      // Predicated region
      $region84: #{lstm_model_forward.3} parent=63 // pred_check
        %p1042 = pneg %p271
      $region85: #{lstm_model_forward.3} parent=63 // pred_check_branch
        %1044 = sbr.rel (%p1042) target = $region87
      $region86: #{lstm_model_forward.3} parent=63 // pred_region
        _
      $region87: #{lstm_model_forward.3} parent=63 // pred_fallthru
        _
    $region64: #{lstm_model_forward.3} parent=5 // pred_fallthru
      _
    %p1045 = scmp.le.s32.totalorder 2, %s17
    // Predicated region
    $region88: #{lstm_model_forward.3} parent=5 // pred_check
      %p1046 = pneg %p1045
    $region89: #{lstm_model_forward.3} parent=5 // pred_check_branch
      %1048 = sbr.rel (%p1046) target = $region91
    $region90: #{lstm_model_forward.3} parent=5 // pred_region
      %s1049 = ssub.s32 %s17, 2
    $region91: #{lstm_model_forward.3} parent=5 // pred_fallthru
      _
  $region6: #{lstm_model_forward.3} parent=0 // loop_footer
    %s21 = sadd.s32 1, %s17
  $region7: #{lstm_model_forward.3} parent=0 // loop_footer_branch
    %16 = sbr.rel target = $region3
  $region8: #{lstm_model_forward.3} parent=0 // loop_exit
    _

</llo_original>
